<compile_context>
chip_gen: v5e
topology: v5e:2x2
jax: 0.10.0
libtpu: 0.0.40
codegen_flags: <defaults>
</compile_context>

<pallas_src>
import functools
import math

import jax
import jax.numpy as jnp
from jax import lax
from jax.experimental import pallas as pl
from jax.experimental.pallas import tpu as pltpu


# ----------------------------- Pallas kernel --------------------------------

def _transformer_layer_kernel(*refs, num_heads, head_dim, eps, causal):
    if causal:
        (x_ref,
         ln1_w_ref, ln1_b_ref, wqkv_ref, bqkv_ref, wo_ref, bo_ref,
         ln2_w_ref, ln2_b_ref, w1_ref, b1_ref, w2_ref, b2_ref,
         o_ref) = refs
        mask_ref = None
    else:
        (x_ref, mask_ref,
         ln1_w_ref, ln1_b_ref, wqkv_ref, bqkv_ref, wo_ref, bo_ref,
         ln2_w_ref, ln2_b_ref, w1_ref, b1_ref, w2_ref, b2_ref,
         o_ref) = refs

    f32, bf16 = jnp.float32, jnp.bfloat16
    S = x_ref.shape[0]
    H = num_heads * head_dim

    x = x_ref[...]                                        # (S, H) f32 — this batch element

    def layer_norm(v, w, b):
        mu = jnp.mean(v, axis=-1, keepdims=True)
        var = jnp.mean((v - mu) * (v - mu), axis=-1, keepdims=True)
        return (v - mu) * lax.rsqrt(var + eps) * w + b

    # ---- input layernorm + fused QKV projection (bf16 operands, f32 MXU acc) ----
    ln1_bf = layer_norm(x, ln1_w_ref[...], ln1_b_ref[...]).astype(bf16)
    qkv = jnp.dot(ln1_bf, wqkv_ref[...], preferred_element_type=f32) + bqkv_ref[...]

    # lane-dense (heads, S, head_dim) layout; 1/sqrt(d) already folded into Wq/bq.
    def heads_first(t):
        return jnp.transpose(t.reshape(S, num_heads, head_dim), (1, 0, 2)).astype(bf16)

    qh = heads_first(qkv[:, :H])
    kh = heads_first(qkv[:, H:2 * H])
    vh = heads_first(qkv[:, 2 * H:])

    # ---- all heads through the MXU in one batched matmul ----
    scores = jnp.einsum("hqd,hkd->hqk", qh, kh,
                        preferred_element_type=f32)       # (heads, S, S) f32

    if causal:
        row = lax.broadcasted_iota(jnp.int32, (S, S), 0)
        col = lax.broadcasted_iota(jnp.int32, (S, S), 1)
        keep = col <= row
    else:
        keep = mask_ref[...] > 0.5                        # (S, S) bf16 keep-mask
    scores = jnp.where(keep[None, :, :], scores, jnp.finfo(f32).min)

    scores = scores - jnp.max(scores, axis=-1, keepdims=True)
    p = jnp.exp(scores)
    denom = jnp.sum(p, axis=-1, keepdims=True)
    probs = p * pl.reciprocal(denom, approx=True)

    ctx_h = jnp.einsum("hqk,hkd->hqd", probs.astype(bf16), vh,
                       preferred_element_type=f32)        # (heads, S, d)
    ctx = jnp.transpose(ctx_h, (1, 0, 2)).reshape(S, H).astype(bf16)

    # ---- output projection + residual ----
    attn_out = jnp.dot(ctx, wo_ref[...], preferred_element_type=f32) + bo_ref[...]
    h1 = x + attn_out

    # ---- post-attention layernorm + MLP (relu) + residual ----
    ln2_bf = layer_norm(h1, ln2_w_ref[...], ln2_b_ref[...]).astype(bf16)
    inter = jnp.dot(ln2_bf, w1_ref[...], preferred_element_type=f32) + b1_ref[...]
    inter = jnp.maximum(inter, 0.0).astype(bf16)
    mlp_out = jnp.dot(inter, w2_ref[...], preferred_element_type=f32) + b2_ref[...]

    o_ref[...] = (h1 + mlp_out).astype(o_ref.dtype)


# ----------------------------- parameter prep --------------------------------

def prepare_params(params, *, num_heads):
    """One-time prep (outside the per-call hot path): fuse QKV, fold the
    1/sqrt(head_dim) query scale into Wq/bq, and store matmul weights in bf16."""
    H = params["wq"].shape[0]
    d = H // num_heads
    scale = 1.0 / math.sqrt(d)
    wqkv = jnp.concatenate([params["wq"] * scale, params["wk"], params["wv"]], axis=1)
    bqkv = jnp.concatenate([params["bq"] * scale, params["bk"], params["bv"]], axis=1)
    bf = lambda a: a.astype(jnp.bfloat16)
    return {
        "ln1_w": params["ln1_w"], "ln1_b": params["ln1_b"],
        "ln2_w": params["ln2_w"], "ln2_b": params["ln2_b"],
        "wqkv": bf(wqkv), "bqkv": bqkv,                   # biases stay f32 (added to f32 acc)
        "wo": bf(params["wo"]), "bo": params["bo"],
        "w1": bf(params["w1"]), "b1": params["b1"],
        "w2": bf(params["w2"]), "b2": params["b2"],
    }


# ------------------------------- wrapper -------------------------------------

def transformer_layer(hidden_states_sbh, attention_mask_bool, prepared_params, *,
                      num_heads, causal=False, eps=1e-5):
    """hidden_states_sbh: (S, B, H) f32.
    attention_mask_bool: (B, heads, S, S) bool (True = keep), or None when causal=True
    (the causal mask is then generated in-kernel, no mask DMA at all)."""
    x = jnp.transpose(hidden_states_sbh, (1, 0, 2))       # -> (B, S, H)
    B, S, H = x.shape
    head_dim = H // num_heads
    F = prepared_params["w1"].shape[1]

    inputs = [x]
    if not causal:
        # head-invariant bf16 keep-mask: heads*2 x less HBM traffic than the
        # original (B, heads, S, S) int32 tensor.
        inputs.append(attention_mask_bool[:, 0].astype(jnp.bfloat16))
    param_order = ["ln1_w", "ln1_b", "wqkv", "bqkv", "wo", "bo",
                   "ln2_w", "ln2_b", "w1", "b1", "w2", "b2"]
    inputs += [prepared_params[name] for name in param_order]

    def build_in_specs(single_buffer_weights):
        def resident(shape):
            nd = len(shape)
            idx = lambda *_: (0,) * nd
            if single_buffer_weights:
                return pl.BlockSpec(shape, idx, pipeline_mode=pl.Buffered(1))
            return pl.BlockSpec(shape, idx)
        specs = [pl.BlockSpec((None, S, H), lambda b: (b, 0, 0))]          # x
        if not causal:
            specs.append(pl.BlockSpec((None, S, S), lambda b: (b, 0, 0)))  # keep-mask
        specs += [resident(prepared_params[name].shape) for name in param_order]
        return specs

    # VMEM budget: bf16 weights (single-buffered) + per-step activations,
    # capped just under physical VMEM of the current chip generation.
    try:
        vmem_cap = int(pltpu.get_tpu_info().vmem_capacity_bytes)
    except Exception:
        vmem_cap = 64 * 1024 * 1024                       # conservative (v7x per-TC)
    weight_bytes = (4 * H * H + 2 * H * F) * 2            # QKV+Wo+W1+W2 in bf16
    act_bytes = (2 * num_heads * S * S + S * F + 14 * S * H) * 4
    io_bytes = 2 * 2 * S * H * 4 + (0 if causal else 2 * 2 * S * S)
    misc_bytes = (10 * H + F) * 4
    est = weight_bytes + act_bytes + io_bytes + misc_bytes
    vmem_limit = int(min(max(2 * est, 32 * 1024 * 1024), int(0.9 * vmem_cap)))

    kernel = functools.partial(
        _transformer_layer_kernel,
        num_heads=num_heads, head_dim=head_dim, eps=eps, causal=causal)

    def call(single_buffer_weights):
        return pl.pallas_call(
            kernel,
            out_shape=jax.ShapeDtypeStruct((B, S, H), x.dtype),
            grid=(B,),
            in_specs=build_in_specs(single_buffer_weights),
            out_specs=pl.BlockSpec((None, S, H), lambda b: (b, 0, 0)),
            compiler_params=pltpu.CompilerParams(
                dimension_semantics=("parallel",),
                vmem_limit_bytes=vmem_limit),
        )(*inputs)

    try:
        out = jax.block_until_ready(call(True))
    except Exception:
        # TODO(synk): this Pallas version rejected pipeline_mode=pl.Buffered(1)
        # (single-buffered resident weights); fall back to default double
        # buffering — correctness unaffected, only weight VMEM footprint.
        out = jax.block_until_ready(call(False))

    return jnp.transpose(out, (1, 0, 2))                  # back to (S, B, H)


# ----------------------- pure-JAX reference (for check) ----------------------

def transformer_layer_ref(x_sbh, mask_bool, params, *, num_heads, eps=1e-5):
    """Emulates the kernel's bf16-operand / f32-accumulation matmuls."""
    S, B, H = x_sbh.shape
    d = H // num_heads
    bf16 = jnp.bfloat16

    def ln(v, w, b):
        mu = jnp.mean(v, -1, keepdims=True)
        var = jnp.mean((v - mu) ** 2, -1, keepdims=True)
        return (v - mu) / jnp.sqrt(var + eps) * w[0] + b[0]

    def mm(a, w):
        return jnp.dot(a.astype(bf16), w.astype(bf16),
                       preferred_element_type=jnp.float32)

    residual = x_sbh
    h = ln(x_sbh, params["ln1_w"], params["ln1_b"])
    q = mm(h, params["wq"]) + params["bq"][0]
    k = mm(h, params["wk"]) + params["bk"][0]
    v = mm(h, params["wv"]) + params["bv"][0]
    q = q.reshape(S, B, num_heads, d) / math.sqrt(d)
    k = k.reshape(S, B, num_heads, d)
    v = v.reshape(S, B, num_heads, d)
    scores = jnp.einsum("sbhd,tbhd->bhst", q.astype(bf16), k.astype(bf16),
                        preferred_element_type=jnp.float32)
    scores = jnp.where(mask_bool, scores, jnp.finfo(jnp.float32).min)
    probs = jax.nn.softmax(scores, axis=-1)
    ctx = jnp.einsum("bhst,tbhd->sbhd", probs.astype(bf16), v.astype(bf16),
                     preferred_element_type=jnp.float32).reshape(S, B, H)
    attn = mm(ctx, params["wo"]) + params["bo"][0]
    h1 = residual + attn
    h2 = ln(h1, params["ln2_w"], params["ln2_b"])
    inter = jnp.maximum(mm(h2, params["w1"]) + params["b1"][0], 0.0)
    mlp = mm(inter, params["w2"]) + params["b2"][0]
    return h1 + mlp


# --------------------------------- main ---------------------------------------

if __name__ == "__main__":
    SEQ, BATCH, HIDDEN, HEADS = 8, 2, 32, 4   # toy shapes; prod: H, F multiples of 128
    FFN = 4 * HIDDEN
    dtype = jnp.float32

    key = jax.random.PRNGKey(0)
    ks = jax.random.split(key, 10)

    def xavier(k, out_f, in_f):
        std = math.sqrt(2.0 / (in_f + out_f))
        # torch weight is (out, in); kernel consumes W.T -> (in, out)
        w = jax.random.normal(k, (out_f, in_f), dtype) * std
        return w.T

    params = {
        "ln1_w": jnp.ones((1, HIDDEN), dtype), "ln1_b": jnp.zeros((1, HIDDEN), dtype),
        "ln2_w": jnp.ones((1, HIDDEN), dtype), "ln2_b": jnp.zeros((1, HIDDEN), dtype),
        "wq": xavier(ks[0], HIDDEN, HIDDEN), "bq": jnp.zeros((1, HIDDEN), dtype),
        "wk": xavier(ks[1], HIDDEN, HIDDEN), "bk": jnp.zeros((1, HIDDEN), dtype),
        "wv": xavier(ks[2], HIDDEN, HIDDEN), "bv": jnp.zeros((1, HIDDEN), dtype),
        "wo": xavier(ks[3], HIDDEN, HIDDEN), "bo": jnp.zeros((1, HIDDEN), dtype),
        "w1": xavier(ks[4], FFN, HIDDEN),    "b1": jnp.zeros((1, FFN), dtype),
        "w2": xavier(ks[5], HIDDEN, FFN),    "b2": jnp.zeros((1, HIDDEN), dtype),
    }

    # One-time parameter prep: bf16-at-rest weights, fused QKV, folded q-scale.
    prepared = prepare_params(params, num_heads=HEADS)

    x = jax.random.normal(ks[6], (SEQ, BATCH, HIDDEN), dtype)            # (S, B, H)
    causal = jnp.tril(jnp.ones((SEQ, SEQ), dtype=bool))
    attention_mask = jnp.broadcast_to(causal, (BATCH, HEADS, SEQ, SEQ))  # True = keep

    ref = transformer_layer_ref(x, attention_mask, params, num_heads=HEADS)

    # Path 1: causal mask generated in-kernel (zero mask HBM traffic).
    out_causal = jax.block_until_ready(
        transformer_layer(x, None, prepared, num_heads=HEADS, causal=True))

    # Path 2: generic (head-invariant) mask shipped as a bf16 keep-mask.
    out_masked = jax.block_until_ready(
        transformer_layer(x, attention_mask, prepared, num_heads=HEADS, causal=False))

    for name, out in (("causal", out_causal), ("masked", out_masked)):
        assert out.shape == (SEQ, BATCH, HIDDEN)
        err = jnp.max(jnp.abs(out - ref))
        assert jnp.allclose(out, ref, rtol=3e-2, atol=3e-2), \
            f"{name}: max abs err {err}"

    print("KERNEL_OK")
</pallas_src>

<mosaic_0001>
module attributes {stable_mosaic.version = 11 : i64} {
  func.func @_transformer_layer_kernel(%arg0: i32, %arg1: memref<1x8x32xf32, #tpu.memory_space<vmem>>, %arg2: memref<1x32xf32, #tpu.memory_space<vmem>>, %arg3: memref<1x32xf32, #tpu.memory_space<vmem>>, %arg4: memref<32x96xbf16, #tpu.memory_space<vmem>>, %arg5: memref<1x96xf32, #tpu.memory_space<vmem>>, %arg6: memref<32x32xbf16, #tpu.memory_space<vmem>>, %arg7: memref<1x32xf32, #tpu.memory_space<vmem>>, %arg8: memref<1x32xf32, #tpu.memory_space<vmem>>, %arg9: memref<1x32xf32, #tpu.memory_space<vmem>>, %arg10: memref<32x128xbf16, #tpu.memory_space<vmem>>, %arg11: memref<1x128xf32, #tpu.memory_space<vmem>>, %arg12: memref<128x32xbf16, #tpu.memory_space<vmem>>, %arg13: memref<1x32xf32, #tpu.memory_space<vmem>>, %arg14: memref<1x8x32xf32, #tpu.memory_space<vmem>>) attributes {dimension_semantics = [#tpu.dimension_semantics<parallel>], iteration_bounds = array<i64: 2>, scalar_prefetch = 0 : i64, scratch_operands = 0 : i64, tpu.core_type = #tpu.core_type<tc>, window_params = [{transform_indices = @transform_0, window_bounds = array<i64: 1, 8, 32>}, {pipeline_mode = #tpu.pipeline_mode<synchronous>, transform_indices = @transform_1, window_bounds = array<i64: 1, 32>}, {pipeline_mode = #tpu.pipeline_mode<synchronous>, transform_indices = @transform_2, window_bounds = array<i64: 1, 32>}, {pipeline_mode = #tpu.pipeline_mode<synchronous>, transform_indices = @transform_3, window_bounds = array<i64: 32, 96>}, {pipeline_mode = #tpu.pipeline_mode<synchronous>, transform_indices = @transform_4, window_bounds = array<i64: 1, 96>}, {pipeline_mode = #tpu.pipeline_mode<synchronous>, transform_indices = @transform_5, window_bounds = array<i64: 32, 32>}, {pipeline_mode = #tpu.pipeline_mode<synchronous>, transform_indices = @transform_6, window_bounds = array<i64: 1, 32>}, {pipeline_mode = #tpu.pipeline_mode<synchronous>, transform_indices = @transform_7, window_bounds = array<i64: 1, 32>}, {pipeline_mode = #tpu.pipeline_mode<synchronous>, transform_indices = @transform_8, window_bounds = array<i64: 1, 32>}, {pipeline_mode = #tpu.pipeline_mode<synchronous>, transform_indices = @transform_9, window_bounds = array<i64: 32, 128>}, {pipeline_mode = #tpu.pipeline_mode<synchronous>, transform_indices = @transform_10, window_bounds = array<i64: 1, 128>}, {pipeline_mode = #tpu.pipeline_mode<synchronous>, transform_indices = @transform_11, window_bounds = array<i64: 128, 32>}, {pipeline_mode = #tpu.pipeline_mode<synchronous>, transform_indices = @transform_12, window_bounds = array<i64: 1, 32>}, {transform_indices = @transform_13, window_bounds = array<i64: 1, 8, 32>}]} {
    %c0 = arith.constant 0 : index
    %c0_0 = arith.constant 0 : index
    %c0_1 = arith.constant 0 : index
    %0 = vector.load %arg1[%c0, %c0_0, %c0_1] : memref<1x8x32xf32, #tpu.memory_space<vmem>>, vector<1x8x32xf32>
    %1 = vector.shape_cast %0 : vector<1x8x32xf32> to vector<8x32xf32>
    %c0_2 = arith.constant 0 : index
    %c0_3 = arith.constant 0 : index
    %2 = vector.load %arg2[%c0_2, %c0_3] : memref<1x32xf32, #tpu.memory_space<vmem>>, vector<1x32xf32>
    %c0_4 = arith.constant 0 : index
    %c0_5 = arith.constant 0 : index
    %3 = vector.load %arg3[%c0_4, %c0_5] : memref<1x32xf32, #tpu.memory_space<vmem>>, vector<1x32xf32>
    %cst = arith.constant dense<0.000000e+00> : vector<8xf32>
    %4 = vector.multi_reduction <add>, %1, %cst [1] : vector<8x32xf32> to vector<8xf32>
    %5 = vector.shape_cast %4 : vector<8xf32> to vector<8x1xf32>
    %cst_6 = arith.constant 3.200000e+01 : f32
    %6 = vector.broadcast %cst_6 : f32 to vector<8x1xf32>
    %7 = arith.divf %5, %6 : vector<8x1xf32>
    %8 = vector.broadcast %7 : vector<8x1xf32> to vector<8x32xf32>
    %9 = arith.subf %1, %8 : vector<8x32xf32>
    %10 = vector.broadcast %7 : vector<8x1xf32> to vector<8x32xf32>
    %11 = arith.subf %1, %10 : vector<8x32xf32>
    %12 = arith.mulf %9, %11 : vector<8x32xf32>
    %cst_7 = arith.constant dense<0.000000e+00> : vector<8xf32>
    %13 = vector.multi_reduction <add>, %12, %cst_7 [1] : vector<8x32xf32> to vector<8xf32>
    %14 = vector.shape_cast %13 : vector<8xf32> to vector<8x1xf32>
    %cst_8 = arith.constant 3.200000e+01 : f32
    %15 = vector.broadcast %cst_8 : f32 to vector<8x1xf32>
    %16 = arith.divf %14, %15 : vector<8x1xf32>
    %17 = vector.broadcast %7 : vector<8x1xf32> to vector<8x32xf32>
    %18 = arith.subf %1, %17 : vector<8x32xf32>
    %cst_9 = arith.constant 9.99999974E-6 : f32
    %19 = vector.broadcast %cst_9 : f32 to vector<8x1xf32>
    %20 = arith.addf %16, %19 : vector<8x1xf32>
    %21 = math.rsqrt %20 : vector<8x1xf32>
    %22 = vector.broadcast %21 : vector<8x1xf32> to vector<8x32xf32>
    %23 = arith.mulf %18, %22 : vector<8x32xf32>
    %24 = vector.broadcast %2 : vector<1x32xf32> to vector<8x32xf32>
    %25 = arith.mulf %23, %24 : vector<8x32xf32>
    %26 = vector.broadcast %3 : vector<1x32xf32> to vector<8x32xf32>
    %27 = arith.addf %25, %26 : vector<8x32xf32>
    %28 = arith.truncf %27 : vector<8x32xf32> to vector<8x32xbf16>
    %c0_10 = arith.constant 0 : index
    %c0_11 = arith.constant 0 : index
    %29 = vector.load %arg4[%c0_10, %c0_11] : memref<32x96xbf16, #tpu.memory_space<vmem>>, vector<32x96xbf16>
    %cst_12 = arith.constant dense<0.000000e+00> : vector<8x96xf32>
    %30 = tpu.matmul %28, %29, %cst_12 {dimension_numbers = #tpu.dot_dimension_numbers<[1], [0], [0], [1], [0, 0, 1, 1], [], []>} : vector<8x32xbf16>, vector<32x96xbf16>, vector<8x96xf32> -> vector<8x96xf32>
    %c0_13 = arith.constant 0 : index
    %c0_14 = arith.constant 0 : index
    %31 = vector.load %arg5[%c0_13, %c0_14] : memref<1x96xf32, #tpu.memory_space<vmem>>, vector<1x96xf32>
    %32 = vector.broadcast %31 : vector<1x96xf32> to vector<8x96xf32>
    %33 = arith.addf %30, %32 : vector<8x96xf32>
    %34 = vector.extract_strided_slice %33 {offsets = [0, 0], sizes = [8, 32], strides = [1, 1]} : vector<8x96xf32> to vector<8x32xf32>
    %35 = vector.shape_cast %34 : vector<8x32xf32> to vector<8x4x8xf32>
    %36 = tpu.transpose %35, [1, 0, 2] : vector<8x4x8xf32> -> vector<4x8x8xf32>
    %37 = arith.truncf %36 : vector<4x8x8xf32> to vector<4x8x8xbf16>
    %38 = vector.extract_strided_slice %33 {offsets = [0, 32], sizes = [8, 32], strides = [1, 1]} : vector<8x96xf32> to vector<8x32xf32>
    %39 = vector.shape_cast %38 : vector<8x32xf32> to vector<8x4x8xf32>
    %40 = tpu.transpose %39, [1, 0, 2] : vector<8x4x8xf32> -> vector<4x8x8xf32>
    %41 = arith.truncf %40 : vector<4x8x8xf32> to vector<4x8x8xbf16>
    %42 = vector.extract_strided_slice %33 {offsets = [0, 64], sizes = [8, 32], strides = [1, 1]} : vector<8x96xf32> to vector<8x32xf32>
    %43 = vector.shape_cast %42 : vector<8x32xf32> to vector<8x4x8xf32>
    %44 = tpu.transpose %43, [1, 0, 2] : vector<8x4x8xf32> -> vector<4x8x8xf32>
    %45 = arith.truncf %44 : vector<4x8x8xf32> to vector<4x8x8xbf16>
    "tpu.trace_start"() <{level = 10 : i32, message = "hqd,hkd->hqk"}> : () -> ()
    %cst_15 = arith.constant dense<0.000000e+00> : vector<4x8x8xf32>
    %46 = tpu.matmul %37, %41, %cst_15 {dimension_numbers = #tpu.dot_dimension_numbers<[2], [2], [1], [1], [0, 0, 0, 1, 1, 1], [0], [0]>} : vector<4x8x8xbf16>, vector<4x8x8xbf16>, vector<4x8x8xf32> -> vector<4x8x8xf32>
    "tpu.trace_stop"() : () -> ()
    %47 = tpu.iota {dimensions = array<i32: 0>} : vector<8x8xi32>
    %48 = tpu.iota {dimensions = array<i32: 1>} : vector<8x8xi32>
    %49 = arith.cmpi sle, %48, %47 : vector<8x8xi32>
    %50 = vector.shape_cast %49 : vector<8x8xi1> to vector<1x8x8xi1>
    %cst_16 = arith.constant -3.40282347E+38 : f32
    %51 = vector.shape_cast %50 : vector<1x8x8xi1> to vector<1x8x8xi1>
    %52 = vector.broadcast %51 : vector<1x8x8xi1> to vector<4x8x8xi1>
    %53 = vector.broadcast %cst_16 : f32 to vector<4x8x8xf32>
    %54 = arith.select %52, %46, %53 : vector<4x8x8xi1>, vector<4x8x8xf32>
    %cst_17 = arith.constant dense<0xFF800000> : vector<4x8xf32>
    %55 = vector.multi_reduction <maximumf>, %54, %cst_17 [2] : vector<4x8x8xf32> to vector<4x8xf32>
    %56 = vector.shape_cast %55 : vector<4x8xf32> to vector<4x8x1xf32>
    %57 = vector.broadcast %56 : vector<4x8x1xf32> to vector<4x8x8xf32>
    %58 = arith.subf %54, %57 : vector<4x8x8xf32>
    %59 = math.exp %58 : vector<4x8x8xf32>
    %cst_18 = arith.constant dense<0.000000e+00> : vector<4x8xf32>
    %60 = vector.multi_reduction <add>, %59, %cst_18 [2] : vector<4x8x8xf32> to vector<4x8xf32>
    %61 = vector.shape_cast %60 : vector<4x8xf32> to vector<4x8x1xf32>
    %62 = tpu.reciprocal %61 {approx = true} : vector<4x8x1xf32> -> vector<4x8x1xf32>
    %63 = vector.broadcast %62 : vector<4x8x1xf32> to vector<4x8x8xf32>
    %64 = arith.mulf %59, %63 : vector<4x8x8xf32>
    %65 = arith.truncf %64 : vector<4x8x8xf32> to vector<4x8x8xbf16>
    "tpu.trace_start"() <{level = 10 : i32, message = "hqk,hkd->hqd"}> : () -> ()
    %cst_19 = arith.constant dense<0.000000e+00> : vector<4x8x8xf32>
    %66 = tpu.matmul %65, %45, %cst_19 {dimension_numbers = #tpu.dot_dimension_numbers<[2], [1], [1], [2], [0, 0, 0, 1, 1, 2], [0], [0]>} : vector<4x8x8xbf16>, vector<4x8x8xbf16>, vector<4x8x8xf32> -> vector<4x8x8xf32>
    "tpu.trace_stop"() : () -> ()
    %67 = tpu.transpose %66, [1, 0, 2] : vector<4x8x8xf32> -> vector<8x4x8xf32>
    %68 = vector.shape_cast %67 : vector<8x4x8xf32> to vector<8x32xf32>
    %69 = arith.truncf %68 : vector<8x32xf32> to vector<8x32xbf16>
    %c0_20 = arith.constant 0 : index
    %c0_21 = arith.constant 0 : index
    %70 = vector.load %arg6[%c0_20, %c0_21] : memref<32x32xbf16, #tpu.memory_space<vmem>>, vector<32x32xbf16>
    %cst_22 = arith.constant dense<0.000000e+00> : vector<8x32xf32>
    %71 = tpu.matmul %69, %70, %cst_22 {dimension_numbers = #tpu.dot_dimension_numbers<[1], [0], [0], [1], [0, 0, 1, 1], [], []>} : vector<8x32xbf16>, vector<32x32xbf16>, vector<8x32xf32> -> vector<8x32xf32>
    %c0_23 = arith.constant 0 : index
    %c0_24 = arith.constant 0 : index
    %72 = vector.load %arg7[%c0_23, %c0_24] : memref<1x32xf32, #tpu.memory_space<vmem>>, vector<1x32xf32>
    %73 = vector.broadcast %72 : vector<1x32xf32> to vector<8x32xf32>
    %74 = arith.addf %71, %73 : vector<8x32xf32>
    %75 = arith.addf %1, %74 : vector<8x32xf32>
    %c0_25 = arith.constant 0 : index
    %c0_26 = arith.constant 0 : index
    %76 = vector.load %arg8[%c0_25, %c0_26] : memref<1x32xf32, #tpu.memory_space<vmem>>, vector<1x32xf32>
    %c0_27 = arith.constant 0 : index
    %c0_28 = arith.constant 0 : index
    %77 = vector.load %arg9[%c0_27, %c0_28] : memref<1x32xf32, #tpu.memory_space<vmem>>, vector<1x32xf32>
    %cst_29 = arith.constant dense<0.000000e+00> : vector<8xf32>
    %78 = vector.multi_reduction <add>, %75, %cst_29 [1] : vector<8x32xf32> to vector<8xf32>
    %79 = vector.shape_cast %78 : vector<8xf32> to vector<8x1xf32>
    %cst_30 = arith.constant 3.200000e+01 : f32
    %80 = vector.broadcast %cst_30 : f32 to vector<8x1xf32>
    %81 = arith.divf %79, %80 : vector<8x1xf32>
    %82 = vector.broadcast %81 : vector<8x1xf32> to vector<8x32xf32>
    %83 = arith.subf %75, %82 : vector<8x32xf32>
    %84 = vector.broadcast %81 : vector<8x1xf32> to vector<8x32xf32>
    %85 = arith.subf %75, %84 : vector<8x32xf32>
    %86 = arith.mulf %83, %85 : vector<8x32xf32>
    %cst_31 = arith.constant dense<0.000000e+00> : vector<8xf32>
    %87 = vector.multi_reduction <add>, %86, %cst_31 [1] : vector<8x32xf32> to vector<8xf32>
    %88 = vector.shape_cast %87 : vector<8xf32> to vector<8x1xf32>
    %cst_32 = arith.constant 3.200000e+01 : f32
    %89 = vector.broadcast %cst_32 : f32 to vector<8x1xf32>
    %90 = arith.divf %88, %89 : vector<8x1xf32>
    %91 = vector.broadcast %81 : vector<8x1xf32> to vector<8x32xf32>
    %92 = arith.subf %75, %91 : vector<8x32xf32>
    %cst_33 = arith.constant 9.99999974E-6 : f32
    %93 = vector.broadcast %cst_33 : f32 to vector<8x1xf32>
    %94 = arith.addf %90, %93 : vector<8x1xf32>
    %95 = math.rsqrt %94 : vector<8x1xf32>
    %96 = vector.broadcast %95 : vector<8x1xf32> to vector<8x32xf32>
    %97 = arith.mulf %92, %96 : vector<8x32xf32>
    %98 = vector.broadcast %76 : vector<1x32xf32> to vector<8x32xf32>
    %99 = arith.mulf %97, %98 : vector<8x32xf32>
    %100 = vector.broadcast %77 : vector<1x32xf32> to vector<8x32xf32>
    %101 = arith.addf %99, %100 : vector<8x32xf32>
    %102 = arith.truncf %101 : vector<8x32xf32> to vector<8x32xbf16>
    %c0_34 = arith.constant 0 : index
    %c0_35 = arith.constant 0 : index
    %103 = vector.load %arg10[%c0_34, %c0_35] : memref<32x128xbf16, #tpu.memory_space<vmem>>, vector<32x128xbf16>
    %cst_36 = arith.constant dense<0.000000e+00> : vector<8x128xf32>
    %104 = tpu.matmul %102, %103, %cst_36 {dimension_numbers = #tpu.dot_dimension_numbers<[1], [0], [0], [1], [0, 0, 1, 1], [], []>} : vector<8x32xbf16>, vector<32x128xbf16>, vector<8x128xf32> -> vector<8x128xf32>
    %c0_37 = arith.constant 0 : index
    %c0_38 = arith.constant 0 : index
    %105 = vector.load %arg11[%c0_37, %c0_38] : memref<1x128xf32, #tpu.memory_space<vmem>>, vector<1x128xf32>
    %106 = vector.broadcast %105 : vector<1x128xf32> to vector<8x128xf32>
    %107 = arith.addf %104, %106 : vector<8x128xf32>
    %cst_39 = arith.constant 0.000000e+00 : f32
    %108 = vector.broadcast %cst_39 : f32 to vector<8x128xf32>
    %109 = arith.maximumf %107, %108 : vector<8x128xf32>
    %110 = arith.truncf %109 : vector<8x128xf32> to vector<8x128xbf16>
    %c0_40 = arith.constant 0 : index
    %c0_41 = arith.constant 0 : index
    %111 = vector.load %arg12[%c0_40, %c0_41] : memref<128x32xbf16, #tpu.memory_space<vmem>>, vector<128x32xbf16>
    %cst_42 = arith.constant dense<0.000000e+00> : vector<8x32xf32>
    %112 = tpu.matmul %110, %111, %cst_42 {dimension_numbers = #tpu.dot_dimension_numbers<[1], [0], [0], [1], [0, 0, 1, 1], [], []>} : vector<8x128xbf16>, vector<128x32xbf16>, vector<8x32xf32> -> vector<8x32xf32>
    %c0_43 = arith.constant 0 : index
    %c0_44 = arith.constant 0 : index
    %113 = vector.load %arg13[%c0_43, %c0_44] : memref<1x32xf32, #tpu.memory_space<vmem>>, vector<1x32xf32>
    %114 = vector.broadcast %113 : vector<1x32xf32> to vector<8x32xf32>
    %115 = arith.addf %112, %114 : vector<8x32xf32>
    %116 = arith.addf %75, %115 : vector<8x32xf32>
    %c0_45 = arith.constant 0 : index
    %c0_46 = arith.constant 0 : index
    %c0_47 = arith.constant 0 : index
    %117 = vector.load %arg14[%c0_45, %c0_46, %c0_47] : memref<1x8x32xf32, #tpu.memory_space<vmem>>, vector<1x8x32xf32>
    %118 = vector.shape_cast %117 : vector<1x8x32xf32> to vector<8x32xf32>
    %119 = vector.shape_cast %116 : vector<8x32xf32> to vector<1x8x32xf32>
    tpu.vector_store %arg14[%c0_45, %c0_46, %c0_47], %119 {strides = array<i32>} : memref<1x8x32xf32, #tpu.memory_space<vmem>>, vector<1x8x32xf32>,
    return
  }
  func.func @transform_0(%arg0: i32) -> (i32, i32, i32) {
    %c0_i32 = arith.constant 0 : i32
    %c0_i32_0 = arith.constant 0 : i32
    %c0_i32_1 = arith.constant 0 : i32
    return %arg0, %c0_i32, %c0_i32_0 : i32, i32, i32
  }
  func.func @transform_1(%arg0: i32) -> (i32, i32) {
    %c0_i32 = arith.constant 0 : i32
    %c0_i32_0 = arith.constant 0 : i32
    %c0_i32_1 = arith.constant 0 : i32
    return %c0_i32, %c0_i32_0 : i32, i32
  }
  func.func @transform_2(%arg0: i32) -> (i32, i32) {
    %c0_i32 = arith.constant 0 : i32
    %c0_i32_0 = arith.constant 0 : i32
    %c0_i32_1 = arith.constant 0 : i32
    return %c0_i32, %c0_i32_0 : i32, i32
  }
  func.func @transform_3(%arg0: i32) -> (i32, i32) {
    %c0_i32 = arith.constant 0 : i32
    %c0_i32_0 = arith.constant 0 : i32
    %c0_i32_1 = arith.constant 0 : i32
    return %c0_i32, %c0_i32_0 : i32, i32
  }
  func.func @transform_4(%arg0: i32) -> (i32, i32) {
    %c0_i32 = arith.constant 0 : i32
    %c0_i32_0 = arith.constant 0 : i32
    %c0_i32_1 = arith.constant 0 : i32
    return %c0_i32, %c0_i32_0 : i32, i32
  }
  func.func @transform_5(%arg0: i32) -> (i32, i32) {
    %c0_i32 = arith.constant 0 : i32
    %c0_i32_0 = arith.constant 0 : i32
    %c0_i32_1 = arith.constant 0 : i32
    return %c0_i32, %c0_i32_0 : i32, i32
  }
  func.func @transform_6(%arg0: i32) -> (i32, i32) {
    %c0_i32 = arith.constant 0 : i32
    %c0_i32_0 = arith.constant 0 : i32
    %c0_i32_1 = arith.constant 0 : i32
    return %c0_i32, %c0_i32_0 : i32, i32
  }
  func.func @transform_7(%arg0: i32) -> (i32, i32) {
    %c0_i32 = arith.constant 0 : i32
    %c0_i32_0 = arith.constant 0 : i32
    %c0_i32_1 = arith.constant 0 : i32
    return %c0_i32, %c0_i32_0 : i32, i32
  }
  func.func @transform_8(%arg0: i32) -> (i32, i32) {
    %c0_i32 = arith.constant 0 : i32
    %c0_i32_0 = arith.constant 0 : i32
    %c0_i32_1 = arith.constant 0 : i32
    return %c0_i32, %c0_i32_0 : i32, i32
  }
  func.func @transform_9(%arg0: i32) -> (i32, i32) {
    %c0_i32 = arith.constant 0 : i32
    %c0_i32_0 = arith.constant 0 : i32
    %c0_i32_1 = arith.constant 0 : i32
    return %c0_i32, %c0_i32_0 : i32, i32
  }
  func.func @transform_10(%arg0: i32) -> (i32, i32) {
    %c0_i32 = arith.constant 0 : i32
    %c0_i32_0 = arith.constant 0 : i32
    %c0_i32_1 = arith.constant 0 : i32
    return %c0_i32, %c0_i32_0 : i32, i32
  }
  func.func @transform_11(%arg0: i32) -> (i32, i32) {
    %c0_i32 = arith.constant 0 : i32
    %c0_i32_0 = arith.constant 0 : i32
    %c0_i32_1 = arith.constant 0 : i32
    return %c0_i32, %c0_i32_0 : i32, i32
  }
  func.func @transform_12(%arg0: i32) -> (i32, i32) {
    %c0_i32 = arith.constant 0 : i32
    %c0_i32_0 = arith.constant 0 : i32
    %c0_i32_1 = arith.constant 0 : i32
    return %c0_i32, %c0_i32_0 : i32, i32
  }
  func.func @transform_13(%arg0: i32) -> (i32, i32, i32) {
    %c0_i32 = arith.constant 0 : i32
    %c0_i32_0 = arith.constant 0 : i32
    %c0_i32_1 = arith.constant 0 : i32
    return %arg0, %c0_i32, %c0_i32_0 : i32, i32, i32
  }
}

module attributes {stable_mosaic.version = 11 : i64} {
  func.func @_transformer_layer_kernel(%arg0: i32, %arg1: memref<1x8x32xf32, #tpu.memory_space<vmem>>, %arg2: memref<1x32xf32, #tpu.memory_space<vmem>>, %arg3: memref<1x32xf32, #tpu.memory_space<vmem>>, %arg4: memref<32x96xbf16, #tpu.memory_space<vmem>>, %arg5: memref<1x96xf32, #tpu.memory_space<vmem>>, %arg6: memref<32x32xbf16, #tpu.memory_space<vmem>>, %arg7: memref<1x32xf32, #tpu.memory_space<vmem>>, %arg8: memref<1x32xf32, #tpu.memory_space<vmem>>, %arg9: memref<1x32xf32, #tpu.memory_space<vmem>>, %arg10: memref<32x128xbf16, #tpu.memory_space<vmem>>, %arg11: memref<1x128xf32, #tpu.memory_space<vmem>>, %arg12: memref<128x32xbf16, #tpu.memory_space<vmem>>, %arg13: memref<1x32xf32, #tpu.memory_space<vmem>>, %arg14: memref<1x8x32xf32, #tpu.memory_space<vmem>>) attributes {dimension_semantics = [#tpu.dimension_semantics<parallel>], iteration_bounds = array<i64: 2>, scalar_prefetch = 0 : i64, scratch_operands = 0 : i64, tpu.core_type = #tpu.core_type<tc>, window_params = [{transform_indices = @transform_0, window_bounds = array<i64: 1, 8, 32>}, {pipeline_mode = #tpu.pipeline_mode<synchronous>, transform_indices = @transform_1, window_bounds = array<i64: 1, 32>}, {pipeline_mode = #tpu.pipeline_mode<synchronous>, transform_indices = @transform_2, window_bounds = array<i64: 1, 32>}, {pipeline_mode = #tpu.pipeline_mode<synchronous>, transform_indices = @transform_3, window_bounds = array<i64: 32, 96>}, {pipeline_mode = #tpu.pipeline_mode<synchronous>, transform_indices = @transform_4, window_bounds = array<i64: 1, 96>}, {pipeline_mode = #tpu.pipeline_mode<synchronous>, transform_indices = @transform_5, window_bounds = array<i64: 32, 32>}, {pipeline_mode = #tpu.pipeline_mode<synchronous>, transform_indices = @transform_6, window_bounds = array<i64: 1, 32>}, {pipeline_mode = #tpu.pipeline_mode<synchronous>, transform_indices = @transform_7, window_bounds = array<i64: 1, 32>}, {pipeline_mode = #tpu.pipeline_mode<synchronous>, transform_indices = @transform_8, window_bounds = array<i64: 1, 32>}, {pipeline_mode = #tpu.pipeline_mode<synchronous>, transform_indices = @transform_9, window_bounds = array<i64: 32, 128>}, {pipeline_mode = #tpu.pipeline_mode<synchronous>, transform_indices = @transform_10, window_bounds = array<i64: 1, 128>}, {pipeline_mode = #tpu.pipeline_mode<synchronous>, transform_indices = @transform_11, window_bounds = array<i64: 128, 32>}, {pipeline_mode = #tpu.pipeline_mode<synchronous>, transform_indices = @transform_12, window_bounds = array<i64: 1, 32>}, {transform_indices = @transform_13, window_bounds = array<i64: 1, 8, 32>}]} {
    %c0 = arith.constant 0 : index
    %c0_0 = arith.constant 0 : index
    %c0_1 = arith.constant 0 : index
    %0 = vector.load %arg1[%c0, %c0_0, %c0_1] : memref<1x8x32xf32, #tpu.memory_space<vmem>>, vector<1x8x32xf32>
    %1 = vector.shape_cast %0 : vector<1x8x32xf32> to vector<8x32xf32>
    %c0_2 = arith.constant 0 : index
    %c0_3 = arith.constant 0 : index
    %2 = vector.load %arg2[%c0_2, %c0_3] : memref<1x32xf32, #tpu.memory_space<vmem>>, vector<1x32xf32>
    %c0_4 = arith.constant 0 : index
    %c0_5 = arith.constant 0 : index
    %3 = vector.load %arg3[%c0_4, %c0_5] : memref<1x32xf32, #tpu.memory_space<vmem>>, vector<1x32xf32>
    %cst = arith.constant dense<0.000000e+00> : vector<8xf32>
    %4 = vector.multi_reduction <add>, %1, %cst [1] : vector<8x32xf32> to vector<8xf32>
    %5 = vector.shape_cast %4 : vector<8xf32> to vector<8x1xf32>
    %cst_6 = arith.constant 3.200000e+01 : f32
    %6 = vector.broadcast %cst_6 : f32 to vector<8x1xf32>
    %7 = arith.divf %5, %6 : vector<8x1xf32>
    %8 = vector.broadcast %7 : vector<8x1xf32> to vector<8x32xf32>
    %9 = arith.subf %1, %8 : vector<8x32xf32>
    %10 = vector.broadcast %7 : vector<8x1xf32> to vector<8x32xf32>
    %11 = arith.subf %1, %10 : vector<8x32xf32>
    %12 = arith.mulf %9, %11 : vector<8x32xf32>
    %cst_7 = arith.constant dense<0.000000e+00> : vector<8xf32>
    %13 = vector.multi_reduction <add>, %12, %cst_7 [1] : vector<8x32xf32> to vector<8xf32>
    %14 = vector.shape_cast %13 : vector<8xf32> to vector<8x1xf32>
    %cst_8 = arith.constant 3.200000e+01 : f32
    %15 = vector.broadcast %cst_8 : f32 to vector<8x1xf32>
    %16 = arith.divf %14, %15 : vector<8x1xf32>
    %17 = vector.broadcast %7 : vector<8x1xf32> to vector<8x32xf32>
    %18 = arith.subf %1, %17 : vector<8x32xf32>
    %cst_9 = arith.constant 9.99999974E-6 : f32
    %19 = vector.broadcast %cst_9 : f32 to vector<8x1xf32>
    %20 = arith.addf %16, %19 : vector<8x1xf32>
    %21 = math.rsqrt %20 : vector<8x1xf32>
    %22 = vector.broadcast %21 : vector<8x1xf32> to vector<8x32xf32>
    %23 = arith.mulf %18, %22 : vector<8x32xf32>
    %24 = vector.broadcast %2 : vector<1x32xf32> to vector<8x32xf32>
    %25 = arith.mulf %23, %24 : vector<8x32xf32>
    %26 = vector.broadcast %3 : vector<1x32xf32> to vector<8x32xf32>
    %27 = arith.addf %25, %26 : vector<8x32xf32>
    %28 = arith.truncf %27 : vector<8x32xf32> to vector<8x32xbf16>
    %c0_10 = arith.constant 0 : index
    %c0_11 = arith.constant 0 : index
    %29 = vector.load %arg4[%c0_10, %c0_11] : memref<32x96xbf16, #tpu.memory_space<vmem>>, vector<32x96xbf16>
    %cst_12 = arith.constant dense<0.000000e+00> : vector<8x96xf32>
    %30 = tpu.matmul %28, %29, %cst_12 {dimension_numbers = #tpu.dot_dimension_numbers<[1], [0], [0], [1], [0, 0, 1, 1], [], []>} : vector<8x32xbf16>, vector<32x96xbf16>, vector<8x96xf32> -> vector<8x96xf32>
    %c0_13 = arith.constant 0 : index
    %c0_14 = arith.constant 0 : index
    %31 = vector.load %arg5[%c0_13, %c0_14] : memref<1x96xf32, #tpu.memory_space<vmem>>, vector<1x96xf32>
    %32 = vector.broadcast %31 : vector<1x96xf32> to vector<8x96xf32>
    %33 = arith.addf %30, %32 : vector<8x96xf32>
    %34 = vector.extract_strided_slice %33 {offsets = [0, 0], sizes = [8, 32], strides = [1, 1]} : vector<8x96xf32> to vector<8x32xf32>
    %35 = vector.shape_cast %34 : vector<8x32xf32> to vector<8x4x8xf32>
    %36 = tpu.transpose %35, [1, 0, 2] : vector<8x4x8xf32> -> vector<4x8x8xf32>
    %37 = arith.truncf %36 : vector<4x8x8xf32> to vector<4x8x8xbf16>
    %38 = vector.extract_strided_slice %33 {offsets = [0, 32], sizes = [8, 32], strides = [1, 1]} : vector<8x96xf32> to vector<8x32xf32>
    %39 = vector.shape_cast %38 : vector<8x32xf32> to vector<8x4x8xf32>
    %40 = tpu.transpose %39, [1, 0, 2] : vector<8x4x8xf32> -> vector<4x8x8xf32>
    %41 = arith.truncf %40 : vector<4x8x8xf32> to vector<4x8x8xbf16>
    %42 = vector.extract_strided_slice %33 {offsets = [0, 64], sizes = [8, 32], strides = [1, 1]} : vector<8x96xf32> to vector<8x32xf32>
    %43 = vector.shape_cast %42 : vector<8x32xf32> to vector<8x4x8xf32>
    %44 = tpu.transpose %43, [1, 0, 2] : vector<8x4x8xf32> -> vector<4x8x8xf32>
    %45 = arith.truncf %44 : vector<4x8x8xf32> to vector<4x8x8xbf16>
    "tpu.trace_start"() <{level = 10 : i32, message = "hqd,hkd->hqk"}> : () -> ()
    %cst_15 = arith.constant dense<0.000000e+00> : vector<4x8x8xf32>
    %46 = tpu.matmul %37, %41, %cst_15 {dimension_numbers = #tpu.dot_dimension_numbers<[2], [2], [1], [1], [0, 0, 0, 1, 1, 1], [0], [0]>} : vector<4x8x8xbf16>, vector<4x8x8xbf16>, vector<4x8x8xf32> -> vector<4x8x8xf32>
    "tpu.trace_stop"() : () -> ()
    %47 = tpu.iota {dimensions = array<i32: 0>} : vector<8x8xi32>
    %48 = tpu.iota {dimensions = array<i32: 1>} : vector<8x8xi32>
    %49 = arith.cmpi sle, %48, %47 : vector<8x8xi32>
    %50 = vector.shape_cast %49 : vector<8x8xi1> to vector<1x8x8xi1>
    %cst_16 = arith.constant -3.40282347E+38 : f32
    %51 = vector.shape_cast %50 : vector<1x8x8xi1> to vector<1x8x8xi1>
    %52 = vector.broadcast %51 : vector<1x8x8xi1> to vector<4x8x8xi1>
    %53 = vector.broadcast %cst_16 : f32 to vector<4x8x8xf32>
    %54 = arith.select %52, %46, %53 : vector<4x8x8xi1>, vector<4x8x8xf32>
    %cst_17 = arith.constant dense<0xFF800000> : vector<4x8xf32>
    %55 = vector.multi_reduction <maximumf>, %54, %cst_17 [2] : vector<4x8x8xf32> to vector<4x8xf32>
    %56 = vector.shape_cast %55 : vector<4x8xf32> to vector<4x8x1xf32>
    %57 = vector.broadcast %56 : vector<4x8x1xf32> to vector<4x8x8xf32>
    %58 = arith.subf %54, %57 : vector<4x8x8xf32>
    %59 = math.exp %58 : vector<4x8x8xf32>
    %cst_18 = arith.constant dense<0.000000e+00> : vector<4x8xf32>
    %60 = vector.multi_reduction <add>, %59, %cst_18 [2] : vector<4x8x8xf32> to vector<4x8xf32>
    %61 = vector.shape_cast %60 : vector<4x8xf32> to vector<4x8x1xf32>
    %62 = tpu.reciprocal %61 {approx = true} : vector<4x8x1xf32> -> vector<4x8x1xf32>
    %63 = vector.broadcast %62 : vector<4x8x1xf32> to vector<4x8x8xf32>
    %64 = arith.mulf %59, %63 : vector<4x8x8xf32>
    %65 = arith.truncf %64 : vector<4x8x8xf32> to vector<4x8x8xbf16>
    "tpu.trace_start"() <{level = 10 : i32, message = "hqk,hkd->hqd"}> : () -> ()
    %cst_19 = arith.constant dense<0.000000e+00> : vector<4x8x8xf32>
    %66 = tpu.matmul %65, %45, %cst_19 {dimension_numbers = #tpu.dot_dimension_numbers<[2], [1], [1], [2], [0, 0, 0, 1, 1, 2], [0], [0]>} : vector<4x8x8xbf16>, vector<4x8x8xbf16>, vector<4x8x8xf32> -> vector<4x8x8xf32>
    "tpu.trace_stop"() : () -> ()
    %67 = tpu.transpose %66, [1, 0, 2] : vector<4x8x8xf32> -> vector<8x4x8xf32>
    %68 = vector.shape_cast %67 : vector<8x4x8xf32> to vector<8x32xf32>
    %69 = arith.truncf %68 : vector<8x32xf32> to vector<8x32xbf16>
    %c0_20 = arith.constant 0 : index
    %c0_21 = arith.constant 0 : index
    %70 = vector.load %arg6[%c0_20, %c0_21] : memref<32x32xbf16, #tpu.memory_space<vmem>>, vector<32x32xbf16>
    %cst_22 = arith.constant dense<0.000000e+00> : vector<8x32xf32>
    %71 = tpu.matmul %69, %70, %cst_22 {dimension_numbers = #tpu.dot_dimension_numbers<[1], [0], [0], [1], [0, 0, 1, 1], [], []>} : vector<8x32xbf16>, vector<32x32xbf16>, vector<8x32xf32> -> vector<8x32xf32>
    %c0_23 = arith.constant 0 : index
    %c0_24 = arith.constant 0 : index
    %72 = vector.load %arg7[%c0_23, %c0_24] : memref<1x32xf32, #tpu.memory_space<vmem>>, vector<1x32xf32>
    %73 = vector.broadcast %72 : vector<1x32xf32> to vector<8x32xf32>
    %74 = arith.addf %71, %73 : vector<8x32xf32>
    %75 = arith.addf %1, %74 : vector<8x32xf32>
    %c0_25 = arith.constant 0 : index
    %c0_26 = arith.constant 0 : index
    %76 = vector.load %arg8[%c0_25, %c0_26] : memref<1x32xf32, #tpu.memory_space<vmem>>, vector<1x32xf32>
    %c0_27 = arith.constant 0 : index
    %c0_28 = arith.constant 0 : index
    %77 = vector.load %arg9[%c0_27, %c0_28] : memref<1x32xf32, #tpu.memory_space<vmem>>, vector<1x32xf32>
    %cst_29 = arith.constant dense<0.000000e+00> : vector<8xf32>
    %78 = vector.multi_reduction <add>, %75, %cst_29 [1] : vector<8x32xf32> to vector<8xf32>
    %79 = vector.shape_cast %78 : vector<8xf32> to vector<8x1xf32>
    %cst_30 = arith.constant 3.200000e+01 : f32
    %80 = vector.broadcast %cst_30 : f32 to vector<8x1xf32>
    %81 = arith.divf %79, %80 : vector<8x1xf32>
    %82 = vector.broadcast %81 : vector<8x1xf32> to vector<8x32xf32>
    %83 = arith.subf %75, %82 : vector<8x32xf32>
    %84 = vector.broadcast %81 : vector<8x1xf32> to vector<8x32xf32>
    %85 = arith.subf %75, %84 : vector<8x32xf32>
    %86 = arith.mulf %83, %85 : vector<8x32xf32>
    %cst_31 = arith.constant dense<0.000000e+00> : vector<8xf32>
    %87 = vector.multi_reduction <add>, %86, %cst_31 [1] : vector<8x32xf32> to vector<8xf32>
    %88 = vector.shape_cast %87 : vector<8xf32> to vector<8x1xf32>
    %cst_32 = arith.constant 3.200000e+01 : f32
    %89 = vector.broadcast %cst_32 : f32 to vector<8x1xf32>
    %90 = arith.divf %88, %89 : vector<8x1xf32>
    %91 = vector.broadcast %81 : vector<8x1xf32> to vector<8x32xf32>
    %92 = arith.subf %75, %91 : vector<8x32xf32>
    %cst_33 = arith.constant 9.99999974E-6 : f32
    %93 = vector.broadcast %cst_33 : f32 to vector<8x1xf32>
    %94 = arith.addf %90, %93 : vector<8x1xf32>
    %95 = math.rsqrt %94 : vector<8x1xf32>
    %96 = vector.broadcast %95 : vector<8x1xf32> to vector<8x32xf32>
    %97 = arith.mulf %92, %96 : vector<8x32xf32>
    %98 = vector.broadcast %76 : vector<1x32xf32> to vector<8x32xf32>
    %99 = arith.mulf %97, %98 : vector<8x32xf32>
    %100 = vector.broadcast %77 : vector<1x32xf32> to vector<8x32xf32>
    %101 = arith.addf %99, %100 : vector<8x32xf32>
    %102 = arith.truncf %101 : vector<8x32xf32> to vector<8x32xbf16>
    %c0_34 = arith.constant 0 : index
    %c0_35 = arith.constant 0 : index
    %103 = vector.load %arg10[%c0_34, %c0_35] : memref<32x128xbf16, #tpu.memory_space<vmem>>, vector<32x128xbf16>
    %cst_36 = arith.constant dense<0.000000e+00> : vector<8x128xf32>
    %104 = tpu.matmul %102, %103, %cst_36 {dimension_numbers = #tpu.dot_dimension_numbers<[1], [0], [0], [1], [0, 0, 1, 1], [], []>} : vector<8x32xbf16>, vector<32x128xbf16>, vector<8x128xf32> -> vector<8x128xf32>
    %c0_37 = arith.constant 0 : index
    %c0_38 = arith.constant 0 : index
    %105 = vector.load %arg11[%c0_37, %c0_38] : memref<1x128xf32, #tpu.memory_space<vmem>>, vector<1x128xf32>
    %106 = vector.broadcast %105 : vector<1x128xf32> to vector<8x128xf32>
    %107 = arith.addf %104, %106 : vector<8x128xf32>
    %cst_39 = arith.constant 0.000000e+00 : f32
    %108 = vector.broadcast %cst_39 : f32 to vector<8x128xf32>
    %109 = arith.maximumf %107, %108 : vector<8x128xf32>
    %110 = arith.truncf %109 : vector<8x128xf32> to vector<8x128xbf16>
    %c0_40 = arith.constant 0 : index
    %c0_41 = arith.constant 0 : index
    %111 = vector.load %arg12[%c0_40, %c0_41] : memref<128x32xbf16, #tpu.memory_space<vmem>>, vector<128x32xbf16>
    %cst_42 = arith.constant dense<0.000000e+00> : vector<8x32xf32>
    %112 = tpu.matmul %110, %111, %cst_42 {dimension_numbers = #tpu.dot_dimension_numbers<[1], [0], [0], [1], [0, 0, 1, 1], [], []>} : vector<8x128xbf16>, vector<128x32xbf16>, vector<8x32xf32> -> vector<8x32xf32>
    %c0_43 = arith.constant 0 : index
    %c0_44 = arith.constant 0 : index
    %113 = vector.load %arg13[%c0_43, %c0_44] : memref<1x32xf32, #tpu.memory_space<vmem>>, vector<1x32xf32>
    %114 = vector.broadcast %113 : vector<1x32xf32> to vector<8x32xf32>
    %115 = arith.addf %112, %114 : vector<8x32xf32>
    %116 = arith.addf %75, %115 : vector<8x32xf32>
    %c0_45 = arith.constant 0 : index
    %c0_46 = arith.constant 0 : index
    %c0_47 = arith.constant 0 : index
    %117 = vector.load %arg14[%c0_45, %c0_46, %c0_47] : memref<1x8x32xf32, #tpu.memory_space<vmem>>, vector<1x8x32xf32>
    %118 = vector.shape_cast %117 : vector<1x8x32xf32> to vector<8x32xf32>
    %119 = vector.shape_cast %116 : vector<8x32xf32> to vector<1x8x32xf32>
    tpu.vector_store %arg14[%c0_45, %c0_46, %c0_47], %119 {strides = array<i32>} : memref<1x8x32xf32, #tpu.memory_space<vmem>>, vector<1x8x32xf32>,
    return
  }
  func.func @transform_0(%arg0: i32) -> (i32, i32, i32) {
    %c0_i32 = arith.constant 0 : i32
    %c0_i32_0 = arith.constant 0 : i32
    %c0_i32_1 = arith.constant 0 : i32
    return %arg0, %c0_i32, %c0_i32_0 : i32, i32, i32
  }
  func.func @transform_1(%arg0: i32) -> (i32, i32) {
    %c0_i32 = arith.constant 0 : i32
    %c0_i32_0 = arith.constant 0 : i32
    %c0_i32_1 = arith.constant 0 : i32
    return %c0_i32, %c0_i32_0 : i32, i32
  }
  func.func @transform_2(%arg0: i32) -> (i32, i32) {
    %c0_i32 = arith.constant 0 : i32
    %c0_i32_0 = arith.constant 0 : i32
    %c0_i32_1 = arith.constant 0 : i32
    return %c0_i32, %c0_i32_0 : i32, i32
  }
  func.func @transform_3(%arg0: i32) -> (i32, i32) {
    %c0_i32 = arith.constant 0 : i32
    %c0_i32_0 = arith.constant 0 : i32
    %c0_i32_1 = arith.constant 0 : i32
    return %c0_i32, %c0_i32_0 : i32, i32
  }
  func.func @transform_4(%arg0: i32) -> (i32, i32) {
    %c0_i32 = arith.constant 0 : i32
    %c0_i32_0 = arith.constant 0 : i32
    %c0_i32_1 = arith.constant 0 : i32
    return %c0_i32, %c0_i32_0 : i32, i32
  }
  func.func @transform_5(%arg0: i32) -> (i32, i32) {
    %c0_i32 = arith.constant 0 : i32
    %c0_i32_0 = arith.constant 0 : i32
    %c0_i32_1 = arith.constant 0 : i32
    return %c0_i32, %c0_i32_0 : i32, i32
  }
  func.func @transform_6(%arg0: i32) -> (i32, i32) {
    %c0_i32 = arith.constant 0 : i32
    %c0_i32_0 = arith.constant 0 : i32
    %c0_i32_1 = arith.constant 0 : i32
    return %c0_i32, %c0_i32_0 : i32, i32
  }
  func.func @transform_7(%arg0: i32) -> (i32, i32) {
    %c0_i32 = arith.constant 0 : i32
    %c0_i32_0 = arith.constant 0 : i32
    %c0_i32_1 = arith.constant 0 : i32
    return %c0_i32, %c0_i32_0 : i32, i32
  }
  func.func @transform_8(%arg0: i32) -> (i32, i32) {
    %c0_i32 = arith.constant 0 : i32
    %c0_i32_0 = arith.constant 0 : i32
    %c0_i32_1 = arith.constant 0 : i32
    return %c0_i32, %c0_i32_0 : i32, i32
  }
  func.func @transform_9(%arg0: i32) -> (i32, i32) {
    %c0_i32 = arith.constant 0 : i32
    %c0_i32_0 = arith.constant 0 : i32
    %c0_i32_1 = arith.constant 0 : i32
    return %c0_i32, %c0_i32_0 : i32, i32
  }
  func.func @transform_10(%arg0: i32) -> (i32, i32) {
    %c0_i32 = arith.constant 0 : i32
    %c0_i32_0 = arith.constant 0 : i32
    %c0_i32_1 = arith.constant 0 : i32
    return %c0_i32, %c0_i32_0 : i32, i32
  }
  func.func @transform_11(%arg0: i32) -> (i32, i32) {
    %c0_i32 = arith.constant 0 : i32
    %c0_i32_0 = arith.constant 0 : i32
    %c0_i32_1 = arith.constant 0 : i32
    return %c0_i32, %c0_i32_0 : i32, i32
  }
  func.func @transform_12(%arg0: i32) -> (i32, i32) {
    %c0_i32 = arith.constant 0 : i32
    %c0_i32_0 = arith.constant 0 : i32
    %c0_i32_1 = arith.constant 0 : i32
    return %c0_i32, %c0_i32_0 : i32, i32
  }
  func.func @transform_13(%arg0: i32) -> (i32, i32, i32) {
    %c0_i32 = arith.constant 0 : i32
    %c0_i32_0 = arith.constant 0 : i32
    %c0_i32_1 = arith.constant 0 : i32
    return %arg0, %c0_i32, %c0_i32_0 : i32, i32, i32
  }
}

</mosaic_0001>

<llo_original>
// kernel: tpu_custom_call.1
$region0: #{tpu_custom_call.1}
  #allocation0 [shape = 'u32[]', space=smem, size = 0x4, offset = 0x4, fixed_abs, tag = 'smem constant byte address 0x4 - core index']
  #allocation1 [shape = 'u32[72,128]{1,0:T(1,128)}', space=vmem, size = 0x9000, scoped, tag = 'internal scratch']
  %s0 = inlined_call_operand.vmem [shape: f32[2,8,32], index: 0, kind: input, shape index: {}]
  %s1 = inlined_call_operand.vmem [shape: f32[1,32], index: 1, kind: input, shape index: {}]
  %s2 = inlined_call_operand.vmem [shape: f32[1,32], index: 2, kind: input, shape index: {}]
  %s3 = inlined_call_operand.vmem [shape: bf16[32,96], index: 3, kind: input, shape index: {}]
  %s4 = inlined_call_operand.vmem [shape: f32[1,96], index: 4, kind: input, shape index: {}]
  %s5 = inlined_call_operand.vmem [shape: bf16[32,32], index: 5, kind: input, shape index: {}]
  %s6 = inlined_call_operand.vmem [shape: f32[1,32], index: 6, kind: input, shape index: {}]
  %s7 = inlined_call_operand.vmem [shape: f32[1,32], index: 7, kind: input, shape index: {}]
  %s8 = inlined_call_operand.vmem [shape: f32[1,32], index: 8, kind: input, shape index: {}]
  %s9 = inlined_call_operand.vmem [shape: bf16[32,128], index: 9, kind: input, shape index: {}]
  %s10 = inlined_call_operand.vmem [shape: f32[1,128], index: 10, kind: input, shape index: {}]
  %s11 = inlined_call_operand.vmem [shape: bf16[128,32], index: 11, kind: input, shape index: {}]
  %s12 = inlined_call_operand.vmem [shape: f32[1,32], index: 12, kind: input, shape index: {}]
  %s13 = inlined_call_operand.hbm [shape: f32[2,8,32], index: 13, kind: output, shape index: {}]
  %s14 = sld [smem:[#allocation0]]
  $region85: #{tpu_custom_call.1} parent=0
    _
  %s16 = ssub.s32 1, %s14
  %s17 = scalar_select 0, %s16, %s14
  $region1: #{tpu_custom_call.1} parent=0
    #allocation2 [shape = 'u8[8192]{0}', space=vmem, size = 0x2000, scoped, tag = 'output window, operand 0']
    #allocation3 [shape = 's32[2]{0}', space=sflag, size = 0x8, scoped, tag = 'scoped memory for tpu_custom_call.1']
    %18 = vsyncpa [#allocation3], 0
    %s19 = scalar_lea.sflag [#allocation3], 1
    %20 = vsyncpa %s19, 0
    loop: start=0, step=1, limit=4
    $region2: #{tpu_custom_call.1} parent=1 // loop_pre_header
      _
    $region3: #{tpu_custom_call.1} parent=1 // loop_header
      %s22 = sphi 0, %s26
      %p23 = scmp.ge.s32.totalorder %s22, 4
      %s32 = sphi 0, %s34
      %s35 = sphi 0, %s32
      %s36 = sphi 0, %s35
      %s52 = sphi 0, %s36
      %s56 = sphi 0, %s56
      %s58 = sphi 0, %s56
      %s59 = sphi 0, %s58
      %s73 = sphi 0, %s59
      %s77 = sphi 0, %s77
      %s79 = sphi 0, %s77
      %s80 = sphi 0, %s79
      %s94 = sphi 0, %s80
      %s98 = sphi 0, %s98
      %s100 = sphi 0, %s98
      %s101 = sphi 0, %s100
      %s115 = sphi 0, %s101
      %s119 = sphi 0, %s119
      %s121 = sphi 0, %s119
      %s122 = sphi 0, %s121
      %s136 = sphi 0, %s122
      %s140 = sphi 0, %s140
      %s142 = sphi 0, %s140
      %s143 = sphi 0, %s142
      %s157 = sphi 0, %s143
      %s161 = sphi 0, %s161
      %s163 = sphi 0, %s161
      %s164 = sphi 0, %s163
      %s178 = sphi 0, %s164
      %s182 = sphi 0, %s182
      %s184 = sphi 0, %s182
      %s185 = sphi 0, %s184
      %s199 = sphi 0, %s185
      %s203 = sphi 0, %s203
      %s205 = sphi 0, %s203
      %s206 = sphi 0, %s205
      %s220 = sphi 0, %s206
      %s224 = sphi 0, %s224
      %s226 = sphi 0, %s224
      %s227 = sphi 0, %s226
      %s241 = sphi 0, %s227
      %s245 = sphi 0, %s245
      %s247 = sphi 0, %s245
      %s248 = sphi 0, %s247
      %s262 = sphi 0, %s248
      %s266 = sphi 0, %s266
      %s268 = sphi 0, %s266
      %s269 = sphi 0, %s268
      %s283 = sphi 0, %s269
      %s287 = sphi 0, %s287
      %s289 = sphi 0, %s287
      %s290 = sphi 0, %s289
      %s304 = sphi 0, %s290
      %s310 = sphi 0, %s312
      %s313 = sphi 0, %s310
      %s314 = sphi 0, %s313
      %s330 = sphi 0, %s314
    $region4: #{tpu_custom_call.1} parent=1 // loop_header_branch
      %25 = sbr.rel (%p23) target = $region8
    $region5: #{tpu_custom_call.1} parent=1 // loop_body
      %s27 = ssub.s32 %s22, 1
      %s28 = ssub.s32 %s22, 2
      %s29 = sadd.s32 %s22, 1
      %s30 = ssub.s32 %s22, %s29
      %p31 = scmp.eq.s32.totalorder %s30, 0
      %s33 = sadd.s32 %s32, 1
      %s34 = scalar_select %p31, %s32, %s33
      %p37 = pneg %p31
      %p38 = scmp.eq.s32.totalorder %s22, 1
      %p39 = por %p37, %p38
      %p40 = scmp.ne.s32.totalorder %s32, %s35
      %p41 = scmp.eq.s32.totalorder %s22, 0
      %p42 = por %p40, %p41
      %p43 = scmp.ne.s32.totalorder %s32, %s35
      %p44 = scmp.eq.s32.totalorder %s27, 1
      %p45 = por %p43, %p44
      %p46 = scmp.ne.s32.totalorder %s35, %s36
      %p47 = scmp.eq.s32.totalorder %s27, 0
      %p48 = por %p46, %p47
      %p49 = scmp.ne.s32.totalorder %s35, %s36
      %p50 = scmp.eq.s32.totalorder %s28, 1
      %p51 = por %p49, %p50
      %p53 = scmp.ne.s32.totalorder %s36, %s52
      %p54 = scmp.eq.s32.totalorder %s28, 0
      %p55 = por %p53, %p54
      %s57 = sadd.s32 %s56, 1
      %p60 = scmp.eq.s32.totalorder %s22, 1
      %p61 = scmp.ne.s32.totalorder %s56, %s58
      %p62 = scmp.eq.s32.totalorder %s22, 0
      %p63 = por %p61, %p62
      %p64 = scmp.ne.s32.totalorder %s56, %s58
      %p65 = scmp.eq.s32.totalorder %s27, 1
      %p66 = por %p64, %p65
      %p67 = scmp.ne.s32.totalorder %s58, %s59
      %p68 = scmp.eq.s32.totalorder %s27, 0
      %p69 = por %p67, %p68
      %p70 = scmp.ne.s32.totalorder %s58, %s59
      %p71 = scmp.eq.s32.totalorder %s28, 1
      %p72 = por %p70, %p71
      %p74 = scmp.ne.s32.totalorder %s59, %s73
      %p75 = scmp.eq.s32.totalorder %s28, 0
      %p76 = por %p74, %p75
      %s78 = sadd.s32 %s77, 1
      %p81 = scmp.eq.s32.totalorder %s22, 1
      %p82 = scmp.ne.s32.totalorder %s77, %s79
      %p83 = scmp.eq.s32.totalorder %s22, 0
      %p84 = por %p82, %p83
      %p85 = scmp.ne.s32.totalorder %s77, %s79
      %p86 = scmp.eq.s32.totalorder %s27, 1
      %p87 = por %p85, %p86
      %p88 = scmp.ne.s32.totalorder %s79, %s80
      %p89 = scmp.eq.s32.totalorder %s27, 0
      %p90 = por %p88, %p89
      %p91 = scmp.ne.s32.totalorder %s79, %s80
      %p92 = scmp.eq.s32.totalorder %s28, 1
      %p93 = por %p91, %p92
      %p95 = scmp.ne.s32.totalorder %s80, %s94
      %p96 = scmp.eq.s32.totalorder %s28, 0
      %p97 = por %p95, %p96
      %s99 = sadd.s32 %s98, 1
      %p102 = scmp.eq.s32.totalorder %s22, 1
      %p103 = scmp.ne.s32.totalorder %s98, %s100
      %p104 = scmp.eq.s32.totalorder %s22, 0
      %p105 = por %p103, %p104
      %p106 = scmp.ne.s32.totalorder %s98, %s100
      %p107 = scmp.eq.s32.totalorder %s27, 1
      %p108 = por %p106, %p107
      %p109 = scmp.ne.s32.totalorder %s100, %s101
      %p110 = scmp.eq.s32.totalorder %s27, 0
      %p111 = por %p109, %p110
      %p112 = scmp.ne.s32.totalorder %s100, %s101
      %p113 = scmp.eq.s32.totalorder %s28, 1
      %p114 = por %p112, %p113
      %p116 = scmp.ne.s32.totalorder %s101, %s115
      %p117 = scmp.eq.s32.totalorder %s28, 0
      %p118 = por %p116, %p117
      %s120 = sadd.s32 %s119, 1
      %p123 = scmp.eq.s32.totalorder %s22, 1
      %p124 = scmp.ne.s32.totalorder %s119, %s121
      %p125 = scmp.eq.s32.totalorder %s22, 0
      %p126 = por %p124, %p125
      %p127 = scmp.ne.s32.totalorder %s119, %s121
      %p128 = scmp.eq.s32.totalorder %s27, 1
      %p129 = por %p127, %p128
      %p130 = scmp.ne.s32.totalorder %s121, %s122
      %p131 = scmp.eq.s32.totalorder %s27, 0
      %p132 = por %p130, %p131
      %p133 = scmp.ne.s32.totalorder %s121, %s122
      %p134 = scmp.eq.s32.totalorder %s28, 1
      %p135 = por %p133, %p134
      %p137 = scmp.ne.s32.totalorder %s122, %s136
      %p138 = scmp.eq.s32.totalorder %s28, 0
      %p139 = por %p137, %p138
      %s141 = sadd.s32 %s140, 1
      %p144 = scmp.eq.s32.totalorder %s22, 1
      %p145 = scmp.ne.s32.totalorder %s140, %s142
      %p146 = scmp.eq.s32.totalorder %s22, 0
      %p147 = por %p145, %p146
      %p148 = scmp.ne.s32.totalorder %s140, %s142
      %p149 = scmp.eq.s32.totalorder %s27, 1
      %p150 = por %p148, %p149
      %p151 = scmp.ne.s32.totalorder %s142, %s143
      %p152 = scmp.eq.s32.totalorder %s27, 0
      %p153 = por %p151, %p152
      %p154 = scmp.ne.s32.totalorder %s142, %s143
      %p155 = scmp.eq.s32.totalorder %s28, 1
      %p156 = por %p154, %p155
      %p158 = scmp.ne.s32.totalorder %s143, %s157
      %p159 = scmp.eq.s32.totalorder %s28, 0
      %p160 = por %p158, %p159
      %s162 = sadd.s32 %s161, 1
      %p165 = scmp.eq.s32.totalorder %s22, 1
      %p166 = scmp.ne.s32.totalorder %s161, %s163
      %p167 = scmp.eq.s32.totalorder %s22, 0
      %p168 = por %p166, %p167
      %p169 = scmp.ne.s32.totalorder %s161, %s163
      %p170 = scmp.eq.s32.totalorder %s27, 1
      %p171 = por %p169, %p170
      %p172 = scmp.ne.s32.totalorder %s163, %s164
      %p173 = scmp.eq.s32.totalorder %s27, 0
      %p174 = por %p172, %p173
      %p175 = scmp.ne.s32.totalorder %s163, %s164
      %p176 = scmp.eq.s32.totalorder %s28, 1
      %p177 = por %p175, %p176
      %p179 = scmp.ne.s32.totalorder %s164, %s178
      %p180 = scmp.eq.s32.totalorder %s28, 0
      %p181 = por %p179, %p180
      %s183 = sadd.s32 %s182, 1
      %p186 = scmp.eq.s32.totalorder %s22, 1
      %p187 = scmp.ne.s32.totalorder %s182, %s184
      %p188 = scmp.eq.s32.totalorder %s22, 0
      %p189 = por %p187, %p188
      %p190 = scmp.ne.s32.totalorder %s182, %s184
      %p191 = scmp.eq.s32.totalorder %s27, 1
      %p192 = por %p190, %p191
      %p193 = scmp.ne.s32.totalorder %s184, %s185
      %p194 = scmp.eq.s32.totalorder %s27, 0
      %p195 = por %p193, %p194
      %p196 = scmp.ne.s32.totalorder %s184, %s185
      %p197 = scmp.eq.s32.totalorder %s28, 1
      %p198 = por %p196, %p197
      %p200 = scmp.ne.s32.totalorder %s185, %s199
      %p201 = scmp.eq.s32.totalorder %s28, 0
      %p202 = por %p200, %p201
      %s204 = sadd.s32 %s203, 1
      %p207 = scmp.eq.s32.totalorder %s22, 1
      %p208 = scmp.ne.s32.totalorder %s203, %s205
      %p209 = scmp.eq.s32.totalorder %s22, 0
      %p210 = por %p208, %p209
      %p211 = scmp.ne.s32.totalorder %s203, %s205
      %p212 = scmp.eq.s32.totalorder %s27, 1
      %p213 = por %p211, %p212
      %p214 = scmp.ne.s32.totalorder %s205, %s206
      %p215 = scmp.eq.s32.totalorder %s27, 0
      %p216 = por %p214, %p215
      %p217 = scmp.ne.s32.totalorder %s205, %s206
      %p218 = scmp.eq.s32.totalorder %s28, 1
      %p219 = por %p217, %p218
      %p221 = scmp.ne.s32.totalorder %s206, %s220
      %p222 = scmp.eq.s32.totalorder %s28, 0
      %p223 = por %p221, %p222
      %s225 = sadd.s32 %s224, 1
      %p228 = scmp.eq.s32.totalorder %s22, 1
      %p229 = scmp.ne.s32.totalorder %s224, %s226
      %p230 = scmp.eq.s32.totalorder %s22, 0
      %p231 = por %p229, %p230
      %p232 = scmp.ne.s32.totalorder %s224, %s226
      %p233 = scmp.eq.s32.totalorder %s27, 1
      %p234 = por %p232, %p233
      %p235 = scmp.ne.s32.totalorder %s226, %s227
      %p236 = scmp.eq.s32.totalorder %s27, 0
      %p237 = por %p235, %p236
      %p238 = scmp.ne.s32.totalorder %s226, %s227
      %p239 = scmp.eq.s32.totalorder %s28, 1
      %p240 = por %p238, %p239
      %p242 = scmp.ne.s32.totalorder %s227, %s241
      %p243 = scmp.eq.s32.totalorder %s28, 0
      %p244 = por %p242, %p243
      %s246 = sadd.s32 %s245, 1
      %p249 = scmp.eq.s32.totalorder %s22, 1
      %p250 = scmp.ne.s32.totalorder %s245, %s247
      %p251 = scmp.eq.s32.totalorder %s22, 0
      %p252 = por %p250, %p251
      %p253 = scmp.ne.s32.totalorder %s245, %s247
      %p254 = scmp.eq.s32.totalorder %s27, 1
      %p255 = por %p253, %p254
      %p256 = scmp.ne.s32.totalorder %s247, %s248
      %p257 = scmp.eq.s32.totalorder %s27, 0
      %p258 = por %p256, %p257
      %p259 = scmp.ne.s32.totalorder %s247, %s248
      %p260 = scmp.eq.s32.totalorder %s28, 1
      %p261 = por %p259, %p260
      %p263 = scmp.ne.s32.totalorder %s248, %s262
      %p264 = scmp.eq.s32.totalorder %s28, 0
      %p265 = por %p263, %p264
      %s267 = sadd.s32 %s266, 1
      %p270 = scmp.eq.s32.totalorder %s22, 1
      %p271 = scmp.ne.s32.totalorder %s266, %s268
      %p272 = scmp.eq.s32.totalorder %s22, 0
      %p273 = por %p271, %p272
      %p274 = scmp.ne.s32.totalorder %s266, %s268
      %p275 = scmp.eq.s32.totalorder %s27, 1
      %p276 = por %p274, %p275
      %p277 = scmp.ne.s32.totalorder %s268, %s269
      %p278 = scmp.eq.s32.totalorder %s27, 0
      %p279 = por %p277, %p278
      %p280 = scmp.ne.s32.totalorder %s268, %s269
      %p281 = scmp.eq.s32.totalorder %s28, 1
      %p282 = por %p280, %p281
      %p284 = scmp.ne.s32.totalorder %s269, %s283
      %p285 = scmp.eq.s32.totalorder %s28, 0
      %p286 = por %p284, %p285
      %s288 = sadd.s32 %s287, 1
      %p291 = scmp.eq.s32.totalorder %s22, 1
      %p292 = scmp.ne.s32.totalorder %s287, %s289
      %p293 = scmp.eq.s32.totalorder %s22, 0
      %p294 = por %p292, %p293
      %p295 = scmp.ne.s32.totalorder %s287, %s289
      %p296 = scmp.eq.s32.totalorder %s27, 1
      %p297 = por %p295, %p296
      %p298 = scmp.ne.s32.totalorder %s289, %s290
      %p299 = scmp.eq.s32.totalorder %s27, 0
      %p300 = por %p298, %p299
      %p301 = scmp.ne.s32.totalorder %s289, %s290
      %p302 = scmp.eq.s32.totalorder %s28, 1
      %p303 = por %p301, %p302
      %p305 = scmp.ne.s32.totalorder %s290, %s304
      %p306 = scmp.eq.s32.totalorder %s28, 0
      %p307 = por %p305, %p306
      %s308 = ssub.s32 %s22, %s29
      %p309 = scmp.eq.s32.totalorder %s308, 0
      %s311 = sadd.s32 %s310, 1
      %s312 = scalar_select %p309, %s310, %s311
      %p315 = pneg %p309
      %p316 = scmp.eq.s32.totalorder %s22, 1
      %p317 = por %p315, %p316
      %p318 = scmp.ne.s32.totalorder %s310, %s313
      %p319 = scmp.eq.s32.totalorder %s22, 0
      %p320 = por %p318, %p319
      %p321 = scmp.ne.s32.totalorder %s310, %s313
      %p322 = scmp.eq.s32.totalorder %s27, 1
      %p323 = por %p321, %p322
      %p324 = scmp.ne.s32.totalorder %s313, %s314
      %p325 = scmp.eq.s32.totalorder %s27, 0
      %p326 = por %p324, %p325
      %p327 = scmp.ne.s32.totalorder %s313, %s314
      %p328 = scmp.eq.s32.totalorder %s28, 1
      %p329 = por %p327, %p328
      %p331 = scmp.ne.s32.totalorder %s314, %s330
      %p332 = scmp.eq.s32.totalorder %s28, 0
      %p333 = por %p331, %p332
      %p334 = scmp.le.s32.totalorder 1, %s22
      %p335 = scmp.lt.s32.totalorder %s22, 3
      %p336 = pnand %p334, %p335
      %p337 = pneg %p336
      // Predicated region
      $region9: #{tpu_custom_call.1} parent=5 // pred_check
        _
      $region10: #{tpu_custom_call.1} parent=5 // pred_check_branch
        %339 = sbr.rel (%p336) target = $region12
      $region11: #{tpu_custom_call.1} parent=5 // pred_region
        %s340 = ssub.s32 %s22, 1
        // Predicated region
        $region13: #{tpu_custom_call.1} parent=11 // pred_check
          %p341 = pneg %p69
        $region14: #{tpu_custom_call.1} parent=11 // pred_check_branch
          %343 = sbr.rel (%p341) target = $region16
        $region15: #{tpu_custom_call.1} parent=11 // pred_region
          _
        $region16: #{tpu_custom_call.1} parent=11 // pred_fallthru
          _
        // Predicated region
        $region17: #{tpu_custom_call.1} parent=11 // pred_check
          %p344 = pneg %p90
        $region18: #{tpu_custom_call.1} parent=11 // pred_check_branch
          %346 = sbr.rel (%p344) target = $region20
        $region19: #{tpu_custom_call.1} parent=11 // pred_region
          _
        $region20: #{tpu_custom_call.1} parent=11 // pred_fallthru
          _
        // Predicated region
        $region21: #{tpu_custom_call.1} parent=11 // pred_check
          %p347 = pneg %p111
        $region22: #{tpu_custom_call.1} parent=11 // pred_check_branch
          %349 = sbr.rel (%p347) target = $region24
        $region23: #{tpu_custom_call.1} parent=11 // pred_region
          _
        $region24: #{tpu_custom_call.1} parent=11 // pred_fallthru
          _
        // Predicated region
        $region25: #{tpu_custom_call.1} parent=11 // pred_check
          %p350 = pneg %p132
        $region26: #{tpu_custom_call.1} parent=11 // pred_check_branch
          %352 = sbr.rel (%p350) target = $region28
        $region27: #{tpu_custom_call.1} parent=11 // pred_region
          _
        $region28: #{tpu_custom_call.1} parent=11 // pred_fallthru
          _
        // Predicated region
        $region29: #{tpu_custom_call.1} parent=11 // pred_check
          %p353 = pneg %p153
        $region30: #{tpu_custom_call.1} parent=11 // pred_check_branch
          %355 = sbr.rel (%p353) target = $region32
        $region31: #{tpu_custom_call.1} parent=11 // pred_region
          _
        $region32: #{tpu_custom_call.1} parent=11 // pred_fallthru
          _
        // Predicated region
        $region33: #{tpu_custom_call.1} parent=11 // pred_check
          %p356 = pneg %p174
        $region34: #{tpu_custom_call.1} parent=11 // pred_check_branch
          %358 = sbr.rel (%p356) target = $region36
        $region35: #{tpu_custom_call.1} parent=11 // pred_region
          _
        $region36: #{tpu_custom_call.1} parent=11 // pred_fallthru
          _
        // Predicated region
        $region37: #{tpu_custom_call.1} parent=11 // pred_check
          %p359 = pneg %p195
        $region38: #{tpu_custom_call.1} parent=11 // pred_check_branch
          %361 = sbr.rel (%p359) target = $region40
        $region39: #{tpu_custom_call.1} parent=11 // pred_region
          _
        $region40: #{tpu_custom_call.1} parent=11 // pred_fallthru
          _
        // Predicated region
        $region41: #{tpu_custom_call.1} parent=11 // pred_check
          %p362 = pneg %p216
        $region42: #{tpu_custom_call.1} parent=11 // pred_check_branch
          %364 = sbr.rel (%p362) target = $region44
        $region43: #{tpu_custom_call.1} parent=11 // pred_region
          _
        $region44: #{tpu_custom_call.1} parent=11 // pred_fallthru
          _
        // Predicated region
        $region45: #{tpu_custom_call.1} parent=11 // pred_check
          %p365 = pneg %p237
        $region46: #{tpu_custom_call.1} parent=11 // pred_check_branch
          %367 = sbr.rel (%p365) target = $region48
        $region47: #{tpu_custom_call.1} parent=11 // pred_region
          _
        $region48: #{tpu_custom_call.1} parent=11 // pred_fallthru
          _
        // Predicated region
        $region49: #{tpu_custom_call.1} parent=11 // pred_check
          %p368 = pneg %p258
        $region50: #{tpu_custom_call.1} parent=11 // pred_check_branch
          %370 = sbr.rel (%p368) target = $region52
        $region51: #{tpu_custom_call.1} parent=11 // pred_region
          _
        $region52: #{tpu_custom_call.1} parent=11 // pred_fallthru
          _
        // Predicated region
        $region53: #{tpu_custom_call.1} parent=11 // pred_check
          %p371 = pneg %p279
        $region54: #{tpu_custom_call.1} parent=11 // pred_check_branch
          %373 = sbr.rel (%p371) target = $region56
        $region55: #{tpu_custom_call.1} parent=11 // pred_region
          _
        $region56: #{tpu_custom_call.1} parent=11 // pred_fallthru
          _
        // Predicated region
        $region57: #{tpu_custom_call.1} parent=11 // pred_check
          %p374 = pneg %p300
        $region58: #{tpu_custom_call.1} parent=11 // pred_check_branch
          %376 = sbr.rel (%p374) target = $region60
        $region59: #{tpu_custom_call.1} parent=11 // pred_region
          _
        $region60: #{tpu_custom_call.1} parent=11 // pred_fallthru
          _
      $region12: #{tpu_custom_call.1} parent=5 // pred_fallthru
        _
      %p377 = scmp.lt.s32.totalorder %s22, 2
      // Predicated region
      $region61: #{tpu_custom_call.1} parent=5 // pred_check
        %p378 = pneg %p377
      $region62: #{tpu_custom_call.1} parent=5 // pred_check_branch
        %380 = sbr.rel (%p378) target = $region64
      $region63: #{tpu_custom_call.1} parent=5 // pred_region
        // Predicated region
        $region65: #{tpu_custom_call.1} parent=63 // pred_check
          %p381 = pneg %p42
        $region66: #{tpu_custom_call.1} parent=63 // pred_check_branch
          %383 = sbr.rel (%p381) target = $region68
        $region67: #{tpu_custom_call.1} parent=63 // pred_region
          %p384 = scmp.lt.s32.totalorder %s22, 1
          %s385 = scalar_select %p384, %s22, 1
          %s386 = smul.addr %s385, 8
          %s387 = scalar_lea.vmem %s0, %s386
        $region68: #{tpu_custom_call.1} parent=63 // pred_fallthru
          _
      $region64: #{tpu_custom_call.1} parent=5 // pred_fallthru
        _
      %p388 = scmp.le.s32.totalorder 1, %s22
      %p389 = scmp.lt.s32.totalorder %s22, 3
      %p390 = pnand %p388, %p389
      %p391 = pneg %p390
      // Predicated region
      $region69: #{tpu_custom_call.1} parent=5 // pred_check
        _
      $region70: #{tpu_custom_call.1} parent=5 // pred_check_branch
        %393 = sbr.rel (%p390) target = $region72
      $region71: #{tpu_custom_call.1} parent=5 // pred_region
        %s394 = ssub.s32 %s22, 1
        %p395 = scmp.lt.s32.totalorder %s27, 1
        %s396 = scalar_select %p395, %s27, 1
        %s397 = smul.addr %s396, 8
        %s398 = scalar_lea.vmem %s0, %s397
        %p399 = pneg %p48
        %p400 = pneg %p45
        %p401 = pneg %p69
        %p402 = pneg %p66
        %p403 = pneg %p90
        %p404 = pneg %p87
        %p405 = pneg %p111
        %p406 = pneg %p108
        %p407 = pneg %p132
        %p408 = pneg %p129
        %p409 = pneg %p153
        %p410 = pneg %p150
        %p411 = pneg %p174
        %p412 = pneg %p171
        %p413 = pneg %p195
        %p414 = pneg %p192
        %p415 = pneg %p216
        %p416 = pneg %p213
        %p417 = pneg %p237
        %p418 = pneg %p234
        %p419 = pneg %p258
        %p420 = pneg %p255
        %p421 = pneg %p279
        %p422 = pneg %p276
        %p423 = pneg %p300
        %p424 = pneg %p297
        %p425 = pneg %p326
        %p426 = pneg %p323
        %s427 = sand.u32 %s313, 1
        %s428 = scalar_lea.sflag [#allocation3], %s427
        %s429 = sand.u32 %s313, 1
        %s430 = smul.addr %s429, 8
        %s431 = scalar_lea.vmem [#allocation2], %s430
        %p432 = scmp.lt.s32.totalorder %s27, 1
        %s433 = scalar_select %p432, %s27, 1
        %s434 = smul.addr %s433, 8
        %s435 = scalar_lea.vmem %s0, %s434
        %v437 = vld [vmem:[%s435] sm:$0xff]
        %v438 = vld [vmem:[%s1] sm:$0x1]
        %v439 = vld [vmem:[%s2] sm:$0x1]
        %vm440 = vcmask 261120
        %v441 = vsel %vm440, %v437, 0.0
        %442 = vadd.xlane.f32.xlu0 %v441
        %v443 = vpop.xlane.xlu0 %442
        %v444 = vrcp.pop 32.0
        %v445 = vmul.f32 32.0, %v444
        %v446 = vsub.f32 1.0, %v445
        %v447 = vmul.f32 %v444, %v446
        %v448 = vadd.f32 %v444, %v447
        %vm449 = vweird.f32 %v444
        %v450 = vsel %vm449, %v444, %v448
        %v451 = vmul.f32 %v443, %v450
        %v452 = vsub.f32 %v437, %v451
        %v453 = vmul.f32 %v452, %v452
        %v454 = vsel %vm440, %v453, 0.0
        %455 = vadd.xlane.f32.xlu0 %v454
        %v456 = vpop.xlane.xlu0 %455
        %v457 = vmul.f32 %v456, %v450
        %v458 = vadd.f32 %v457, 1e-05
        %v459 = vrsqrt.pop %v458
        %v460 = vmul.f32 %v459, %v458
        %v461 = vmul.f32 %v460, %v459
        %v462 = vmul.f32 0.5, %v461
        %v463 = vsub.f32 1.5, %v462
        %v464 = vmul.f32 %v459, %v463
        %vm465 = vweird.f32 %v458
        %vm466 = vweird.f32 %v459
        %vm467 = vmor %vm465, %vm466
        %v468 = vsel %vm467, %v459, %v464
        %v469 = vmul.f32 %v452, %v468
        %v471 = vperm.slane %v438, 0
        %v473 = vmul.f32 %v469, %v471
        %v475 = vperm.slane %v439, 0
        %v477 = vadd.f32 %v473, %v475
        %v478 = vpack.c.bf16 %v477, %v477
        %v479 = vld [vmem:[%s3] sm:$0xf]
        %v480 = vld [vmem:[%s3 + $0x4] sm:$0xf]
        %v481 = vld [vmem:[%s3 + $0x8] sm:$0xf]
        %v482 = vld [vmem:[%s3 + $0xc] sm:$0xf]
        %v483 = vld [vmem:[%s4] sm:$0x1]
        %v485 = vperm.slane %v483, 0
        %v491 = vunpack.c.l.b16 %v479
        %v492 = vunpack.c.l.b16 %v480
        %v493 = vunpack.c.l.b16 %v481
        %v494 = vunpack.c.l.b16 %v482
        %v495 = vpack.c.b16 %v492, %v491
        %v496 = vpack.c.b16 %v494, %v493
        %v500 = vsel %vm440, %v478, 0
        %502 = vmatpush.bf16.msra.mxu0 0
        %503 = vmatpush.bf16.msra.mxu0 0
        %504 = vmatpush.bf16.msra.mxu0 0
        %505 = vmatpush.bf16.msra.mxu0 0
        %506 = vmatpush.bf16.msra.mxu0 0
        %507 = vmatpush.bf16.msra.mxu0 0
        %508 = vmatpush.bf16.msra.mxu0 %v496
        %509 = vmatpush.bf16.msra.mxu0 %v495
        %510 = vmatmul.bf16.gmra.mxu0 %v500
        %v511 = vpop.f32.mrf.mxu0
        %v512 = vadd.f32 %v485, %v511
        %v513 = vpop.f32.mrf.mxu0
        %514 = vdwg.mxu0
        %516 = vrot.lane.b32.xlu0 %v512, 120
        %v517 = vpop.permute.xlu0 %516
        %519 = vrot.lane.b32.xlu0 %v512, 112
        %v520 = vpop.permute.xlu0 %519
        %522 = vrot.lane.b32.xlu0 %v512, 104
        %v523 = vpop.permute.xlu0 %522
        %v525 = vrot.slane %v520, 4
        %vm526 = vcmask 1047556
        %v527 = vsel %vm526, %v525, %v512
        %v528 = vrot.slane %v512, 4
        %v529 = vsel %vm526, %v520, %v528
        %v531 = vunpack.c.l.s4 1983009808
        %v532 = vunpack.c.0.s8 %v531
        %v533 = vperm.slane %v527, %v532
        %v535 = vunpack.c.l.s4 1983009808
        %v536 = vunpack.c.0.s8 %v535
        %v537 = vperm.slane %v529, %v536
        %v538 = vrot.slane %v523, 4
        %v539 = vsel %vm526, %v538, %v517
        %v540 = vrot.slane %v517, 4
        %v541 = vsel %vm526, %v523, %v540
        %v543 = vunpack.c.l.s4 1983009808
        %v544 = vunpack.c.0.s8 %v543
        %v545 = vperm.slane %v539, %v544
        %v547 = vunpack.c.l.s4 1983009808
        %v548 = vunpack.c.0.s8 %v547
        %v549 = vperm.slane %v541, %v548
        %v550 = vrot.slane %v545, 4
        %v551 = vsel %vm526, %v550, %v533
        %v552 = vrot.slane %v533, 4
        %v553 = vsel %vm526, %v545, %v552
        %v555 = vunpack.c.l.s4 1934713408
        %v556 = vunpack.c.0.s8 %v555
        %v557 = vperm.slane %v551, %v556
        %v559 = vunpack.c.l.s4 1934713408
        %v560 = vunpack.c.0.s8 %v559
        %v561 = vperm.slane %v553, %v560
        %v562 = vrot.slane %v549, 4
        %v563 = vsel %vm526, %v562, %v537
        %v564 = vrot.slane %v537, 4
        %v565 = vsel %vm526, %v549, %v564
        %v567 = vunpack.c.l.s4 1934713408
        %v568 = vunpack.c.0.s8 %v567
        %v569 = vperm.slane %v563, %v568
        %v571 = vunpack.c.l.s4 1934713408
        %v572 = vunpack.c.0.s8 %v571
        %v573 = vperm.slane %v565, %v572
        %v574 = vrot.slane %v557, 4
        %v575 = vsel %vm526, 0.0, %v574
        %v576 = vrot.slane %v561, 4
        %v577 = vsel %vm526, 0.0, %v576
        %v578 = vrot.slane %v569, 4
        %v579 = vsel %vm526, 0.0, %v578
        %v580 = vrot.slane %v573, 4
        %v581 = vsel %vm526, 0.0, %v580
        %v582 = vsel %vm526, %v576, %v557
        %v584 = vunpack.c.l.s4 1983009808
        %v585 = vunpack.c.0.s8 %v584
        %v586 = vperm.slane %v582, %v585
        %v587 = vrot.slane %v577, 4
        %v588 = vsel %vm526, %v587, %v575
        %v590 = vunpack.c.l.s4 1983009808
        %v591 = vunpack.c.0.s8 %v590
        %v592 = vperm.slane %v588, %v591
        %v593 = vsel %vm526, %v580, %v569
        %v595 = vunpack.c.l.s4 1983009808
        %v596 = vunpack.c.0.s8 %v595
        %v597 = vperm.slane %v593, %v596
        %v598 = vrot.slane %v581, 4
        %v599 = vsel %vm526, %v598, %v579
        %v601 = vunpack.c.l.s4 1983009808
        %v602 = vunpack.c.0.s8 %v601
        %v603 = vperm.slane %v599, %v602
        %v604 = vrot.slane %v592, 4
        %v605 = vsel %vm526, %v604, %v586
        %v606 = vrot.slane %v586, 4
        %v607 = vsel %vm526, %v592, %v606
        %v609 = vunpack.c.l.s4 1934713408
        %v610 = vunpack.c.0.s8 %v609
        %v611 = vperm.slane %v605, %v610
        %v613 = vunpack.c.l.s4 1934713408
        %v614 = vunpack.c.0.s8 %v613
        %v615 = vperm.slane %v607, %v614
        %v616 = vrot.slane %v603, 4
        %v617 = vsel %vm526, %v616, %v597
        %v618 = vrot.slane %v597, 4
        %v619 = vsel %vm526, %v603, %v618
        %v621 = vunpack.c.l.s4 1934713408
        %v622 = vunpack.c.0.s8 %v621
        %v623 = vperm.slane %v617, %v622
        %v625 = vunpack.c.l.s4 1934713408
        %v626 = vunpack.c.0.s8 %v625
        %v627 = vperm.slane %v619, %v626
        %v628 = vrot.slane %v623, 4
        %v629 = vsel %vm526, %v628, %v611
        %v630 = vrot.slane %v611, 4
        %v631 = vsel %vm526, %v623, %v630
        %v632 = vrot.slane %v627, 4
        %v633 = vsel %vm526, %v632, %v615
        %v634 = vrot.slane %v615, 4
        %v635 = vsel %vm526, %v627, %v634
        %v636 = vpack.c.bf16 %v629, %v629
        %v637 = vpack.c.bf16 %v631, %v631
        %v638 = vpack.c.bf16 %v633, %v633
        %v639 = vpack.c.bf16 %v635, %v635
        %640 = vrot.lane.b32.xlu0 %v512, 96
        %v641 = vpop.permute.xlu0 %640
        %642 = vrot.lane.b32.xlu0 %v517, 96
        %v643 = vpop.permute.xlu0 %642
        %644 = vrot.lane.b32.xlu0 %v520, 96
        %v645 = vpop.permute.xlu0 %644
        %646 = vrot.lane.b32.xlu0 %v523, 96
        %v647 = vpop.permute.xlu0 %646
        %v652 = vrot.slane %v645, 4
        %v653 = vsel %vm526, %v652, %v641
        %v654 = vrot.slane %v641, 4
        %v655 = vsel %vm526, %v645, %v654
        %v657 = vunpack.c.l.s4 1983009808
        %v658 = vunpack.c.0.s8 %v657
        %v659 = vperm.slane %v653, %v658
        %v661 = vunpack.c.l.s4 1983009808
        %v662 = vunpack.c.0.s8 %v661
        %v663 = vperm.slane %v655, %v662
        %v664 = vrot.slane %v647, 4
        %v665 = vsel %vm526, %v664, %v643
        %v666 = vrot.slane %v643, 4
        %v667 = vsel %vm526, %v647, %v666
        %v669 = vunpack.c.l.s4 1983009808
        %v670 = vunpack.c.0.s8 %v669
        %v671 = vperm.slane %v665, %v670
        %v673 = vunpack.c.l.s4 1983009808
        %v674 = vunpack.c.0.s8 %v673
        %v675 = vperm.slane %v667, %v674
        %v676 = vrot.slane %v671, 4
        %v677 = vsel %vm526, %v676, %v659
        %v678 = vrot.slane %v659, 4
        %v679 = vsel %vm526, %v671, %v678
        %v681 = vunpack.c.l.s4 1934713408
        %v682 = vunpack.c.0.s8 %v681
        %v683 = vperm.slane %v677, %v682
        %v685 = vunpack.c.l.s4 1934713408
        %v686 = vunpack.c.0.s8 %v685
        %v687 = vperm.slane %v679, %v686
        %v688 = vrot.slane %v675, 4
        %v689 = vsel %vm526, %v688, %v663
        %v690 = vrot.slane %v663, 4
        %v691 = vsel %vm526, %v675, %v690
        %v693 = vunpack.c.l.s4 1934713408
        %v694 = vunpack.c.0.s8 %v693
        %v695 = vperm.slane %v689, %v694
        %v697 = vunpack.c.l.s4 1934713408
        %v698 = vunpack.c.0.s8 %v697
        %v699 = vperm.slane %v691, %v698
        %v700 = vrot.slane %v683, 4
        %v701 = vsel %vm526, 0.0, %v700
        %v702 = vrot.slane %v687, 4
        %v703 = vsel %vm526, 0.0, %v702
        %v704 = vrot.slane %v695, 4
        %v705 = vsel %vm526, 0.0, %v704
        %v706 = vrot.slane %v699, 4
        %v707 = vsel %vm526, 0.0, %v706
        %v708 = vsel %vm526, %v702, %v683
        %v710 = vunpack.c.l.s4 1983009808
        %v711 = vunpack.c.0.s8 %v710
        %v712 = vperm.slane %v708, %v711
        %v713 = vrot.slane %v703, 4
        %v714 = vsel %vm526, %v713, %v701
        %v716 = vunpack.c.l.s4 1983009808
        %v717 = vunpack.c.0.s8 %v716
        %v718 = vperm.slane %v714, %v717
        %v719 = vsel %vm526, %v706, %v695
        %v721 = vunpack.c.l.s4 1983009808
        %v722 = vunpack.c.0.s8 %v721
        %v723 = vperm.slane %v719, %v722
        %v724 = vrot.slane %v707, 4
        %v725 = vsel %vm526, %v724, %v705
        %v727 = vunpack.c.l.s4 1983009808
        %v728 = vunpack.c.0.s8 %v727
        %v729 = vperm.slane %v725, %v728
        %v730 = vrot.slane %v718, 4
        %v731 = vsel %vm526, %v730, %v712
        %v732 = vrot.slane %v712, 4
        %v733 = vsel %vm526, %v718, %v732
        %v735 = vunpack.c.l.s4 1934713408
        %v736 = vunpack.c.0.s8 %v735
        %v737 = vperm.slane %v731, %v736
        %v739 = vunpack.c.l.s4 1934713408
        %v740 = vunpack.c.0.s8 %v739
        %v741 = vperm.slane %v733, %v740
        %v742 = vrot.slane %v729, 4
        %v743 = vsel %vm526, %v742, %v723
        %v744 = vrot.slane %v723, 4
        %v745 = vsel %vm526, %v729, %v744
        %v747 = vunpack.c.l.s4 1934713408
        %v748 = vunpack.c.0.s8 %v747
        %v749 = vperm.slane %v743, %v748
        %v751 = vunpack.c.l.s4 1934713408
        %v752 = vunpack.c.0.s8 %v751
        %v753 = vperm.slane %v745, %v752
        %v754 = vrot.slane %v749, 4
        %v755 = vsel %vm526, %v754, %v737
        %v756 = vrot.slane %v737, 4
        %v757 = vsel %vm526, %v749, %v756
        %v758 = vrot.slane %v753, 4
        %v759 = vsel %vm526, %v758, %v741
        %v760 = vrot.slane %v741, 4
        %v761 = vsel %vm526, %v753, %v760
        %v762 = vpack.c.bf16 %v755, %v755
        %v763 = vpack.c.bf16 %v757, %v757
        %v764 = vpack.c.bf16 %v759, %v759
        %v765 = vpack.c.bf16 %v761, %v761
        %766 = vrot.lane.b32.xlu0 %v512, 64
        %v767 = vpop.permute.xlu0 %766
        %768 = vrot.lane.b32.xlu0 %v517, 64
        %v769 = vpop.permute.xlu0 %768
        %770 = vrot.lane.b32.xlu0 %v520, 64
        %v771 = vpop.permute.xlu0 %770
        %772 = vrot.lane.b32.xlu0 %v523, 64
        %v773 = vpop.permute.xlu0 %772
        %v778 = vrot.slane %v771, 4
        %v779 = vsel %vm526, %v778, %v767
        %v780 = vrot.slane %v767, 4
        %v781 = vsel %vm526, %v771, %v780
        %v783 = vunpack.c.l.s4 1983009808
        %v784 = vunpack.c.0.s8 %v783
        %v785 = vperm.slane %v779, %v784
        %v787 = vunpack.c.l.s4 1983009808
        %v788 = vunpack.c.0.s8 %v787
        %v789 = vperm.slane %v781, %v788
        %v790 = vrot.slane %v773, 4
        %v791 = vsel %vm526, %v790, %v769
        %v792 = vrot.slane %v769, 4
        %v793 = vsel %vm526, %v773, %v792
        %v795 = vunpack.c.l.s4 1983009808
        %v796 = vunpack.c.0.s8 %v795
        %v797 = vperm.slane %v791, %v796
        %v799 = vunpack.c.l.s4 1983009808
        %v800 = vunpack.c.0.s8 %v799
        %v801 = vperm.slane %v793, %v800
        %v802 = vrot.slane %v797, 4
        %v803 = vsel %vm526, %v802, %v785
        %v804 = vrot.slane %v785, 4
        %v805 = vsel %vm526, %v797, %v804
        %v807 = vunpack.c.l.s4 1934713408
        %v808 = vunpack.c.0.s8 %v807
        %v809 = vperm.slane %v803, %v808
        %v811 = vunpack.c.l.s4 1934713408
        %v812 = vunpack.c.0.s8 %v811
        %v813 = vperm.slane %v805, %v812
        %v814 = vrot.slane %v801, 4
        %v815 = vsel %vm526, %v814, %v789
        %v816 = vrot.slane %v789, 4
        %v817 = vsel %vm526, %v801, %v816
        %v819 = vunpack.c.l.s4 1934713408
        %v820 = vunpack.c.0.s8 %v819
        %v821 = vperm.slane %v815, %v820
        %v823 = vunpack.c.l.s4 1934713408
        %v824 = vunpack.c.0.s8 %v823
        %v825 = vperm.slane %v817, %v824
        %v826 = vrot.slane %v809, 4
        %v827 = vsel %vm526, 0.0, %v826
        %v828 = vrot.slane %v813, 4
        %v829 = vsel %vm526, 0.0, %v828
        %v830 = vrot.slane %v821, 4
        %v831 = vsel %vm526, 0.0, %v830
        %v832 = vrot.slane %v825, 4
        %v833 = vsel %vm526, 0.0, %v832
        %v834 = vsel %vm526, %v828, %v809
        %v836 = vunpack.c.l.s4 1983009808
        %v837 = vunpack.c.0.s8 %v836
        %v838 = vperm.slane %v834, %v837
        %v839 = vrot.slane %v829, 4
        %v840 = vsel %vm526, %v839, %v827
        %v842 = vunpack.c.l.s4 1983009808
        %v843 = vunpack.c.0.s8 %v842
        %v844 = vperm.slane %v840, %v843
        %v845 = vsel %vm526, %v832, %v821
        %v847 = vunpack.c.l.s4 1983009808
        %v848 = vunpack.c.0.s8 %v847
        %v849 = vperm.slane %v845, %v848
        %v850 = vrot.slane %v833, 4
        %v851 = vsel %vm526, %v850, %v831
        %v853 = vunpack.c.l.s4 1983009808
        %v854 = vunpack.c.0.s8 %v853
        %v855 = vperm.slane %v851, %v854
        %v856 = vrot.slane %v844, 4
        %v857 = vsel %vm526, %v856, %v838
        %v858 = vrot.slane %v838, 4
        %v859 = vsel %vm526, %v844, %v858
        %v861 = vunpack.c.l.s4 1934713408
        %v862 = vunpack.c.0.s8 %v861
        %v863 = vperm.slane %v857, %v862
        %v865 = vunpack.c.l.s4 1934713408
        %v866 = vunpack.c.0.s8 %v865
        %v867 = vperm.slane %v859, %v866
        %v868 = vrot.slane %v855, 4
        %v869 = vsel %vm526, %v868, %v849
        %v870 = vrot.slane %v849, 4
        %v871 = vsel %vm526, %v855, %v870
        %v873 = vunpack.c.l.s4 1934713408
        %v874 = vunpack.c.0.s8 %v873
        %v875 = vperm.slane %v869, %v874
        %v877 = vunpack.c.l.s4 1934713408
        %v878 = vunpack.c.0.s8 %v877
        %v879 = vperm.slane %v871, %v878
        %v880 = vrot.slane %v875, 4
        %v881 = vsel %vm526, %v880, %v863
        %v882 = vrot.slane %v863, 4
        %v883 = vsel %vm526, %v875, %v882
        %v884 = vrot.slane %v879, 4
        %v885 = vsel %vm526, %v884, %v867
        %v886 = vrot.slane %v867, 4
        %v887 = vsel %vm526, %v879, %v886
        %v888 = vpack.c.bf16 %v881, %v881
        %v889 = vpack.c.bf16 %v883, %v883
        %v890 = vpack.c.bf16 %v885, %v885
        %v891 = vpack.c.bf16 %v887, %v887
        %vm892 = vcmask 64512
        %v894 = vsel %vm892, %v636, 0
        %v897 = vsel %vm892, %v762, 0
        %899 = vmatpush.bf16.xpose.msra.mxu0 0
        %900 = vmatpush.bf16.xpose.msra.mxu0 0
        %901 = vmatpush.bf16.xpose.msra.mxu0 0
        %902 = vmatpush.bf16.xpose.msra.mxu0 0
        %903 = vmatpush.bf16.xpose.msra.mxu0 0
        %904 = vmatpush.bf16.xpose.msra.mxu0 0
        %905 = vmatpush.bf16.xpose.msra.mxu0 0
        %906 = vmatpush.bf16.xpose.msra.mxu0 %v897
        %907 = vmatmul.bf16.gmra.mxu0 %v894
        %v908 = vpop.f32.mrf.mxu0
        %v909 = vadd.f32 0.0, %v908
        %v910 = vpop.f32.mrf.mxu0
        %911 = vdwg.mxu0
        %v913 = vsel %vm892, %v637, 0
        %v916 = vsel %vm892, %v763, 0
        %918 = vmatpush.bf16.xpose.msra.mxu0 0
        %919 = vmatpush.bf16.xpose.msra.mxu0 0
        %920 = vmatpush.bf16.xpose.msra.mxu0 0
        %921 = vmatpush.bf16.xpose.msra.mxu0 0
        %922 = vmatpush.bf16.xpose.msra.mxu0 0
        %923 = vmatpush.bf16.xpose.msra.mxu0 0
        %924 = vmatpush.bf16.xpose.msra.mxu0 0
        %925 = vmatpush.bf16.xpose.msra.mxu0 %v916
        %926 = vmatmul.bf16.gmra.mxu0 %v913
        %v927 = vpop.f32.mrf.mxu0
        %v928 = vadd.f32 0.0, %v927
        %v929 = vpop.f32.mrf.mxu0
        %930 = vdwg.mxu0
        %v932 = vsel %vm892, %v638, 0
        %v935 = vsel %vm892, %v764, 0
        %937 = vmatpush.bf16.xpose.msra.mxu0 0
        %938 = vmatpush.bf16.xpose.msra.mxu0 0
        %939 = vmatpush.bf16.xpose.msra.mxu0 0
        %940 = vmatpush.bf16.xpose.msra.mxu0 0
        %941 = vmatpush.bf16.xpose.msra.mxu0 0
        %942 = vmatpush.bf16.xpose.msra.mxu0 0
        %943 = vmatpush.bf16.xpose.msra.mxu0 0
        %944 = vmatpush.bf16.xpose.msra.mxu0 %v935
        %945 = vmatmul.bf16.gmra.mxu0 %v932
        %v946 = vpop.f32.mrf.mxu0
        %v947 = vadd.f32 0.0, %v946
        %v948 = vpop.f32.mrf.mxu0
        %949 = vdwg.mxu0
        %v951 = vsel %vm892, %v639, 0
        %v954 = vsel %vm892, %v765, 0
        %956 = vmatpush.bf16.xpose.msra.mxu0 0
        %957 = vmatpush.bf16.xpose.msra.mxu0 0
        %958 = vmatpush.bf16.xpose.msra.mxu0 0
        %959 = vmatpush.bf16.xpose.msra.mxu0 0
        %960 = vmatpush.bf16.xpose.msra.mxu0 0
        %961 = vmatpush.bf16.xpose.msra.mxu0 0
        %962 = vmatpush.bf16.xpose.msra.mxu0 0
        %963 = vmatpush.bf16.xpose.msra.mxu0 %v954
        %964 = vmatmul.bf16.gmra.mxu0 %v951
        %v965 = vpop.f32.mrf.mxu0
        %v966 = vadd.f32 0.0, %v965
        %v967 = vpop.f32.mrf.mxu0
        %968 = vdwg.mxu0
        %v969 = vlaneseq
        %v970 = vshrl.u32 %v969, 7
        %v971 = vlaneseq
        %v972 = vand.u32 %v971, 127
        %vm973 = vcmp.le.s32.totalorder %v972, %v970
        %v974 = vsel %vm973, 1, 0
        %vm975 = vcmp.eq.s32.totalorder %v974, 1
        %v976 = vsel %vm975, %v909, -3.4028235e+38
        %v977 = vsel %vm975, %v928, -3.4028235e+38
        %v978 = vsel %vm975, %v947, -3.4028235e+38
        %v979 = vsel %vm975, %v966, -3.4028235e+38
        %v980 = vsel %vm892, %v976, -inf
        %981 = vmax.xlane.f32.xlu0 %v980
        %v982 = vpop.xlane.xlu0 %981
        %v983 = vsel %vm892, %v977, -inf
        %984 = vmax.xlane.f32.xlu0 %v983
        %v985 = vpop.xlane.xlu0 %984
        %v986 = vsel %vm892, %v978, -inf
        %987 = vmax.xlane.f32.xlu0 %v986
        %v988 = vpop.xlane.xlu0 %987
        %v989 = vsel %vm892, %v979, -inf
        %990 = vmax.xlane.f32.xlu0 %v989
        %v991 = vpop.xlane.xlu0 %990
        %v992 = vsub.f32 %v976, %v982
        %v993 = vsub.f32 %v977, %v985
        %v994 = vsub.f32 %v978, %v988
        %v995 = vsub.f32 %v979, %v991
        %v996 = vmul.f32 %v992, 1.442695
        %v997 = vpow.pop %v996
        %v998 = vmul.f32 %v993, 1.442695
        %v999 = vpow.pop %v998
        %v1000 = vmul.f32 %v994, 1.442695
        %v1001 = vpow.pop %v1000
        %v1002 = vmul.f32 %v995, 1.442695
        %v1003 = vpow.pop %v1002
        %v1004 = vsel %vm892, %v997, 0.0
        %1005 = vadd.xlane.f32.xlu0 %v1004
        %v1006 = vpop.xlane.xlu0 %1005
        %v1007 = vsel %vm892, %v999, 0.0
        %1008 = vadd.xlane.f32.xlu0 %v1007
        %v1009 = vpop.xlane.xlu0 %1008
        %v1010 = vsel %vm892, %v1001, 0.0
        %1011 = vadd.xlane.f32.xlu0 %v1010
        %v1012 = vpop.xlane.xlu0 %1011
        %v1013 = vsel %vm892, %v1003, 0.0
        %1014 = vadd.xlane.f32.xlu0 %v1013
        %v1015 = vpop.xlane.xlu0 %1014
        %v1016 = vrcp.pop %v1006
        %v1017 = vrcp.pop %v1009
        %v1018 = vrcp.pop %v1012
        %v1019 = vrcp.pop %v1015
        %v1020 = vmul.f32 %v997, %v1016
        %v1021 = vmul.f32 %v999, %v1017
        %v1022 = vmul.f32 %v1001, %v1018
        %v1023 = vmul.f32 %v1003, %v1019
        %v1024 = vpack.c.bf16 %v1020, %v1020
        %v1025 = vpack.c.bf16 %v1021, %v1021
        %v1026 = vpack.c.bf16 %v1022, %v1022
        %v1027 = vpack.c.bf16 %v1023, %v1023
        %v1029 = vsel %vm892, %v1024, 0
        %vm1031 = vcmask 1043456
        %v1033 = vsel %vm1031, %v888, 0
        %1035 = vmatpush.bf16.msra.mxu0 0
        %1036 = vmatpush.bf16.msra.mxu0 0
        %1037 = vmatpush.bf16.msra.mxu0 0
        %1038 = vmatpush.bf16.msra.mxu0 0
        %1039 = vmatpush.bf16.msra.mxu0 0
        %1040 = vmatpush.bf16.msra.mxu0 0
        %1041 = vmatpush.bf16.msra.mxu0 0
        %1042 = vmatpush.bf16.msra.mxu0 %v1033
        %1043 = vmatmul.bf16.gmra.mxu0 %v1029
        %v1044 = vpop.f32.mrf.mxu0
        %v1045 = vadd.f32 0.0, %v1044
        %v1046 = vpop.f32.mrf.mxu0
        %1047 = vdwg.mxu0
        %v1049 = vsel %vm892, %v1025, 0
        %v1052 = vsel %vm1031, %v889, 0
        %1054 = vmatpush.bf16.msra.mxu0 0
        %1055 = vmatpush.bf16.msra.mxu0 0
        %1056 = vmatpush.bf16.msra.mxu0 0
        %1057 = vmatpush.bf16.msra.mxu0 0
        %1058 = vmatpush.bf16.msra.mxu0 0
        %1059 = vmatpush.bf16.msra.mxu0 0
        %1060 = vmatpush.bf16.msra.mxu0 0
        %1061 = vmatpush.bf16.msra.mxu0 %v1052
        %1062 = vmatmul.bf16.gmra.mxu0 %v1049
        %v1063 = vpop.f32.mrf.mxu0
        %v1064 = vadd.f32 0.0, %v1063
        %v1065 = vpop.f32.mrf.mxu0
        %1066 = vdwg.mxu0
        %v1068 = vsel %vm892, %v1026, 0
        %v1071 = vsel %vm1031, %v890, 0
        %1073 = vmatpush.bf16.msra.mxu0 0
        %1074 = vmatpush.bf16.msra.mxu0 0
        %1075 = vmatpush.bf16.msra.mxu0 0
        %1076 = vmatpush.bf16.msra.mxu0 0
        %1077 = vmatpush.bf16.msra.mxu0 0
        %1078 = vmatpush.bf16.msra.mxu0 0
        %1079 = vmatpush.bf16.msra.mxu0 0
        %1080 = vmatpush.bf16.msra.mxu0 %v1071
        %1081 = vmatmul.bf16.gmra.mxu0 %v1068
        %v1082 = vpop.f32.mrf.mxu0
        %v1083 = vadd.f32 0.0, %v1082
        %v1084 = vpop.f32.mrf.mxu0
        %1085 = vdwg.mxu0
        %v1087 = vsel %vm892, %v1027, 0
        %v1090 = vsel %vm1031, %v891, 0
        %1092 = vmatpush.bf16.msra.mxu0 0
        %1093 = vmatpush.bf16.msra.mxu0 0
        %1094 = vmatpush.bf16.msra.mxu0 0
        %1095 = vmatpush.bf16.msra.mxu0 0
        %1096 = vmatpush.bf16.msra.mxu0 0
        %1097 = vmatpush.bf16.msra.mxu0 0
        %1098 = vmatpush.bf16.msra.mxu0 0
        %1099 = vmatpush.bf16.msra.mxu0 %v1090
        %1100 = vmatmul.bf16.gmra.mxu0 %v1087
        %v1101 = vpop.f32.mrf.mxu0
        %v1102 = vadd.f32 0.0, %v1101
        %v1103 = vpop.f32.mrf.mxu0
        %1104 = vdwg.mxu0
        %v1105 = vrot.slane %v1083, 4
        %v1106 = vsel %vm526, %v1105, %v1045
        %v1107 = vrot.slane %v1045, 4
        %v1108 = vsel %vm526, %v1083, %v1107
        %v1110 = vunpack.c.l.s4 1983009808
        %v1111 = vunpack.c.0.s8 %v1110
        %v1112 = vperm.slane %v1106, %v1111
        %v1114 = vunpack.c.l.s4 1983009808
        %v1115 = vunpack.c.0.s8 %v1114
        %v1116 = vperm.slane %v1108, %v1115
        %v1117 = vrot.slane %v1102, 4
        %v1118 = vsel %vm526, %v1117, %v1064
        %v1119 = vrot.slane %v1064, 4
        %v1120 = vsel %vm526, %v1102, %v1119
        %v1122 = vunpack.c.l.s4 1983009808
        %v1123 = vunpack.c.0.s8 %v1122
        %v1124 = vperm.slane %v1118, %v1123
        %v1126 = vunpack.c.l.s4 1983009808
        %v1127 = vunpack.c.0.s8 %v1126
        %v1128 = vperm.slane %v1120, %v1127
        %v1129 = vrot.slane %v1124, 4
        %v1130 = vsel %vm526, %v1129, %v1112
        %v1131 = vrot.slane %v1112, 4
        %v1132 = vsel %vm526, %v1124, %v1131
        %v1134 = vunpack.c.l.s4 1934713408
        %v1135 = vunpack.c.0.s8 %v1134
        %v1136 = vperm.slane %v1130, %v1135
        %v1138 = vunpack.c.l.s4 1934713408
        %v1139 = vunpack.c.0.s8 %v1138
        %v1140 = vperm.slane %v1132, %v1139
        %v1141 = vrot.slane %v1128, 4
        %v1142 = vsel %vm526, %v1141, %v1116
        %v1143 = vrot.slane %v1116, 4
        %v1144 = vsel %vm526, %v1128, %v1143
        %v1146 = vunpack.c.l.s4 1934713408
        %v1147 = vunpack.c.0.s8 %v1146
        %v1148 = vperm.slane %v1142, %v1147
        %v1150 = vunpack.c.l.s4 1934713408
        %v1151 = vunpack.c.0.s8 %v1150
        %v1152 = vperm.slane %v1144, %v1151
        %v1153 = vrot.slane %v1136, 4
        %v1154 = vsel %vm526, 0.0, %v1153
        %v1155 = vrot.slane %v1140, 4
        %v1156 = vsel %vm526, 0.0, %v1155
        %v1157 = vrot.slane %v1148, 4
        %v1158 = vsel %vm526, 0.0, %v1157
        %v1159 = vrot.slane %v1152, 4
        %v1160 = vsel %vm526, 0.0, %v1159
        %v1161 = vsel %vm526, %v1155, %v1136
        %v1163 = vunpack.c.l.s4 1983009808
        %v1164 = vunpack.c.0.s8 %v1163
        %v1165 = vperm.slane %v1161, %v1164
        %v1166 = vrot.slane %v1156, 4
        %v1167 = vsel %vm526, %v1166, %v1154
        %v1169 = vunpack.c.l.s4 1983009808
        %v1170 = vunpack.c.0.s8 %v1169
        %v1171 = vperm.slane %v1167, %v1170
        %v1172 = vsel %vm526, %v1159, %v1148
        %v1174 = vunpack.c.l.s4 1983009808
        %v1175 = vunpack.c.0.s8 %v1174
        %v1176 = vperm.slane %v1172, %v1175
        %v1177 = vrot.slane %v1160, 4
        %v1178 = vsel %vm526, %v1177, %v1158
        %v1180 = vunpack.c.l.s4 1983009808
        %v1181 = vunpack.c.0.s8 %v1180
        %v1182 = vperm.slane %v1178, %v1181
        %v1183 = vrot.slane %v1171, 4
        %v1184 = vsel %vm526, %v1183, %v1165
        %v1185 = vrot.slane %v1165, 4
        %v1186 = vsel %vm526, %v1171, %v1185
        %v1188 = vunpack.c.l.s4 1934713408
        %v1189 = vunpack.c.0.s8 %v1188
        %v1190 = vperm.slane %v1184, %v1189
        %v1192 = vunpack.c.l.s4 1934713408
        %v1193 = vunpack.c.0.s8 %v1192
        %v1194 = vperm.slane %v1186, %v1193
        %v1195 = vrot.slane %v1182, 4
        %v1196 = vsel %vm526, %v1195, %v1176
        %v1197 = vrot.slane %v1176, 4
        %v1198 = vsel %vm526, %v1182, %v1197
        %v1200 = vunpack.c.l.s4 1934713408
        %v1201 = vunpack.c.0.s8 %v1200
        %v1202 = vperm.slane %v1196, %v1201
        %v1204 = vunpack.c.l.s4 1934713408
        %v1205 = vunpack.c.0.s8 %v1204
        %v1206 = vperm.slane %v1198, %v1205
        %v1207 = vrot.slane %v1202, 4
        %v1208 = vsel %vm526, %v1207, %v1190
        %v1209 = vrot.slane %v1190, 4
        %v1210 = vsel %vm526, %v1202, %v1209
        %v1211 = vrot.slane %v1206, 4
        %v1212 = vsel %vm526, %v1211, %v1194
        %v1213 = vrot.slane %v1194, 4
        %v1214 = vsel %vm526, %v1206, %v1213
        %1216 = vrot.lane.b32.xlu0 %v1210, 8
        %v1217 = vpop.permute.xlu0 %1216
        %1220 = vrot.lane.b32.xlu0 %v1212, 16
        %v1221 = vpop.permute.xlu0 %1220
        %1224 = vrot.lane.b32.xlu0 %v1214, 24
        %v1225 = vpop.permute.xlu0 %1224
        %v1227 = vsel %vm892, %v1208, %v1217
        %vm1228 = vcmask 130048
        %v1229 = vsel %vm1228, %v1227, %v1221
        %vm1230 = vcmask 195584
        %v1231 = vsel %vm1230, %v1229, %v1225
        %v1232 = vpack.c.bf16 %v1231, %v1231
        %v1233 = vld [vmem:[%s5] sm:$0xf]
        %v1234 = vld [vmem:[%s5 + $0x4] sm:$0xf]
        %v1235 = vld [vmem:[%s5 + $0x8] sm:$0xf]
        %v1236 = vld [vmem:[%s5 + $0xc] sm:$0xf]
        %v1237 = vld [vmem:[%s6] sm:$0x1]
        %v1239 = vperm.slane %v1237, 0
        %v1245 = vunpack.c.l.b16 %v1233
        %v1246 = vunpack.c.l.b16 %v1234
        %v1247 = vunpack.c.l.b16 %v1235
        %v1248 = vunpack.c.l.b16 %v1236
        %v1249 = vpack.c.b16 %v1246, %v1245
        %v1250 = vpack.c.b16 %v1248, %v1247
        %v1254 = vsel %vm440, %v1232, 0
        %1256 = vmatpush.bf16.msra.mxu0 0
        %1257 = vmatpush.bf16.msra.mxu0 0
        %1258 = vmatpush.bf16.msra.mxu0 0
        %1259 = vmatpush.bf16.msra.mxu0 0
        %1260 = vmatpush.bf16.msra.mxu0 0
        %1261 = vmatpush.bf16.msra.mxu0 0
        %1262 = vmatpush.bf16.msra.mxu0 %v1250
        %1263 = vmatpush.bf16.msra.mxu0 %v1249
        %1264 = vmatmul.bf16.gmra.mxu0 %v1254
        %v1265 = vpop.f32.mrf.mxu0
        %v1266 = vadd.f32 %v1239, %v1265
        %v1267 = vpop.f32.mrf.mxu0
        %1268 = vdwg.mxu0
        %v1269 = vadd.f32 %v437, %v1266
        %v1270 = vld [vmem:[%s7] sm:$0x1]
        %v1271 = vld [vmem:[%s8] sm:$0x1]
        %v1272 = vsel %vm440, %v1269, 0.0
        %1273 = vadd.xlane.f32.xlu0 %v1272
        %v1274 = vpop.xlane.xlu0 %1273
        %v1275 = vmul.f32 %v1274, %v450
        %v1276 = vsub.f32 %v1269, %v1275
        %v1277 = vmul.f32 %v1276, %v1276
        %v1278 = vsel %vm440, %v1277, 0.0
        %1279 = vadd.xlane.f32.xlu0 %v1278
        %v1280 = vpop.xlane.xlu0 %1279
        %v1281 = vmul.f32 %v1280, %v450
        %v1282 = vadd.f32 %v1281, 1e-05
        %v1283 = vrsqrt.pop %v1282
        %v1284 = vmul.f32 %v1283, %v1282
        %v1285 = vmul.f32 %v1284, %v1283
        %v1286 = vmul.f32 0.5, %v1285
        %v1287 = vsub.f32 1.5, %v1286
        %v1288 = vmul.f32 %v1283, %v1287
        %vm1289 = vweird.f32 %v1282
        %vm1290 = vweird.f32 %v1283
        %vm1291 = vmor %vm1289, %vm1290
        %v1292 = vsel %vm1291, %v1283, %v1288
        %v1293 = vmul.f32 %v1276, %v1292
        %v1295 = vperm.slane %v1270, 0
        %v1297 = vmul.f32 %v1293, %v1295
        %v1299 = vperm.slane %v1271, 0
        %v1301 = vadd.f32 %v1297, %v1299
        %v1302 = vpack.c.bf16 %v1301, %v1301
        %v1303 = vld [vmem:[%s9] sm:$0xf]
        %v1304 = vld [vmem:[%s9 + $0x4] sm:$0xf]
        %v1305 = vld [vmem:[%s9 + $0x8] sm:$0xf]
        %v1306 = vld [vmem:[%s9 + $0xc] sm:$0xf]
        %v1307 = vld [vmem:[%s10] sm:$0x1]
        %v1309 = vperm.slane %v1307, 0
        %v1315 = vunpack.c.l.b16 %v1303
        %v1316 = vunpack.c.l.b16 %v1304
        %v1317 = vunpack.c.l.b16 %v1305
        %v1318 = vunpack.c.l.b16 %v1306
        %v1319 = vpack.c.b16 %v1316, %v1315
        %v1320 = vpack.c.b16 %v1318, %v1317
        %v1324 = vsel %vm440, %v1302, 0
        %1326 = vmatpush.bf16.msra.mxu0 0
        %1327 = vmatpush.bf16.msra.mxu0 0
        %1328 = vmatpush.bf16.msra.mxu0 0
        %1329 = vmatpush.bf16.msra.mxu0 0
        %1330 = vmatpush.bf16.msra.mxu0 0
        %1331 = vmatpush.bf16.msra.mxu0 0
        %1332 = vmatpush.bf16.msra.mxu0 %v1320
        %1333 = vmatpush.bf16.msra.mxu0 %v1319
        %1334 = vmatmul.bf16.gmra.mxu0 %v1324
        %v1335 = vpop.f32.mrf.mxu0
        %v1336 = vadd.f32 %v1309, %v1335
        %v1337 = vpop.f32.mrf.mxu0
        %1338 = vdwg.mxu0
        %v1339 = vmax.f32 %v1336, 0.0
        %v1340 = vpack.c.bf16 %v1339, %v1339
        %v1341 = vld [vmem:[%s11] sm:$0xf]
        %v1342 = vld [vmem:[%s11 + $0x4] sm:$0xf]
        %v1343 = vld [vmem:[%s11 + $0x8] sm:$0xf]
        %v1344 = vld [vmem:[%s11 + $0xc] sm:$0xf]
        %v1345 = vld [vmem:[%s11 + $0x10] sm:$0xf]
        %v1346 = vld [vmem:[%s11 + $0x14] sm:$0xf]
        %v1347 = vld [vmem:[%s11 + $0x18] sm:$0xf]
        %v1348 = vld [vmem:[%s11 + $0x1c] sm:$0xf]
        %v1349 = vld [vmem:[%s11 + $0x20] sm:$0xf]
        %v1350 = vld [vmem:[%s11 + $0x24] sm:$0xf]
        %v1351 = vld [vmem:[%s11 + $0x28] sm:$0xf]
        %v1352 = vld [vmem:[%s11 + $0x2c] sm:$0xf]
        %v1353 = vld [vmem:[%s11 + $0x30] sm:$0xf]
        %v1354 = vld [vmem:[%s11 + $0x34] sm:$0xf]
        %v1355 = vld [vmem:[%s11 + $0x38] sm:$0xf]
        %v1356 = vld [vmem:[%s11 + $0x3c] sm:$0xf]
        %v1357 = vld [vmem:[%s12] sm:$0x1]
        %v1359 = vperm.slane %v1357, 0
        %v1377 = vunpack.c.l.b16 %v1341
        %v1378 = vunpack.c.l.b16 %v1342
        %v1379 = vunpack.c.l.b16 %v1343
        %v1380 = vunpack.c.l.b16 %v1344
        %v1381 = vunpack.c.l.b16 %v1345
        %v1382 = vunpack.c.l.b16 %v1346
        %v1383 = vunpack.c.l.b16 %v1347
        %v1384 = vunpack.c.l.b16 %v1348
        %v1385 = vunpack.c.l.b16 %v1349
        %v1386 = vunpack.c.l.b16 %v1350
        %v1387 = vunpack.c.l.b16 %v1351
        %v1388 = vunpack.c.l.b16 %v1352
        %v1389 = vunpack.c.l.b16 %v1353
        %v1390 = vunpack.c.l.b16 %v1354
        %v1391 = vunpack.c.l.b16 %v1355
        %v1392 = vunpack.c.l.b16 %v1356
        %v1393 = vpack.c.b16 %v1378, %v1377
        %v1394 = vpack.c.b16 %v1380, %v1379
        %v1395 = vpack.c.b16 %v1382, %v1381
        %v1396 = vpack.c.b16 %v1384, %v1383
        %v1397 = vpack.c.b16 %v1386, %v1385
        %v1398 = vpack.c.b16 %v1388, %v1387
        %v1399 = vpack.c.b16 %v1390, %v1389
        %v1400 = vpack.c.b16 %v1392, %v1391
        %1409 = vmatpush.bf16.msra.mxu0 %v1400
        %1410 = vmatpush.bf16.msra.mxu0 %v1399
        %1411 = vmatpush.bf16.msra.mxu0 %v1398
        %1412 = vmatpush.bf16.msra.mxu0 %v1397
        %1413 = vmatpush.bf16.msra.mxu0 %v1396
        %1414 = vmatpush.bf16.msra.mxu0 %v1395
        %1415 = vmatpush.bf16.msra.mxu0 %v1394
        %1416 = vmatpush.bf16.msra.mxu0 %v1393
        %1417 = vmatmul.bf16.gmra.mxu0 %v1340
        %v1418 = vpop.f32.mrf.mxu0
        %v1419 = vadd.f32 %v1359, %v1418
        %v1420 = vpop.f32.mrf.mxu0
        %1421 = vdwg.mxu0
        %v1422 = vadd.f32 %v1269, %v1419
        %1423 = vst.msk [vmem:[%s431] sm:$0xff] %vm440, %v1422
        %s1424 = sand.u32 %s313, 1
        %s1425 = scalar_lea.sflag [#allocation3], %s1424
        %s1426 = sand.u32 %s313, 1
        %s1427 = smul.addr %s1426, 8
        %s1428 = scalar_lea.vmem [#allocation2], %s1427
        // Predicated region
        $region73: #{tpu_custom_call.1} parent=71 // pred_check
          %p1429 = pneg %p323
        $region74: #{tpu_custom_call.1} parent=71 // pred_check_branch
          %1431 = sbr.rel (%p1429) target = $region76
        $region75: #{tpu_custom_call.1} parent=71 // pred_region
          %1433 = vsyncadd %s1425, 0
          %s1434 = smul.addr %s27, 8
          %s1435 = scalar_lea.hbm %s13, %s1434
          %s1437 = sshll.u32 %s1428, 4
          %s1438 = int_to_ptr.vmem [resolvable:$true] %s1437
          %s1439 = sshll.u32 %s1435, 4
          %s1440 = int_to_ptr.hbm [resolvable:$true] %s1439
          %1442 = dma.vmem_to_hbm [thread:$0]  %s1438, 128, %s1440, %s1425
        $region76: #{tpu_custom_call.1} parent=71 // pred_fallthru
          _
      $region72: #{tpu_custom_call.1} parent=5 // pred_fallthru
        _
      %p1443 = scmp.le.s32.totalorder 2, %s22
      // Predicated region
      $region77: #{tpu_custom_call.1} parent=5 // pred_check
        %p1444 = pneg %p1443
      $region78: #{tpu_custom_call.1} parent=5 // pred_check_branch
        %1446 = sbr.rel (%p1444) target = $region80
      $region79: #{tpu_custom_call.1} parent=5 // pred_region
        %s1447 = ssub.s32 %s22, 2
        // Predicated region
        $region81: #{tpu_custom_call.1} parent=79 // pred_check
          %p1448 = pneg %p329
        $region82: #{tpu_custom_call.1} parent=79 // pred_check_branch
          %1450 = sbr.rel (%p1448) target = $region84
        $region83: #{tpu_custom_call.1} parent=79 // pred_region
          %s1451 = sand.u32 %s314, 1
          %s1452 = scalar_lea.sflag [#allocation3], %s1451
          %s1453 = sand.u32 %s314, 1
          %s1454 = smul.addr %s1453, 8
          %s1455 = scalar_lea.vmem [#allocation2], %s1454
          %1457 = dma.done %s1452, 128
        $region84: #{tpu_custom_call.1} parent=79 // pred_fallthru
          _
      $region80: #{tpu_custom_call.1} parent=5 // pred_fallthru
        _
    $region6: #{tpu_custom_call.1} parent=1 // loop_footer
      %s26 = sadd.s32 1, %s22
    $region7: #{tpu_custom_call.1} parent=1 // loop_footer_branch
      %21 = sbr.rel target = $region3
    $region8: #{tpu_custom_call.1} parent=1 // loop_exit
      _
    %1458 = vsyncpa [#allocation3], 1
    %s1459 = scalar_lea.sflag [#allocation3], 1
    %1460 = vsyncpa %s1459, 1

// kernel: tpu_custom_call.1
$region0: #{tpu_custom_call.1}
  #allocation0 [shape = 'u32[]', space=smem, size = 0x4, offset = 0x4, fixed_abs, tag = 'smem constant byte address 0x4 - core index']
  #allocation1 [shape = 'u32[72,128]{1,0:T(1,128)}', space=vmem, size = 0x9000, scoped, tag = 'internal scratch']
  %s0 = inlined_call_operand.vmem [shape: f32[2,8,32], index: 0, kind: input, shape index: {}]
  %s1 = inlined_call_operand.vmem [shape: f32[1,32], index: 1, kind: input, shape index: {}]
  %s2 = inlined_call_operand.vmem [shape: f32[1,32], index: 2, kind: input, shape index: {}]
  %s3 = inlined_call_operand.vmem [shape: bf16[32,96], index: 3, kind: input, shape index: {}]
  %s4 = inlined_call_operand.vmem [shape: f32[1,96], index: 4, kind: input, shape index: {}]
  %s5 = inlined_call_operand.vmem [shape: bf16[32,32], index: 5, kind: input, shape index: {}]
  %s6 = inlined_call_operand.vmem [shape: f32[1,32], index: 6, kind: input, shape index: {}]
  %s7 = inlined_call_operand.vmem [shape: f32[1,32], index: 7, kind: input, shape index: {}]
  %s8 = inlined_call_operand.vmem [shape: f32[1,32], index: 8, kind: input, shape index: {}]
  %s9 = inlined_call_operand.vmem [shape: bf16[32,128], index: 9, kind: input, shape index: {}]
  %s10 = inlined_call_operand.vmem [shape: f32[1,128], index: 10, kind: input, shape index: {}]
  %s11 = inlined_call_operand.vmem [shape: bf16[128,32], index: 11, kind: input, shape index: {}]
  %s12 = inlined_call_operand.vmem [shape: f32[1,32], index: 12, kind: input, shape index: {}]
  %s13 = inlined_call_operand.hbm [shape: f32[2,8,32], index: 13, kind: output, shape index: {}]
  %s14 = sld [smem:[#allocation0]]
  $region85: #{tpu_custom_call.1} parent=0
    _
  %s16 = ssub.s32 1, %s14
  %s17 = scalar_select 0, %s16, %s14
  $region1: #{tpu_custom_call.1} parent=0
    #allocation2 [shape = 'u8[8192]{0}', space=vmem, size = 0x2000, scoped, tag = 'output window, operand 0']
    #allocation3 [shape = 's32[2]{0}', space=sflag, size = 0x8, scoped, tag = 'scoped memory for tpu_custom_call.1']
    %18 = vsyncpa [#allocation3], 0
    %s19 = scalar_lea.sflag [#allocation3], 1
    %20 = vsyncpa %s19, 0
    loop: start=0, step=1, limit=4
    $region2: #{tpu_custom_call.1} parent=1 // loop_pre_header
      _
    $region3: #{tpu_custom_call.1} parent=1 // loop_header
      %s22 = sphi 0, %s26
      %p23 = scmp.ge.s32.totalorder %s22, 4
      %s32 = sphi 0, %s34
      %s35 = sphi 0, %s32
      %s36 = sphi 0, %s35
      %s52 = sphi 0, %s36
      %s56 = sphi 0, %s56
      %s58 = sphi 0, %s56
      %s59 = sphi 0, %s58
      %s73 = sphi 0, %s59
      %s77 = sphi 0, %s77
      %s79 = sphi 0, %s77
      %s80 = sphi 0, %s79
      %s94 = sphi 0, %s80
      %s98 = sphi 0, %s98
      %s100 = sphi 0, %s98
      %s101 = sphi 0, %s100
      %s115 = sphi 0, %s101
      %s119 = sphi 0, %s119
      %s121 = sphi 0, %s119
      %s122 = sphi 0, %s121
      %s136 = sphi 0, %s122
      %s140 = sphi 0, %s140
      %s142 = sphi 0, %s140
      %s143 = sphi 0, %s142
      %s157 = sphi 0, %s143
      %s161 = sphi 0, %s161
      %s163 = sphi 0, %s161
      %s164 = sphi 0, %s163
      %s178 = sphi 0, %s164
      %s182 = sphi 0, %s182
      %s184 = sphi 0, %s182
      %s185 = sphi 0, %s184
      %s199 = sphi 0, %s185
      %s203 = sphi 0, %s203
      %s205 = sphi 0, %s203
      %s206 = sphi 0, %s205
      %s220 = sphi 0, %s206
      %s224 = sphi 0, %s224
      %s226 = sphi 0, %s224
      %s227 = sphi 0, %s226
      %s241 = sphi 0, %s227
      %s245 = sphi 0, %s245
      %s247 = sphi 0, %s245
      %s248 = sphi 0, %s247
      %s262 = sphi 0, %s248
      %s266 = sphi 0, %s266
      %s268 = sphi 0, %s266
      %s269 = sphi 0, %s268
      %s283 = sphi 0, %s269
      %s287 = sphi 0, %s287
      %s289 = sphi 0, %s287
      %s290 = sphi 0, %s289
      %s304 = sphi 0, %s290
      %s310 = sphi 0, %s312
      %s313 = sphi 0, %s310
      %s314 = sphi 0, %s313
      %s330 = sphi 0, %s314
    $region4: #{tpu_custom_call.1} parent=1 // loop_header_branch
      %25 = sbr.rel (%p23) target = $region8
    $region5: #{tpu_custom_call.1} parent=1 // loop_body
      %s27 = ssub.s32 %s22, 1
      %s28 = ssub.s32 %s22, 2
      %s29 = sadd.s32 %s22, 1
      %s30 = ssub.s32 %s22, %s29
      %p31 = scmp.eq.s32.totalorder %s30, 0
      %s33 = sadd.s32 %s32, 1
      %s34 = scalar_select %p31, %s32, %s33
      %p37 = pneg %p31
      %p38 = scmp.eq.s32.totalorder %s22, 1
      %p39 = por %p37, %p38
      %p40 = scmp.ne.s32.totalorder %s32, %s35
      %p41 = scmp.eq.s32.totalorder %s22, 0
      %p42 = por %p40, %p41
      %p43 = scmp.ne.s32.totalorder %s32, %s35
      %p44 = scmp.eq.s32.totalorder %s27, 1
      %p45 = por %p43, %p44
      %p46 = scmp.ne.s32.totalorder %s35, %s36
      %p47 = scmp.eq.s32.totalorder %s27, 0
      %p48 = por %p46, %p47
      %p49 = scmp.ne.s32.totalorder %s35, %s36
      %p50 = scmp.eq.s32.totalorder %s28, 1
      %p51 = por %p49, %p50
      %p53 = scmp.ne.s32.totalorder %s36, %s52
      %p54 = scmp.eq.s32.totalorder %s28, 0
      %p55 = por %p53, %p54
      %s57 = sadd.s32 %s56, 1
      %p60 = scmp.eq.s32.totalorder %s22, 1
      %p61 = scmp.ne.s32.totalorder %s56, %s58
      %p62 = scmp.eq.s32.totalorder %s22, 0
      %p63 = por %p61, %p62
      %p64 = scmp.ne.s32.totalorder %s56, %s58
      %p65 = scmp.eq.s32.totalorder %s27, 1
      %p66 = por %p64, %p65
      %p67 = scmp.ne.s32.totalorder %s58, %s59
      %p68 = scmp.eq.s32.totalorder %s27, 0
      %p69 = por %p67, %p68
      %p70 = scmp.ne.s32.totalorder %s58, %s59
      %p71 = scmp.eq.s32.totalorder %s28, 1
      %p72 = por %p70, %p71
      %p74 = scmp.ne.s32.totalorder %s59, %s73
      %p75 = scmp.eq.s32.totalorder %s28, 0
      %p76 = por %p74, %p75
      %s78 = sadd.s32 %s77, 1
      %p81 = scmp.eq.s32.totalorder %s22, 1
      %p82 = scmp.ne.s32.totalorder %s77, %s79
      %p83 = scmp.eq.s32.totalorder %s22, 0
      %p84 = por %p82, %p83
      %p85 = scmp.ne.s32.totalorder %s77, %s79
      %p86 = scmp.eq.s32.totalorder %s27, 1
      %p87 = por %p85, %p86
      %p88 = scmp.ne.s32.totalorder %s79, %s80
      %p89 = scmp.eq.s32.totalorder %s27, 0
      %p90 = por %p88, %p89
      %p91 = scmp.ne.s32.totalorder %s79, %s80
      %p92 = scmp.eq.s32.totalorder %s28, 1
      %p93 = por %p91, %p92
      %p95 = scmp.ne.s32.totalorder %s80, %s94
      %p96 = scmp.eq.s32.totalorder %s28, 0
      %p97 = por %p95, %p96
      %s99 = sadd.s32 %s98, 1
      %p102 = scmp.eq.s32.totalorder %s22, 1
      %p103 = scmp.ne.s32.totalorder %s98, %s100
      %p104 = scmp.eq.s32.totalorder %s22, 0
      %p105 = por %p103, %p104
      %p106 = scmp.ne.s32.totalorder %s98, %s100
      %p107 = scmp.eq.s32.totalorder %s27, 1
      %p108 = por %p106, %p107
      %p109 = scmp.ne.s32.totalorder %s100, %s101
      %p110 = scmp.eq.s32.totalorder %s27, 0
      %p111 = por %p109, %p110
      %p112 = scmp.ne.s32.totalorder %s100, %s101
      %p113 = scmp.eq.s32.totalorder %s28, 1
      %p114 = por %p112, %p113
      %p116 = scmp.ne.s32.totalorder %s101, %s115
      %p117 = scmp.eq.s32.totalorder %s28, 0
      %p118 = por %p116, %p117
      %s120 = sadd.s32 %s119, 1
      %p123 = scmp.eq.s32.totalorder %s22, 1
      %p124 = scmp.ne.s32.totalorder %s119, %s121
      %p125 = scmp.eq.s32.totalorder %s22, 0
      %p126 = por %p124, %p125
      %p127 = scmp.ne.s32.totalorder %s119, %s121
      %p128 = scmp.eq.s32.totalorder %s27, 1
      %p129 = por %p127, %p128
      %p130 = scmp.ne.s32.totalorder %s121, %s122
      %p131 = scmp.eq.s32.totalorder %s27, 0
      %p132 = por %p130, %p131
      %p133 = scmp.ne.s32.totalorder %s121, %s122
      %p134 = scmp.eq.s32.totalorder %s28, 1
      %p135 = por %p133, %p134
      %p137 = scmp.ne.s32.totalorder %s122, %s136
      %p138 = scmp.eq.s32.totalorder %s28, 0
      %p139 = por %p137, %p138
      %s141 = sadd.s32 %s140, 1
      %p144 = scmp.eq.s32.totalorder %s22, 1
      %p145 = scmp.ne.s32.totalorder %s140, %s142
      %p146 = scmp.eq.s32.totalorder %s22, 0
      %p147 = por %p145, %p146
      %p148 = scmp.ne.s32.totalorder %s140, %s142
      %p149 = scmp.eq.s32.totalorder %s27, 1
      %p150 = por %p148, %p149
      %p151 = scmp.ne.s32.totalorder %s142, %s143
      %p152 = scmp.eq.s32.totalorder %s27, 0
      %p153 = por %p151, %p152
      %p154 = scmp.ne.s32.totalorder %s142, %s143
      %p155 = scmp.eq.s32.totalorder %s28, 1
      %p156 = por %p154, %p155
      %p158 = scmp.ne.s32.totalorder %s143, %s157
      %p159 = scmp.eq.s32.totalorder %s28, 0
      %p160 = por %p158, %p159
      %s162 = sadd.s32 %s161, 1
      %p165 = scmp.eq.s32.totalorder %s22, 1
      %p166 = scmp.ne.s32.totalorder %s161, %s163
      %p167 = scmp.eq.s32.totalorder %s22, 0
      %p168 = por %p166, %p167
      %p169 = scmp.ne.s32.totalorder %s161, %s163
      %p170 = scmp.eq.s32.totalorder %s27, 1
      %p171 = por %p169, %p170
      %p172 = scmp.ne.s32.totalorder %s163, %s164
      %p173 = scmp.eq.s32.totalorder %s27, 0
      %p174 = por %p172, %p173
      %p175 = scmp.ne.s32.totalorder %s163, %s164
      %p176 = scmp.eq.s32.totalorder %s28, 1
      %p177 = por %p175, %p176
      %p179 = scmp.ne.s32.totalorder %s164, %s178
      %p180 = scmp.eq.s32.totalorder %s28, 0
      %p181 = por %p179, %p180
      %s183 = sadd.s32 %s182, 1
      %p186 = scmp.eq.s32.totalorder %s22, 1
      %p187 = scmp.ne.s32.totalorder %s182, %s184
      %p188 = scmp.eq.s32.totalorder %s22, 0
      %p189 = por %p187, %p188
      %p190 = scmp.ne.s32.totalorder %s182, %s184
      %p191 = scmp.eq.s32.totalorder %s27, 1
      %p192 = por %p190, %p191
      %p193 = scmp.ne.s32.totalorder %s184, %s185
      %p194 = scmp.eq.s32.totalorder %s27, 0
      %p195 = por %p193, %p194
      %p196 = scmp.ne.s32.totalorder %s184, %s185
      %p197 = scmp.eq.s32.totalorder %s28, 1
      %p198 = por %p196, %p197
      %p200 = scmp.ne.s32.totalorder %s185, %s199
      %p201 = scmp.eq.s32.totalorder %s28, 0
      %p202 = por %p200, %p201
      %s204 = sadd.s32 %s203, 1
      %p207 = scmp.eq.s32.totalorder %s22, 1
      %p208 = scmp.ne.s32.totalorder %s203, %s205
      %p209 = scmp.eq.s32.totalorder %s22, 0
      %p210 = por %p208, %p209
      %p211 = scmp.ne.s32.totalorder %s203, %s205
      %p212 = scmp.eq.s32.totalorder %s27, 1
      %p213 = por %p211, %p212
      %p214 = scmp.ne.s32.totalorder %s205, %s206
      %p215 = scmp.eq.s32.totalorder %s27, 0
      %p216 = por %p214, %p215
      %p217 = scmp.ne.s32.totalorder %s205, %s206
      %p218 = scmp.eq.s32.totalorder %s28, 1
      %p219 = por %p217, %p218
      %p221 = scmp.ne.s32.totalorder %s206, %s220
      %p222 = scmp.eq.s32.totalorder %s28, 0
      %p223 = por %p221, %p222
      %s225 = sadd.s32 %s224, 1
      %p228 = scmp.eq.s32.totalorder %s22, 1
      %p229 = scmp.ne.s32.totalorder %s224, %s226
      %p230 = scmp.eq.s32.totalorder %s22, 0
      %p231 = por %p229, %p230
      %p232 = scmp.ne.s32.totalorder %s224, %s226
      %p233 = scmp.eq.s32.totalorder %s27, 1
      %p234 = por %p232, %p233
      %p235 = scmp.ne.s32.totalorder %s226, %s227
      %p236 = scmp.eq.s32.totalorder %s27, 0
      %p237 = por %p235, %p236
      %p238 = scmp.ne.s32.totalorder %s226, %s227
      %p239 = scmp.eq.s32.totalorder %s28, 1
      %p240 = por %p238, %p239
      %p242 = scmp.ne.s32.totalorder %s227, %s241
      %p243 = scmp.eq.s32.totalorder %s28, 0
      %p244 = por %p242, %p243
      %s246 = sadd.s32 %s245, 1
      %p249 = scmp.eq.s32.totalorder %s22, 1
      %p250 = scmp.ne.s32.totalorder %s245, %s247
      %p251 = scmp.eq.s32.totalorder %s22, 0
      %p252 = por %p250, %p251
      %p253 = scmp.ne.s32.totalorder %s245, %s247
      %p254 = scmp.eq.s32.totalorder %s27, 1
      %p255 = por %p253, %p254
      %p256 = scmp.ne.s32.totalorder %s247, %s248
      %p257 = scmp.eq.s32.totalorder %s27, 0
      %p258 = por %p256, %p257
      %p259 = scmp.ne.s32.totalorder %s247, %s248
      %p260 = scmp.eq.s32.totalorder %s28, 1
      %p261 = por %p259, %p260
      %p263 = scmp.ne.s32.totalorder %s248, %s262
      %p264 = scmp.eq.s32.totalorder %s28, 0
      %p265 = por %p263, %p264
      %s267 = sadd.s32 %s266, 1
      %p270 = scmp.eq.s32.totalorder %s22, 1
      %p271 = scmp.ne.s32.totalorder %s266, %s268
      %p272 = scmp.eq.s32.totalorder %s22, 0
      %p273 = por %p271, %p272
      %p274 = scmp.ne.s32.totalorder %s266, %s268
      %p275 = scmp.eq.s32.totalorder %s27, 1
      %p276 = por %p274, %p275
      %p277 = scmp.ne.s32.totalorder %s268, %s269
      %p278 = scmp.eq.s32.totalorder %s27, 0
      %p279 = por %p277, %p278
      %p280 = scmp.ne.s32.totalorder %s268, %s269
      %p281 = scmp.eq.s32.totalorder %s28, 1
      %p282 = por %p280, %p281
      %p284 = scmp.ne.s32.totalorder %s269, %s283
      %p285 = scmp.eq.s32.totalorder %s28, 0
      %p286 = por %p284, %p285
      %s288 = sadd.s32 %s287, 1
      %p291 = scmp.eq.s32.totalorder %s22, 1
      %p292 = scmp.ne.s32.totalorder %s287, %s289
      %p293 = scmp.eq.s32.totalorder %s22, 0
      %p294 = por %p292, %p293
      %p295 = scmp.ne.s32.totalorder %s287, %s289
      %p296 = scmp.eq.s32.totalorder %s27, 1
      %p297 = por %p295, %p296
      %p298 = scmp.ne.s32.totalorder %s289, %s290
      %p299 = scmp.eq.s32.totalorder %s27, 0
      %p300 = por %p298, %p299
      %p301 = scmp.ne.s32.totalorder %s289, %s290
      %p302 = scmp.eq.s32.totalorder %s28, 1
      %p303 = por %p301, %p302
      %p305 = scmp.ne.s32.totalorder %s290, %s304
      %p306 = scmp.eq.s32.totalorder %s28, 0
      %p307 = por %p305, %p306
      %s308 = ssub.s32 %s22, %s29
      %p309 = scmp.eq.s32.totalorder %s308, 0
      %s311 = sadd.s32 %s310, 1
      %s312 = scalar_select %p309, %s310, %s311
      %p315 = pneg %p309
      %p316 = scmp.eq.s32.totalorder %s22, 1
      %p317 = por %p315, %p316
      %p318 = scmp.ne.s32.totalorder %s310, %s313
      %p319 = scmp.eq.s32.totalorder %s22, 0
      %p320 = por %p318, %p319
      %p321 = scmp.ne.s32.totalorder %s310, %s313
      %p322 = scmp.eq.s32.totalorder %s27, 1
      %p323 = por %p321, %p322
      %p324 = scmp.ne.s32.totalorder %s313, %s314
      %p325 = scmp.eq.s32.totalorder %s27, 0
      %p326 = por %p324, %p325
      %p327 = scmp.ne.s32.totalorder %s313, %s314
      %p328 = scmp.eq.s32.totalorder %s28, 1
      %p329 = por %p327, %p328
      %p331 = scmp.ne.s32.totalorder %s314, %s330
      %p332 = scmp.eq.s32.totalorder %s28, 0
      %p333 = por %p331, %p332
      %p334 = scmp.le.s32.totalorder 1, %s22
      %p335 = scmp.lt.s32.totalorder %s22, 3
      %p336 = pnand %p334, %p335
      %p337 = pneg %p336
      // Predicated region
      $region9: #{tpu_custom_call.1} parent=5 // pred_check
        _
      $region10: #{tpu_custom_call.1} parent=5 // pred_check_branch
        %339 = sbr.rel (%p336) target = $region12
      $region11: #{tpu_custom_call.1} parent=5 // pred_region
        %s340 = ssub.s32 %s22, 1
        // Predicated region
        $region13: #{tpu_custom_call.1} parent=11 // pred_check
          %p341 = pneg %p69
        $region14: #{tpu_custom_call.1} parent=11 // pred_check_branch
          %343 = sbr.rel (%p341) target = $region16
        $region15: #{tpu_custom_call.1} parent=11 // pred_region
          _
        $region16: #{tpu_custom_call.1} parent=11 // pred_fallthru
          _
        // Predicated region
        $region17: #{tpu_custom_call.1} parent=11 // pred_check
          %p344 = pneg %p90
        $region18: #{tpu_custom_call.1} parent=11 // pred_check_branch
          %346 = sbr.rel (%p344) target = $region20
        $region19: #{tpu_custom_call.1} parent=11 // pred_region
          _
        $region20: #{tpu_custom_call.1} parent=11 // pred_fallthru
          _
        // Predicated region
        $region21: #{tpu_custom_call.1} parent=11 // pred_check
          %p347 = pneg %p111
        $region22: #{tpu_custom_call.1} parent=11 // pred_check_branch
          %349 = sbr.rel (%p347) target = $region24
        $region23: #{tpu_custom_call.1} parent=11 // pred_region
          _
        $region24: #{tpu_custom_call.1} parent=11 // pred_fallthru
          _
        // Predicated region
        $region25: #{tpu_custom_call.1} parent=11 // pred_check
          %p350 = pneg %p132
        $region26: #{tpu_custom_call.1} parent=11 // pred_check_branch
          %352 = sbr.rel (%p350) target = $region28
        $region27: #{tpu_custom_call.1} parent=11 // pred_region
          _
        $region28: #{tpu_custom_call.1} parent=11 // pred_fallthru
          _
        // Predicated region
        $region29: #{tpu_custom_call.1} parent=11 // pred_check
          %p353 = pneg %p153
        $region30: #{tpu_custom_call.1} parent=11 // pred_check_branch
          %355 = sbr.rel (%p353) target = $region32
        $region31: #{tpu_custom_call.1} parent=11 // pred_region
          _
        $region32: #{tpu_custom_call.1} parent=11 // pred_fallthru
          _
        // Predicated region
        $region33: #{tpu_custom_call.1} parent=11 // pred_check
          %p356 = pneg %p174
        $region34: #{tpu_custom_call.1} parent=11 // pred_check_branch
          %358 = sbr.rel (%p356) target = $region36
        $region35: #{tpu_custom_call.1} parent=11 // pred_region
          _
        $region36: #{tpu_custom_call.1} parent=11 // pred_fallthru
          _
        // Predicated region
        $region37: #{tpu_custom_call.1} parent=11 // pred_check
          %p359 = pneg %p195
        $region38: #{tpu_custom_call.1} parent=11 // pred_check_branch
          %361 = sbr.rel (%p359) target = $region40
        $region39: #{tpu_custom_call.1} parent=11 // pred_region
          _
        $region40: #{tpu_custom_call.1} parent=11 // pred_fallthru
          _
        // Predicated region
        $region41: #{tpu_custom_call.1} parent=11 // pred_check
          %p362 = pneg %p216
        $region42: #{tpu_custom_call.1} parent=11 // pred_check_branch
          %364 = sbr.rel (%p362) target = $region44
        $region43: #{tpu_custom_call.1} parent=11 // pred_region
          _
        $region44: #{tpu_custom_call.1} parent=11 // pred_fallthru
          _
        // Predicated region
        $region45: #{tpu_custom_call.1} parent=11 // pred_check
          %p365 = pneg %p237
        $region46: #{tpu_custom_call.1} parent=11 // pred_check_branch
          %367 = sbr.rel (%p365) target = $region48
        $region47: #{tpu_custom_call.1} parent=11 // pred_region
          _
        $region48: #{tpu_custom_call.1} parent=11 // pred_fallthru
          _
        // Predicated region
        $region49: #{tpu_custom_call.1} parent=11 // pred_check
          %p368 = pneg %p258
        $region50: #{tpu_custom_call.1} parent=11 // pred_check_branch
          %370 = sbr.rel (%p368) target = $region52
        $region51: #{tpu_custom_call.1} parent=11 // pred_region
          _
        $region52: #{tpu_custom_call.1} parent=11 // pred_fallthru
          _
        // Predicated region
        $region53: #{tpu_custom_call.1} parent=11 // pred_check
          %p371 = pneg %p279
        $region54: #{tpu_custom_call.1} parent=11 // pred_check_branch
          %373 = sbr.rel (%p371) target = $region56
        $region55: #{tpu_custom_call.1} parent=11 // pred_region
          _
        $region56: #{tpu_custom_call.1} parent=11 // pred_fallthru
          _
        // Predicated region
        $region57: #{tpu_custom_call.1} parent=11 // pred_check
          %p374 = pneg %p300
        $region58: #{tpu_custom_call.1} parent=11 // pred_check_branch
          %376 = sbr.rel (%p374) target = $region60
        $region59: #{tpu_custom_call.1} parent=11 // pred_region
          _
        $region60: #{tpu_custom_call.1} parent=11 // pred_fallthru
          _
      $region12: #{tpu_custom_call.1} parent=5 // pred_fallthru
        _
      %p377 = scmp.lt.s32.totalorder %s22, 2
      // Predicated region
      $region61: #{tpu_custom_call.1} parent=5 // pred_check
        %p378 = pneg %p377
      $region62: #{tpu_custom_call.1} parent=5 // pred_check_branch
        %380 = sbr.rel (%p378) target = $region64
      $region63: #{tpu_custom_call.1} parent=5 // pred_region
        // Predicated region
        $region65: #{tpu_custom_call.1} parent=63 // pred_check
          %p381 = pneg %p42
        $region66: #{tpu_custom_call.1} parent=63 // pred_check_branch
          %383 = sbr.rel (%p381) target = $region68
        $region67: #{tpu_custom_call.1} parent=63 // pred_region
          %p384 = scmp.lt.s32.totalorder %s22, 1
          %s385 = scalar_select %p384, %s22, 1
          %s386 = smul.addr %s385, 8
          %s387 = scalar_lea.vmem %s0, %s386
        $region68: #{tpu_custom_call.1} parent=63 // pred_fallthru
          _
      $region64: #{tpu_custom_call.1} parent=5 // pred_fallthru
        _
      %p388 = scmp.le.s32.totalorder 1, %s22
      %p389 = scmp.lt.s32.totalorder %s22, 3
      %p390 = pnand %p388, %p389
      %p391 = pneg %p390
      // Predicated region
      $region69: #{tpu_custom_call.1} parent=5 // pred_check
        _
      $region70: #{tpu_custom_call.1} parent=5 // pred_check_branch
        %393 = sbr.rel (%p390) target = $region72
      $region71: #{tpu_custom_call.1} parent=5 // pred_region
        %s394 = ssub.s32 %s22, 1
        %p395 = scmp.lt.s32.totalorder %s27, 1
        %s396 = scalar_select %p395, %s27, 1
        %s397 = smul.addr %s396, 8
        %s398 = scalar_lea.vmem %s0, %s397
        %p399 = pneg %p48
        %p400 = pneg %p45
        %p401 = pneg %p69
        %p402 = pneg %p66
        %p403 = pneg %p90
        %p404 = pneg %p87
        %p405 = pneg %p111
        %p406 = pneg %p108
        %p407 = pneg %p132
        %p408 = pneg %p129
        %p409 = pneg %p153
        %p410 = pneg %p150
        %p411 = pneg %p174
        %p412 = pneg %p171
        %p413 = pneg %p195
        %p414 = pneg %p192
        %p415 = pneg %p216
        %p416 = pneg %p213
        %p417 = pneg %p237
        %p418 = pneg %p234
        %p419 = pneg %p258
        %p420 = pneg %p255
        %p421 = pneg %p279
        %p422 = pneg %p276
        %p423 = pneg %p300
        %p424 = pneg %p297
        %p425 = pneg %p326
        %p426 = pneg %p323
        %s427 = sand.u32 %s313, 1
        %s428 = scalar_lea.sflag [#allocation3], %s427
        %s429 = sand.u32 %s313, 1
        %s430 = smul.addr %s429, 8
        %s431 = scalar_lea.vmem [#allocation2], %s430
        %p432 = scmp.lt.s32.totalorder %s27, 1
        %s433 = scalar_select %p432, %s27, 1
        %s434 = smul.addr %s433, 8
        %s435 = scalar_lea.vmem %s0, %s434
        %v437 = vld [vmem:[%s435] sm:$0xff]
        %v438 = vld [vmem:[%s1] sm:$0x1]
        %v439 = vld [vmem:[%s2] sm:$0x1]
        %vm440 = vcmask 261120
        %v441 = vsel %vm440, %v437, 0.0
        %442 = vadd.xlane.f32.xlu0 %v441
        %v443 = vpop.xlane.xlu0 %442
        %v444 = vrcp.pop 32.0
        %v445 = vmul.f32 32.0, %v444
        %v446 = vsub.f32 1.0, %v445
        %v447 = vmul.f32 %v444, %v446
        %v448 = vadd.f32 %v444, %v447
        %vm449 = vweird.f32 %v444
        %v450 = vsel %vm449, %v444, %v448
        %v451 = vmul.f32 %v443, %v450
        %v452 = vsub.f32 %v437, %v451
        %v453 = vmul.f32 %v452, %v452
        %v454 = vsel %vm440, %v453, 0.0
        %455 = vadd.xlane.f32.xlu0 %v454
        %v456 = vpop.xlane.xlu0 %455
        %v457 = vmul.f32 %v456, %v450
        %v458 = vadd.f32 %v457, 1e-05
        %v459 = vrsqrt.pop %v458
        %v460 = vmul.f32 %v459, %v458
        %v461 = vmul.f32 %v460, %v459
        %v462 = vmul.f32 0.5, %v461
        %v463 = vsub.f32 1.5, %v462
        %v464 = vmul.f32 %v459, %v463
        %vm465 = vweird.f32 %v458
        %vm466 = vweird.f32 %v459
        %vm467 = vmor %vm465, %vm466
        %v468 = vsel %vm467, %v459, %v464
        %v469 = vmul.f32 %v452, %v468
        %v471 = vperm.slane %v438, 0
        %v473 = vmul.f32 %v469, %v471
        %v475 = vperm.slane %v439, 0
        %v477 = vadd.f32 %v473, %v475
        %v478 = vpack.c.bf16 %v477, %v477
        %v479 = vld [vmem:[%s3] sm:$0xf]
        %v480 = vld [vmem:[%s3 + $0x4] sm:$0xf]
        %v481 = vld [vmem:[%s3 + $0x8] sm:$0xf]
        %v482 = vld [vmem:[%s3 + $0xc] sm:$0xf]
        %v483 = vld [vmem:[%s4] sm:$0x1]
        %v485 = vperm.slane %v483, 0
        %v491 = vunpack.c.l.b16 %v479
        %v492 = vunpack.c.l.b16 %v480
        %v493 = vunpack.c.l.b16 %v481
        %v494 = vunpack.c.l.b16 %v482
        %v495 = vpack.c.b16 %v492, %v491
        %v496 = vpack.c.b16 %v494, %v493
        %v500 = vsel %vm440, %v478, 0
        %502 = vmatpush.bf16.msra.mxu0 0
        %503 = vmatpush.bf16.msra.mxu0 0
        %504 = vmatpush.bf16.msra.mxu0 0
        %505 = vmatpush.bf16.msra.mxu0 0
        %506 = vmatpush.bf16.msra.mxu0 0
        %507 = vmatpush.bf16.msra.mxu0 0
        %508 = vmatpush.bf16.msra.mxu0 %v496
        %509 = vmatpush.bf16.msra.mxu0 %v495
        %510 = vmatmul.bf16.gmra.mxu0 %v500
        %v511 = vpop.f32.mrf.mxu0
        %v512 = vadd.f32 %v485, %v511
        %v513 = vpop.f32.mrf.mxu0
        %514 = vdwg.mxu0
        %516 = vrot.lane.b32.xlu0 %v512, 120
        %v517 = vpop.permute.xlu0 %516
        %519 = vrot.lane.b32.xlu0 %v512, 112
        %v520 = vpop.permute.xlu0 %519
        %522 = vrot.lane.b32.xlu0 %v512, 104
        %v523 = vpop.permute.xlu0 %522
        %v525 = vrot.slane %v520, 4
        %vm526 = vcmask 1047556
        %v527 = vsel %vm526, %v525, %v512
        %v528 = vrot.slane %v512, 4
        %v529 = vsel %vm526, %v520, %v528
        %v531 = vunpack.c.l.s4 1983009808
        %v532 = vunpack.c.0.s8 %v531
        %v533 = vperm.slane %v527, %v532
        %v535 = vunpack.c.l.s4 1983009808
        %v536 = vunpack.c.0.s8 %v535
        %v537 = vperm.slane %v529, %v536
        %v538 = vrot.slane %v523, 4
        %v539 = vsel %vm526, %v538, %v517
        %v540 = vrot.slane %v517, 4
        %v541 = vsel %vm526, %v523, %v540
        %v543 = vunpack.c.l.s4 1983009808
        %v544 = vunpack.c.0.s8 %v543
        %v545 = vperm.slane %v539, %v544
        %v547 = vunpack.c.l.s4 1983009808
        %v548 = vunpack.c.0.s8 %v547
        %v549 = vperm.slane %v541, %v548
        %v550 = vrot.slane %v545, 4
        %v551 = vsel %vm526, %v550, %v533
        %v552 = vrot.slane %v533, 4
        %v553 = vsel %vm526, %v545, %v552
        %v555 = vunpack.c.l.s4 1934713408
        %v556 = vunpack.c.0.s8 %v555
        %v557 = vperm.slane %v551, %v556
        %v559 = vunpack.c.l.s4 1934713408
        %v560 = vunpack.c.0.s8 %v559
        %v561 = vperm.slane %v553, %v560
        %v562 = vrot.slane %v549, 4
        %v563 = vsel %vm526, %v562, %v537
        %v564 = vrot.slane %v537, 4
        %v565 = vsel %vm526, %v549, %v564
        %v567 = vunpack.c.l.s4 1934713408
        %v568 = vunpack.c.0.s8 %v567
        %v569 = vperm.slane %v563, %v568
        %v571 = vunpack.c.l.s4 1934713408
        %v572 = vunpack.c.0.s8 %v571
        %v573 = vperm.slane %v565, %v572
        %v574 = vrot.slane %v557, 4
        %v575 = vsel %vm526, 0.0, %v574
        %v576 = vrot.slane %v561, 4
        %v577 = vsel %vm526, 0.0, %v576
        %v578 = vrot.slane %v569, 4
        %v579 = vsel %vm526, 0.0, %v578
        %v580 = vrot.slane %v573, 4
        %v581 = vsel %vm526, 0.0, %v580
        %v582 = vsel %vm526, %v576, %v557
        %v584 = vunpack.c.l.s4 1983009808
        %v585 = vunpack.c.0.s8 %v584
        %v586 = vperm.slane %v582, %v585
        %v587 = vrot.slane %v577, 4
        %v588 = vsel %vm526, %v587, %v575
        %v590 = vunpack.c.l.s4 1983009808
        %v591 = vunpack.c.0.s8 %v590
        %v592 = vperm.slane %v588, %v591
        %v593 = vsel %vm526, %v580, %v569
        %v595 = vunpack.c.l.s4 1983009808
        %v596 = vunpack.c.0.s8 %v595
        %v597 = vperm.slane %v593, %v596
        %v598 = vrot.slane %v581, 4
        %v599 = vsel %vm526, %v598, %v579
        %v601 = vunpack.c.l.s4 1983009808
        %v602 = vunpack.c.0.s8 %v601
        %v603 = vperm.slane %v599, %v602
        %v604 = vrot.slane %v592, 4
        %v605 = vsel %vm526, %v604, %v586
        %v606 = vrot.slane %v586, 4
        %v607 = vsel %vm526, %v592, %v606
        %v609 = vunpack.c.l.s4 1934713408
        %v610 = vunpack.c.0.s8 %v609
        %v611 = vperm.slane %v605, %v610
        %v613 = vunpack.c.l.s4 1934713408
        %v614 = vunpack.c.0.s8 %v613
        %v615 = vperm.slane %v607, %v614
        %v616 = vrot.slane %v603, 4
        %v617 = vsel %vm526, %v616, %v597
        %v618 = vrot.slane %v597, 4
        %v619 = vsel %vm526, %v603, %v618
        %v621 = vunpack.c.l.s4 1934713408
        %v622 = vunpack.c.0.s8 %v621
        %v623 = vperm.slane %v617, %v622
        %v625 = vunpack.c.l.s4 1934713408
        %v626 = vunpack.c.0.s8 %v625
        %v627 = vperm.slane %v619, %v626
        %v628 = vrot.slane %v623, 4
        %v629 = vsel %vm526, %v628, %v611
        %v630 = vrot.slane %v611, 4
        %v631 = vsel %vm526, %v623, %v630
        %v632 = vrot.slane %v627, 4
        %v633 = vsel %vm526, %v632, %v615
        %v634 = vrot.slane %v615, 4
        %v635 = vsel %vm526, %v627, %v634
        %v636 = vpack.c.bf16 %v629, %v629
        %v637 = vpack.c.bf16 %v631, %v631
        %v638 = vpack.c.bf16 %v633, %v633
        %v639 = vpack.c.bf16 %v635, %v635
        %640 = vrot.lane.b32.xlu0 %v512, 96
        %v641 = vpop.permute.xlu0 %640
        %642 = vrot.lane.b32.xlu0 %v517, 96
        %v643 = vpop.permute.xlu0 %642
        %644 = vrot.lane.b32.xlu0 %v520, 96
        %v645 = vpop.permute.xlu0 %644
        %646 = vrot.lane.b32.xlu0 %v523, 96
        %v647 = vpop.permute.xlu0 %646
        %v652 = vrot.slane %v645, 4
        %v653 = vsel %vm526, %v652, %v641
        %v654 = vrot.slane %v641, 4
        %v655 = vsel %vm526, %v645, %v654
        %v657 = vunpack.c.l.s4 1983009808
        %v658 = vunpack.c.0.s8 %v657
        %v659 = vperm.slane %v653, %v658
        %v661 = vunpack.c.l.s4 1983009808
        %v662 = vunpack.c.0.s8 %v661
        %v663 = vperm.slane %v655, %v662
        %v664 = vrot.slane %v647, 4
        %v665 = vsel %vm526, %v664, %v643
        %v666 = vrot.slane %v643, 4
        %v667 = vsel %vm526, %v647, %v666
        %v669 = vunpack.c.l.s4 1983009808
        %v670 = vunpack.c.0.s8 %v669
        %v671 = vperm.slane %v665, %v670
        %v673 = vunpack.c.l.s4 1983009808
        %v674 = vunpack.c.0.s8 %v673
        %v675 = vperm.slane %v667, %v674
        %v676 = vrot.slane %v671, 4
        %v677 = vsel %vm526, %v676, %v659
        %v678 = vrot.slane %v659, 4
        %v679 = vsel %vm526, %v671, %v678
        %v681 = vunpack.c.l.s4 1934713408
        %v682 = vunpack.c.0.s8 %v681
        %v683 = vperm.slane %v677, %v682
        %v685 = vunpack.c.l.s4 1934713408
        %v686 = vunpack.c.0.s8 %v685
        %v687 = vperm.slane %v679, %v686
        %v688 = vrot.slane %v675, 4
        %v689 = vsel %vm526, %v688, %v663
        %v690 = vrot.slane %v663, 4
        %v691 = vsel %vm526, %v675, %v690
        %v693 = vunpack.c.l.s4 1934713408
        %v694 = vunpack.c.0.s8 %v693
        %v695 = vperm.slane %v689, %v694
        %v697 = vunpack.c.l.s4 1934713408
        %v698 = vunpack.c.0.s8 %v697
        %v699 = vperm.slane %v691, %v698
        %v700 = vrot.slane %v683, 4
        %v701 = vsel %vm526, 0.0, %v700
        %v702 = vrot.slane %v687, 4
        %v703 = vsel %vm526, 0.0, %v702
        %v704 = vrot.slane %v695, 4
        %v705 = vsel %vm526, 0.0, %v704
        %v706 = vrot.slane %v699, 4
        %v707 = vsel %vm526, 0.0, %v706
        %v708 = vsel %vm526, %v702, %v683
        %v710 = vunpack.c.l.s4 1983009808
        %v711 = vunpack.c.0.s8 %v710
        %v712 = vperm.slane %v708, %v711
        %v713 = vrot.slane %v703, 4
        %v714 = vsel %vm526, %v713, %v701
        %v716 = vunpack.c.l.s4 1983009808
        %v717 = vunpack.c.0.s8 %v716
        %v718 = vperm.slane %v714, %v717
        %v719 = vsel %vm526, %v706, %v695
        %v721 = vunpack.c.l.s4 1983009808
        %v722 = vunpack.c.0.s8 %v721
        %v723 = vperm.slane %v719, %v722
        %v724 = vrot.slane %v707, 4
        %v725 = vsel %vm526, %v724, %v705
        %v727 = vunpack.c.l.s4 1983009808
        %v728 = vunpack.c.0.s8 %v727
        %v729 = vperm.slane %v725, %v728
        %v730 = vrot.slane %v718, 4
        %v731 = vsel %vm526, %v730, %v712
        %v732 = vrot.slane %v712, 4
        %v733 = vsel %vm526, %v718, %v732
        %v735 = vunpack.c.l.s4 1934713408
        %v736 = vunpack.c.0.s8 %v735
        %v737 = vperm.slane %v731, %v736
        %v739 = vunpack.c.l.s4 1934713408
        %v740 = vunpack.c.0.s8 %v739
        %v741 = vperm.slane %v733, %v740
        %v742 = vrot.slane %v729, 4
        %v743 = vsel %vm526, %v742, %v723
        %v744 = vrot.slane %v723, 4
        %v745 = vsel %vm526, %v729, %v744
        %v747 = vunpack.c.l.s4 1934713408
        %v748 = vunpack.c.0.s8 %v747
        %v749 = vperm.slane %v743, %v748
        %v751 = vunpack.c.l.s4 1934713408
        %v752 = vunpack.c.0.s8 %v751
        %v753 = vperm.slane %v745, %v752
        %v754 = vrot.slane %v749, 4
        %v755 = vsel %vm526, %v754, %v737
        %v756 = vrot.slane %v737, 4
        %v757 = vsel %vm526, %v749, %v756
        %v758 = vrot.slane %v753, 4
        %v759 = vsel %vm526, %v758, %v741
        %v760 = vrot.slane %v741, 4
        %v761 = vsel %vm526, %v753, %v760
        %v762 = vpack.c.bf16 %v755, %v755
        %v763 = vpack.c.bf16 %v757, %v757
        %v764 = vpack.c.bf16 %v759, %v759
        %v765 = vpack.c.bf16 %v761, %v761
        %766 = vrot.lane.b32.xlu0 %v512, 64
        %v767 = vpop.permute.xlu0 %766
        %768 = vrot.lane.b32.xlu0 %v517, 64
        %v769 = vpop.permute.xlu0 %768
        %770 = vrot.lane.b32.xlu0 %v520, 64
        %v771 = vpop.permute.xlu0 %770
        %772 = vrot.lane.b32.xlu0 %v523, 64
        %v773 = vpop.permute.xlu0 %772
        %v778 = vrot.slane %v771, 4
        %v779 = vsel %vm526, %v778, %v767
        %v780 = vrot.slane %v767, 4
        %v781 = vsel %vm526, %v771, %v780
        %v783 = vunpack.c.l.s4 1983009808
        %v784 = vunpack.c.0.s8 %v783
        %v785 = vperm.slane %v779, %v784
        %v787 = vunpack.c.l.s4 1983009808
        %v788 = vunpack.c.0.s8 %v787
        %v789 = vperm.slane %v781, %v788
        %v790 = vrot.slane %v773, 4
        %v791 = vsel %vm526, %v790, %v769
        %v792 = vrot.slane %v769, 4
        %v793 = vsel %vm526, %v773, %v792
        %v795 = vunpack.c.l.s4 1983009808
        %v796 = vunpack.c.0.s8 %v795
        %v797 = vperm.slane %v791, %v796
        %v799 = vunpack.c.l.s4 1983009808
        %v800 = vunpack.c.0.s8 %v799
        %v801 = vperm.slane %v793, %v800
        %v802 = vrot.slane %v797, 4
        %v803 = vsel %vm526, %v802, %v785
        %v804 = vrot.slane %v785, 4
        %v805 = vsel %vm526, %v797, %v804
        %v807 = vunpack.c.l.s4 1934713408
        %v808 = vunpack.c.0.s8 %v807
        %v809 = vperm.slane %v803, %v808
        %v811 = vunpack.c.l.s4 1934713408
        %v812 = vunpack.c.0.s8 %v811
        %v813 = vperm.slane %v805, %v812
        %v814 = vrot.slane %v801, 4
        %v815 = vsel %vm526, %v814, %v789
        %v816 = vrot.slane %v789, 4
        %v817 = vsel %vm526, %v801, %v816
        %v819 = vunpack.c.l.s4 1934713408
        %v820 = vunpack.c.0.s8 %v819
        %v821 = vperm.slane %v815, %v820
        %v823 = vunpack.c.l.s4 1934713408
        %v824 = vunpack.c.0.s8 %v823
        %v825 = vperm.slane %v817, %v824
        %v826 = vrot.slane %v809, 4
        %v827 = vsel %vm526, 0.0, %v826
        %v828 = vrot.slane %v813, 4
        %v829 = vsel %vm526, 0.0, %v828
        %v830 = vrot.slane %v821, 4
        %v831 = vsel %vm526, 0.0, %v830
        %v832 = vrot.slane %v825, 4
        %v833 = vsel %vm526, 0.0, %v832
        %v834 = vsel %vm526, %v828, %v809
        %v836 = vunpack.c.l.s4 1983009808
        %v837 = vunpack.c.0.s8 %v836
        %v838 = vperm.slane %v834, %v837
        %v839 = vrot.slane %v829, 4
        %v840 = vsel %vm526, %v839, %v827
        %v842 = vunpack.c.l.s4 1983009808
        %v843 = vunpack.c.0.s8 %v842
        %v844 = vperm.slane %v840, %v843
        %v845 = vsel %vm526, %v832, %v821
        %v847 = vunpack.c.l.s4 1983009808
        %v848 = vunpack.c.0.s8 %v847
        %v849 = vperm.slane %v845, %v848
        %v850 = vrot.slane %v833, 4
        %v851 = vsel %vm526, %v850, %v831
        %v853 = vunpack.c.l.s4 1983009808
        %v854 = vunpack.c.0.s8 %v853
        %v855 = vperm.slane %v851, %v854
        %v856 = vrot.slane %v844, 4
        %v857 = vsel %vm526, %v856, %v838
        %v858 = vrot.slane %v838, 4
        %v859 = vsel %vm526, %v844, %v858
        %v861 = vunpack.c.l.s4 1934713408
        %v862 = vunpack.c.0.s8 %v861
        %v863 = vperm.slane %v857, %v862
        %v865 = vunpack.c.l.s4 1934713408
        %v866 = vunpack.c.0.s8 %v865
        %v867 = vperm.slane %v859, %v866
        %v868 = vrot.slane %v855, 4
        %v869 = vsel %vm526, %v868, %v849
        %v870 = vrot.slane %v849, 4
        %v871 = vsel %vm526, %v855, %v870
        %v873 = vunpack.c.l.s4 1934713408
        %v874 = vunpack.c.0.s8 %v873
        %v875 = vperm.slane %v869, %v874
        %v877 = vunpack.c.l.s4 1934713408
        %v878 = vunpack.c.0.s8 %v877
        %v879 = vperm.slane %v871, %v878
        %v880 = vrot.slane %v875, 4
        %v881 = vsel %vm526, %v880, %v863
        %v882 = vrot.slane %v863, 4
        %v883 = vsel %vm526, %v875, %v882
        %v884 = vrot.slane %v879, 4
        %v885 = vsel %vm526, %v884, %v867
        %v886 = vrot.slane %v867, 4
        %v887 = vsel %vm526, %v879, %v886
        %v888 = vpack.c.bf16 %v881, %v881
        %v889 = vpack.c.bf16 %v883, %v883
        %v890 = vpack.c.bf16 %v885, %v885
        %v891 = vpack.c.bf16 %v887, %v887
        %vm892 = vcmask 64512
        %v894 = vsel %vm892, %v636, 0
        %v897 = vsel %vm892, %v762, 0
        %899 = vmatpush.bf16.xpose.msra.mxu0 0
        %900 = vmatpush.bf16.xpose.msra.mxu0 0
        %901 = vmatpush.bf16.xpose.msra.mxu0 0
        %902 = vmatpush.bf16.xpose.msra.mxu0 0
        %903 = vmatpush.bf16.xpose.msra.mxu0 0
        %904 = vmatpush.bf16.xpose.msra.mxu0 0
        %905 = vmatpush.bf16.xpose.msra.mxu0 0
        %906 = vmatpush.bf16.xpose.msra.mxu0 %v897
        %907 = vmatmul.bf16.gmra.mxu0 %v894
        %v908 = vpop.f32.mrf.mxu0
        %v909 = vadd.f32 0.0, %v908
        %v910 = vpop.f32.mrf.mxu0
        %911 = vdwg.mxu0
        %v913 = vsel %vm892, %v637, 0
        %v916 = vsel %vm892, %v763, 0
        %918 = vmatpush.bf16.xpose.msra.mxu0 0
        %919 = vmatpush.bf16.xpose.msra.mxu0 0
        %920 = vmatpush.bf16.xpose.msra.mxu0 0
        %921 = vmatpush.bf16.xpose.msra.mxu0 0
        %922 = vmatpush.bf16.xpose.msra.mxu0 0
        %923 = vmatpush.bf16.xpose.msra.mxu0 0
        %924 = vmatpush.bf16.xpose.msra.mxu0 0
        %925 = vmatpush.bf16.xpose.msra.mxu0 %v916
        %926 = vmatmul.bf16.gmra.mxu0 %v913
        %v927 = vpop.f32.mrf.mxu0
        %v928 = vadd.f32 0.0, %v927
        %v929 = vpop.f32.mrf.mxu0
        %930 = vdwg.mxu0
        %v932 = vsel %vm892, %v638, 0
        %v935 = vsel %vm892, %v764, 0
        %937 = vmatpush.bf16.xpose.msra.mxu0 0
        %938 = vmatpush.bf16.xpose.msra.mxu0 0
        %939 = vmatpush.bf16.xpose.msra.mxu0 0
        %940 = vmatpush.bf16.xpose.msra.mxu0 0
        %941 = vmatpush.bf16.xpose.msra.mxu0 0
        %942 = vmatpush.bf16.xpose.msra.mxu0 0
        %943 = vmatpush.bf16.xpose.msra.mxu0 0
        %944 = vmatpush.bf16.xpose.msra.mxu0 %v935
        %945 = vmatmul.bf16.gmra.mxu0 %v932
        %v946 = vpop.f32.mrf.mxu0
        %v947 = vadd.f32 0.0, %v946
        %v948 = vpop.f32.mrf.mxu0
        %949 = vdwg.mxu0
        %v951 = vsel %vm892, %v639, 0
        %v954 = vsel %vm892, %v765, 0
        %956 = vmatpush.bf16.xpose.msra.mxu0 0
        %957 = vmatpush.bf16.xpose.msra.mxu0 0
        %958 = vmatpush.bf16.xpose.msra.mxu0 0
        %959 = vmatpush.bf16.xpose.msra.mxu0 0
        %960 = vmatpush.bf16.xpose.msra.mxu0 0
        %961 = vmatpush.bf16.xpose.msra.mxu0 0
        %962 = vmatpush.bf16.xpose.msra.mxu0 0
        %963 = vmatpush.bf16.xpose.msra.mxu0 %v954
        %964 = vmatmul.bf16.gmra.mxu0 %v951
        %v965 = vpop.f32.mrf.mxu0
        %v966 = vadd.f32 0.0, %v965
        %v967 = vpop.f32.mrf.mxu0
        %968 = vdwg.mxu0
        %v969 = vlaneseq
        %v970 = vshrl.u32 %v969, 7
        %v971 = vlaneseq
        %v972 = vand.u32 %v971, 127
        %vm973 = vcmp.le.s32.totalorder %v972, %v970
        %v974 = vsel %vm973, 1, 0
        %vm975 = vcmp.eq.s32.totalorder %v974, 1
        %v976 = vsel %vm975, %v909, -3.4028235e+38
        %v977 = vsel %vm975, %v928, -3.4028235e+38
        %v978 = vsel %vm975, %v947, -3.4028235e+38
        %v979 = vsel %vm975, %v966, -3.4028235e+38
        %v980 = vsel %vm892, %v976, -inf
        %981 = vmax.xlane.f32.xlu0 %v980
        %v982 = vpop.xlane.xlu0 %981
        %v983 = vsel %vm892, %v977, -inf
        %984 = vmax.xlane.f32.xlu0 %v983
        %v985 = vpop.xlane.xlu0 %984
        %v986 = vsel %vm892, %v978, -inf
        %987 = vmax.xlane.f32.xlu0 %v986
        %v988 = vpop.xlane.xlu0 %987
        %v989 = vsel %vm892, %v979, -inf
        %990 = vmax.xlane.f32.xlu0 %v989
        %v991 = vpop.xlane.xlu0 %990
        %v992 = vsub.f32 %v976, %v982
        %v993 = vsub.f32 %v977, %v985
        %v994 = vsub.f32 %v978, %v988
        %v995 = vsub.f32 %v979, %v991
        %v996 = vmul.f32 %v992, 1.442695
        %v997 = vpow.pop %v996
        %v998 = vmul.f32 %v993, 1.442695
        %v999 = vpow.pop %v998
        %v1000 = vmul.f32 %v994, 1.442695
        %v1001 = vpow.pop %v1000
        %v1002 = vmul.f32 %v995, 1.442695
        %v1003 = vpow.pop %v1002
        %v1004 = vsel %vm892, %v997, 0.0
        %1005 = vadd.xlane.f32.xlu0 %v1004
        %v1006 = vpop.xlane.xlu0 %1005
        %v1007 = vsel %vm892, %v999, 0.0
        %1008 = vadd.xlane.f32.xlu0 %v1007
        %v1009 = vpop.xlane.xlu0 %1008
        %v1010 = vsel %vm892, %v1001, 0.0
        %1011 = vadd.xlane.f32.xlu0 %v1010
        %v1012 = vpop.xlane.xlu0 %1011
        %v1013 = vsel %vm892, %v1003, 0.0
        %1014 = vadd.xlane.f32.xlu0 %v1013
        %v1015 = vpop.xlane.xlu0 %1014
        %v1016 = vrcp.pop %v1006
        %v1017 = vrcp.pop %v1009
        %v1018 = vrcp.pop %v1012
        %v1019 = vrcp.pop %v1015
        %v1020 = vmul.f32 %v997, %v1016
        %v1021 = vmul.f32 %v999, %v1017
        %v1022 = vmul.f32 %v1001, %v1018
        %v1023 = vmul.f32 %v1003, %v1019
        %v1024 = vpack.c.bf16 %v1020, %v1020
        %v1025 = vpack.c.bf16 %v1021, %v1021
        %v1026 = vpack.c.bf16 %v1022, %v1022
        %v1027 = vpack.c.bf16 %v1023, %v1023
        %v1029 = vsel %vm892, %v1024, 0
        %vm1031 = vcmask 1043456
        %v1033 = vsel %vm1031, %v888, 0
        %1035 = vmatpush.bf16.msra.mxu0 0
        %1036 = vmatpush.bf16.msra.mxu0 0
        %1037 = vmatpush.bf16.msra.mxu0 0
        %1038 = vmatpush.bf16.msra.mxu0 0
        %1039 = vmatpush.bf16.msra.mxu0 0
        %1040 = vmatpush.bf16.msra.mxu0 0
        %1041 = vmatpush.bf16.msra.mxu0 0
        %1042 = vmatpush.bf16.msra.mxu0 %v1033
        %1043 = vmatmul.bf16.gmra.mxu0 %v1029
        %v1044 = vpop.f32.mrf.mxu0
        %v1045 = vadd.f32 0.0, %v1044
        %v1046 = vpop.f32.mrf.mxu0
        %1047 = vdwg.mxu0
        %v1049 = vsel %vm892, %v1025, 0
        %v1052 = vsel %vm1031, %v889, 0
        %1054 = vmatpush.bf16.msra.mxu0 0
        %1055 = vmatpush.bf16.msra.mxu0 0
        %1056 = vmatpush.bf16.msra.mxu0 0
        %1057 = vmatpush.bf16.msra.mxu0 0
        %1058 = vmatpush.bf16.msra.mxu0 0
        %1059 = vmatpush.bf16.msra.mxu0 0
        %1060 = vmatpush.bf16.msra.mxu0 0
        %1061 = vmatpush.bf16.msra.mxu0 %v1052
        %1062 = vmatmul.bf16.gmra.mxu0 %v1049
        %v1063 = vpop.f32.mrf.mxu0
        %v1064 = vadd.f32 0.0, %v1063
        %v1065 = vpop.f32.mrf.mxu0
        %1066 = vdwg.mxu0
        %v1068 = vsel %vm892, %v1026, 0
        %v1071 = vsel %vm1031, %v890, 0
        %1073 = vmatpush.bf16.msra.mxu0 0
        %1074 = vmatpush.bf16.msra.mxu0 0
        %1075 = vmatpush.bf16.msra.mxu0 0
        %1076 = vmatpush.bf16.msra.mxu0 0
        %1077 = vmatpush.bf16.msra.mxu0 0
        %1078 = vmatpush.bf16.msra.mxu0 0
        %1079 = vmatpush.bf16.msra.mxu0 0
        %1080 = vmatpush.bf16.msra.mxu0 %v1071
        %1081 = vmatmul.bf16.gmra.mxu0 %v1068
        %v1082 = vpop.f32.mrf.mxu0
        %v1083 = vadd.f32 0.0, %v1082
        %v1084 = vpop.f32.mrf.mxu0
        %1085 = vdwg.mxu0
        %v1087 = vsel %vm892, %v1027, 0
        %v1090 = vsel %vm1031, %v891, 0
        %1092 = vmatpush.bf16.msra.mxu0 0
        %1093 = vmatpush.bf16.msra.mxu0 0
        %1094 = vmatpush.bf16.msra.mxu0 0
        %1095 = vmatpush.bf16.msra.mxu0 0
        %1096 = vmatpush.bf16.msra.mxu0 0
        %1097 = vmatpush.bf16.msra.mxu0 0
        %1098 = vmatpush.bf16.msra.mxu0 0
        %1099 = vmatpush.bf16.msra.mxu0 %v1090
        %1100 = vmatmul.bf16.gmra.mxu0 %v1087
        %v1101 = vpop.f32.mrf.mxu0
        %v1102 = vadd.f32 0.0, %v1101
        %v1103 = vpop.f32.mrf.mxu0
        %1104 = vdwg.mxu0
        %v1105 = vrot.slane %v1083, 4
        %v1106 = vsel %vm526, %v1105, %v1045
        %v1107 = vrot.slane %v1045, 4
        %v1108 = vsel %vm526, %v1083, %v1107
        %v1110 = vunpack.c.l.s4 1983009808
        %v1111 = vunpack.c.0.s8 %v1110
        %v1112 = vperm.slane %v1106, %v1111
        %v1114 = vunpack.c.l.s4 1983009808
        %v1115 = vunpack.c.0.s8 %v1114
        %v1116 = vperm.slane %v1108, %v1115
        %v1117 = vrot.slane %v1102, 4
        %v1118 = vsel %vm526, %v1117, %v1064
        %v1119 = vrot.slane %v1064, 4
        %v1120 = vsel %vm526, %v1102, %v1119
        %v1122 = vunpack.c.l.s4 1983009808
        %v1123 = vunpack.c.0.s8 %v1122
        %v1124 = vperm.slane %v1118, %v1123
        %v1126 = vunpack.c.l.s4 1983009808
        %v1127 = vunpack.c.0.s8 %v1126
        %v1128 = vperm.slane %v1120, %v1127
        %v1129 = vrot.slane %v1124, 4
        %v1130 = vsel %vm526, %v1129, %v1112
        %v1131 = vrot.slane %v1112, 4
        %v1132 = vsel %vm526, %v1124, %v1131
        %v1134 = vunpack.c.l.s4 1934713408
        %v1135 = vunpack.c.0.s8 %v1134
        %v1136 = vperm.slane %v1130, %v1135
        %v1138 = vunpack.c.l.s4 1934713408
        %v1139 = vunpack.c.0.s8 %v1138
        %v1140 = vperm.slane %v1132, %v1139
        %v1141 = vrot.slane %v1128, 4
        %v1142 = vsel %vm526, %v1141, %v1116
        %v1143 = vrot.slane %v1116, 4
        %v1144 = vsel %vm526, %v1128, %v1143
        %v1146 = vunpack.c.l.s4 1934713408
        %v1147 = vunpack.c.0.s8 %v1146
        %v1148 = vperm.slane %v1142, %v1147
        %v1150 = vunpack.c.l.s4 1934713408
        %v1151 = vunpack.c.0.s8 %v1150
        %v1152 = vperm.slane %v1144, %v1151
        %v1153 = vrot.slane %v1136, 4
        %v1154 = vsel %vm526, 0.0, %v1153
        %v1155 = vrot.slane %v1140, 4
        %v1156 = vsel %vm526, 0.0, %v1155
        %v1157 = vrot.slane %v1148, 4
        %v1158 = vsel %vm526, 0.0, %v1157
        %v1159 = vrot.slane %v1152, 4
        %v1160 = vsel %vm526, 0.0, %v1159
        %v1161 = vsel %vm526, %v1155, %v1136
        %v1163 = vunpack.c.l.s4 1983009808
        %v1164 = vunpack.c.0.s8 %v1163
        %v1165 = vperm.slane %v1161, %v1164
        %v1166 = vrot.slane %v1156, 4
        %v1167 = vsel %vm526, %v1166, %v1154
        %v1169 = vunpack.c.l.s4 1983009808
        %v1170 = vunpack.c.0.s8 %v1169
        %v1171 = vperm.slane %v1167, %v1170
        %v1172 = vsel %vm526, %v1159, %v1148
        %v1174 = vunpack.c.l.s4 1983009808
        %v1175 = vunpack.c.0.s8 %v1174
        %v1176 = vperm.slane %v1172, %v1175
        %v1177 = vrot.slane %v1160, 4
        %v1178 = vsel %vm526, %v1177, %v1158
        %v1180 = vunpack.c.l.s4 1983009808
        %v1181 = vunpack.c.0.s8 %v1180
        %v1182 = vperm.slane %v1178, %v1181
        %v1183 = vrot.slane %v1171, 4
        %v1184 = vsel %vm526, %v1183, %v1165
        %v1185 = vrot.slane %v1165, 4
        %v1186 = vsel %vm526, %v1171, %v1185
        %v1188 = vunpack.c.l.s4 1934713408
        %v1189 = vunpack.c.0.s8 %v1188
        %v1190 = vperm.slane %v1184, %v1189
        %v1192 = vunpack.c.l.s4 1934713408
        %v1193 = vunpack.c.0.s8 %v1192
        %v1194 = vperm.slane %v1186, %v1193
        %v1195 = vrot.slane %v1182, 4
        %v1196 = vsel %vm526, %v1195, %v1176
        %v1197 = vrot.slane %v1176, 4
        %v1198 = vsel %vm526, %v1182, %v1197
        %v1200 = vunpack.c.l.s4 1934713408
        %v1201 = vunpack.c.0.s8 %v1200
        %v1202 = vperm.slane %v1196, %v1201
        %v1204 = vunpack.c.l.s4 1934713408
        %v1205 = vunpack.c.0.s8 %v1204
        %v1206 = vperm.slane %v1198, %v1205
        %v1207 = vrot.slane %v1202, 4
        %v1208 = vsel %vm526, %v1207, %v1190
        %v1209 = vrot.slane %v1190, 4
        %v1210 = vsel %vm526, %v1202, %v1209
        %v1211 = vrot.slane %v1206, 4
        %v1212 = vsel %vm526, %v1211, %v1194
        %v1213 = vrot.slane %v1194, 4
        %v1214 = vsel %vm526, %v1206, %v1213
        %1216 = vrot.lane.b32.xlu0 %v1210, 8
        %v1217 = vpop.permute.xlu0 %1216
        %1220 = vrot.lane.b32.xlu0 %v1212, 16
        %v1221 = vpop.permute.xlu0 %1220
        %1224 = vrot.lane.b32.xlu0 %v1214, 24
        %v1225 = vpop.permute.xlu0 %1224
        %v1227 = vsel %vm892, %v1208, %v1217
        %vm1228 = vcmask 130048
        %v1229 = vsel %vm1228, %v1227, %v1221
        %vm1230 = vcmask 195584
        %v1231 = vsel %vm1230, %v1229, %v1225
        %v1232 = vpack.c.bf16 %v1231, %v1231
        %v1233 = vld [vmem:[%s5] sm:$0xf]
        %v1234 = vld [vmem:[%s5 + $0x4] sm:$0xf]
        %v1235 = vld [vmem:[%s5 + $0x8] sm:$0xf]
        %v1236 = vld [vmem:[%s5 + $0xc] sm:$0xf]
        %v1237 = vld [vmem:[%s6] sm:$0x1]
        %v1239 = vperm.slane %v1237, 0
        %v1245 = vunpack.c.l.b16 %v1233
        %v1246 = vunpack.c.l.b16 %v1234
        %v1247 = vunpack.c.l.b16 %v1235
        %v1248 = vunpack.c.l.b16 %v1236
        %v1249 = vpack.c.b16 %v1246, %v1245
        %v1250 = vpack.c.b16 %v1248, %v1247
        %v1254 = vsel %vm440, %v1232, 0
        %1256 = vmatpush.bf16.msra.mxu0 0
        %1257 = vmatpush.bf16.msra.mxu0 0
        %1258 = vmatpush.bf16.msra.mxu0 0
        %1259 = vmatpush.bf16.msra.mxu0 0
        %1260 = vmatpush.bf16.msra.mxu0 0
        %1261 = vmatpush.bf16.msra.mxu0 0
        %1262 = vmatpush.bf16.msra.mxu0 %v1250
        %1263 = vmatpush.bf16.msra.mxu0 %v1249
        %1264 = vmatmul.bf16.gmra.mxu0 %v1254
        %v1265 = vpop.f32.mrf.mxu0
        %v1266 = vadd.f32 %v1239, %v1265
        %v1267 = vpop.f32.mrf.mxu0
        %1268 = vdwg.mxu0
        %v1269 = vadd.f32 %v437, %v1266
        %v1270 = vld [vmem:[%s7] sm:$0x1]
        %v1271 = vld [vmem:[%s8] sm:$0x1]
        %v1272 = vsel %vm440, %v1269, 0.0
        %1273 = vadd.xlane.f32.xlu0 %v1272
        %v1274 = vpop.xlane.xlu0 %1273
        %v1275 = vmul.f32 %v1274, %v450
        %v1276 = vsub.f32 %v1269, %v1275
        %v1277 = vmul.f32 %v1276, %v1276
        %v1278 = vsel %vm440, %v1277, 0.0
        %1279 = vadd.xlane.f32.xlu0 %v1278
        %v1280 = vpop.xlane.xlu0 %1279
        %v1281 = vmul.f32 %v1280, %v450
        %v1282 = vadd.f32 %v1281, 1e-05
        %v1283 = vrsqrt.pop %v1282
        %v1284 = vmul.f32 %v1283, %v1282
        %v1285 = vmul.f32 %v1284, %v1283
        %v1286 = vmul.f32 0.5, %v1285
        %v1287 = vsub.f32 1.5, %v1286
        %v1288 = vmul.f32 %v1283, %v1287
        %vm1289 = vweird.f32 %v1282
        %vm1290 = vweird.f32 %v1283
        %vm1291 = vmor %vm1289, %vm1290
        %v1292 = vsel %vm1291, %v1283, %v1288
        %v1293 = vmul.f32 %v1276, %v1292
        %v1295 = vperm.slane %v1270, 0
        %v1297 = vmul.f32 %v1293, %v1295
        %v1299 = vperm.slane %v1271, 0
        %v1301 = vadd.f32 %v1297, %v1299
        %v1302 = vpack.c.bf16 %v1301, %v1301
        %v1303 = vld [vmem:[%s9] sm:$0xf]
        %v1304 = vld [vmem:[%s9 + $0x4] sm:$0xf]
        %v1305 = vld [vmem:[%s9 + $0x8] sm:$0xf]
        %v1306 = vld [vmem:[%s9 + $0xc] sm:$0xf]
        %v1307 = vld [vmem:[%s10] sm:$0x1]
        %v1309 = vperm.slane %v1307, 0
        %v1315 = vunpack.c.l.b16 %v1303
        %v1316 = vunpack.c.l.b16 %v1304
        %v1317 = vunpack.c.l.b16 %v1305
        %v1318 = vunpack.c.l.b16 %v1306
        %v1319 = vpack.c.b16 %v1316, %v1315
        %v1320 = vpack.c.b16 %v1318, %v1317
        %v1324 = vsel %vm440, %v1302, 0
        %1326 = vmatpush.bf16.msra.mxu0 0
        %1327 = vmatpush.bf16.msra.mxu0 0
        %1328 = vmatpush.bf16.msra.mxu0 0
        %1329 = vmatpush.bf16.msra.mxu0 0
        %1330 = vmatpush.bf16.msra.mxu0 0
        %1331 = vmatpush.bf16.msra.mxu0 0
        %1332 = vmatpush.bf16.msra.mxu0 %v1320
        %1333 = vmatpush.bf16.msra.mxu0 %v1319
        %1334 = vmatmul.bf16.gmra.mxu0 %v1324
        %v1335 = vpop.f32.mrf.mxu0
        %v1336 = vadd.f32 %v1309, %v1335
        %v1337 = vpop.f32.mrf.mxu0
        %1338 = vdwg.mxu0
        %v1339 = vmax.f32 %v1336, 0.0
        %v1340 = vpack.c.bf16 %v1339, %v1339
        %v1341 = vld [vmem:[%s11] sm:$0xf]
        %v1342 = vld [vmem:[%s11 + $0x4] sm:$0xf]
        %v1343 = vld [vmem:[%s11 + $0x8] sm:$0xf]
        %v1344 = vld [vmem:[%s11 + $0xc] sm:$0xf]
        %v1345 = vld [vmem:[%s11 + $0x10] sm:$0xf]
        %v1346 = vld [vmem:[%s11 + $0x14] sm:$0xf]
        %v1347 = vld [vmem:[%s11 + $0x18] sm:$0xf]
        %v1348 = vld [vmem:[%s11 + $0x1c] sm:$0xf]
        %v1349 = vld [vmem:[%s11 + $0x20] sm:$0xf]
        %v1350 = vld [vmem:[%s11 + $0x24] sm:$0xf]
        %v1351 = vld [vmem:[%s11 + $0x28] sm:$0xf]
        %v1352 = vld [vmem:[%s11 + $0x2c] sm:$0xf]
        %v1353 = vld [vmem:[%s11 + $0x30] sm:$0xf]
        %v1354 = vld [vmem:[%s11 + $0x34] sm:$0xf]
        %v1355 = vld [vmem:[%s11 + $0x38] sm:$0xf]
        %v1356 = vld [vmem:[%s11 + $0x3c] sm:$0xf]
        %v1357 = vld [vmem:[%s12] sm:$0x1]
        %v1359 = vperm.slane %v1357, 0
        %v1377 = vunpack.c.l.b16 %v1341
        %v1378 = vunpack.c.l.b16 %v1342
        %v1379 = vunpack.c.l.b16 %v1343
        %v1380 = vunpack.c.l.b16 %v1344
        %v1381 = vunpack.c.l.b16 %v1345
        %v1382 = vunpack.c.l.b16 %v1346
        %v1383 = vunpack.c.l.b16 %v1347
        %v1384 = vunpack.c.l.b16 %v1348
        %v1385 = vunpack.c.l.b16 %v1349
        %v1386 = vunpack.c.l.b16 %v1350
        %v1387 = vunpack.c.l.b16 %v1351
        %v1388 = vunpack.c.l.b16 %v1352
        %v1389 = vunpack.c.l.b16 %v1353
        %v1390 = vunpack.c.l.b16 %v1354
        %v1391 = vunpack.c.l.b16 %v1355
        %v1392 = vunpack.c.l.b16 %v1356
        %v1393 = vpack.c.b16 %v1378, %v1377
        %v1394 = vpack.c.b16 %v1380, %v1379
        %v1395 = vpack.c.b16 %v1382, %v1381
        %v1396 = vpack.c.b16 %v1384, %v1383
        %v1397 = vpack.c.b16 %v1386, %v1385
        %v1398 = vpack.c.b16 %v1388, %v1387
        %v1399 = vpack.c.b16 %v1390, %v1389
        %v1400 = vpack.c.b16 %v1392, %v1391
        %1409 = vmatpush.bf16.msra.mxu0 %v1400
        %1410 = vmatpush.bf16.msra.mxu0 %v1399
        %1411 = vmatpush.bf16.msra.mxu0 %v1398
        %1412 = vmatpush.bf16.msra.mxu0 %v1397
        %1413 = vmatpush.bf16.msra.mxu0 %v1396
        %1414 = vmatpush.bf16.msra.mxu0 %v1395
        %1415 = vmatpush.bf16.msra.mxu0 %v1394
        %1416 = vmatpush.bf16.msra.mxu0 %v1393
        %1417 = vmatmul.bf16.gmra.mxu0 %v1340
        %v1418 = vpop.f32.mrf.mxu0
        %v1419 = vadd.f32 %v1359, %v1418
        %v1420 = vpop.f32.mrf.mxu0
        %1421 = vdwg.mxu0
        %v1422 = vadd.f32 %v1269, %v1419
        %1423 = vst.msk [vmem:[%s431] sm:$0xff] %vm440, %v1422
        %s1424 = sand.u32 %s313, 1
        %s1425 = scalar_lea.sflag [#allocation3], %s1424
        %s1426 = sand.u32 %s313, 1
        %s1427 = smul.addr %s1426, 8
        %s1428 = scalar_lea.vmem [#allocation2], %s1427
        // Predicated region
        $region73: #{tpu_custom_call.1} parent=71 // pred_check
          %p1429 = pneg %p323
        $region74: #{tpu_custom_call.1} parent=71 // pred_check_branch
          %1431 = sbr.rel (%p1429) target = $region76
        $region75: #{tpu_custom_call.1} parent=71 // pred_region
          %1433 = vsyncadd %s1425, 0
          %s1434 = smul.addr %s27, 8
          %s1435 = scalar_lea.hbm %s13, %s1434
          %s1437 = sshll.u32 %s1428, 4
          %s1438 = int_to_ptr.vmem [resolvable:$true] %s1437
          %s1439 = sshll.u32 %s1435, 4
          %s1440 = int_to_ptr.hbm [resolvable:$true] %s1439
          %1442 = dma.vmem_to_hbm [thread:$0]  %s1438, 128, %s1440, %s1425
        $region76: #{tpu_custom_call.1} parent=71 // pred_fallthru
          _
      $region72: #{tpu_custom_call.1} parent=5 // pred_fallthru
        _
      %p1443 = scmp.le.s32.totalorder 2, %s22
      // Predicated region
      $region77: #{tpu_custom_call.1} parent=5 // pred_check
        %p1444 = pneg %p1443
      $region78: #{tpu_custom_call.1} parent=5 // pred_check_branch
        %1446 = sbr.rel (%p1444) target = $region80
      $region79: #{tpu_custom_call.1} parent=5 // pred_region
        %s1447 = ssub.s32 %s22, 2
        // Predicated region
        $region81: #{tpu_custom_call.1} parent=79 // pred_check
          %p1448 = pneg %p329
        $region82: #{tpu_custom_call.1} parent=79 // pred_check_branch
          %1450 = sbr.rel (%p1448) target = $region84
        $region83: #{tpu_custom_call.1} parent=79 // pred_region
          %s1451 = sand.u32 %s314, 1
          %s1452 = scalar_lea.sflag [#allocation3], %s1451
          %s1453 = sand.u32 %s314, 1
          %s1454 = smul.addr %s1453, 8
          %s1455 = scalar_lea.vmem [#allocation2], %s1454
          %1457 = dma.done %s1452, 128
        $region84: #{tpu_custom_call.1} parent=79 // pred_fallthru
          _
      $region80: #{tpu_custom_call.1} parent=5 // pred_fallthru
        _
    $region6: #{tpu_custom_call.1} parent=1 // loop_footer
      %s26 = sadd.s32 1, %s22
    $region7: #{tpu_custom_call.1} parent=1 // loop_footer_branch
      %21 = sbr.rel target = $region3
    $region8: #{tpu_custom_call.1} parent=1 // loop_exit
      _
    %1458 = vsyncpa [#allocation3], 1
    %s1459 = scalar_lea.sflag [#allocation3], 1
    %1460 = vsyncpa %s1459, 1

</llo_original>
